<compile_context>
chip_gen: v6e
topology: v6e:2x2x1
jax: 0.10.0
libtpu: 0.0.40
codegen_flags: <defaults>
</compile_context>

<pallas_src>
import functools

import jax
import jax.numpy as jnp
import numpy as np
from jax.experimental import pallas as pl
from jax.experimental.pallas import tpu as pltpu


def _encoder_gru_kernel(*refs, num_layers, seq_len):
    """Fused multi-layer GRU over the full sequence for one batch block.

    refs layout:
      x_ref   : (T, Bblk, I)     time-major input block
      h0_ref  : (L, Bblk, H)     initial hidden state (PyTorch layout)
      per layer l (4 refs):
        w_i  : (in_l, 3H)        [W_ir | W_iz | W_in]^T  (lane-concatenated)
        w_h  : (H,   3H)         [W_hr | W_hz | W_hn]^T
        b_i3 : (1, 3H)           [b_ir+b_hr | b_iz+b_hz | b_in]
        b_h3 : (1, 3H)           [0 | 0 | b_hn]          (stays inside r*(.))
      out_ref : (T, Bblk, H)     last layer's output sequence
      hN_ref  : (L, Bblk, H)     final hidden state per layer
      gi_ref  : VMEM (T, Bblk, 3H) f32   hoisted fused input projections
      hseq_ref: VMEM (T, Bblk, H)  f32   inter-layer activation buffer
    """
    n_in = 2 + 4 * num_layers
    x_ref, h0_ref = refs[0], refs[1]
    layer_refs = refs[2:n_in]
    out_ref, hN_ref = refs[n_in], refs[n_in + 1]
    gi_ref, hseq_ref = refs[n_in + 2], refs[n_in + 3]

    T = seq_len
    B = x_ref.shape[1]
    H = hN_ref.shape[-1]
    unroll = True if T <= 16 else 8

    # Layer-0 input, flattened to (T*B, I) for the hoisted batched projection.
    layer_in = x_ref[...].reshape(T * B, x_ref.shape[-1])

    for l in range(num_layers):
        w_i_ref, w_h_ref, b_i3_ref, b_h3_ref = layer_refs[4 * l:4 * (l + 1)]
        w_i = w_i_ref[...]
        w_h = w_h_ref[...]
        cdt = w_h.dtype            # MXU operand dtype (f32, or bf16 in production)

        # ---- Hoisted, FUSED input projection for all T steps: one MXU pass,
        # biases folded in, stored as a single lane-dense (T, B, 3H) scratch.
        gi_ref[...] = (
            jnp.dot(layer_in.astype(cdt), w_i,
                    preferred_element_type=jnp.float32)
            + b_i3_ref[...].astype(jnp.float32)
        ).reshape(T, B, 3 * H)

        # Hoist the hidden-n bias broadcast out of the loop (JAX does not CSE it).
        bh3 = jnp.broadcast_to(b_h3_ref[...].astype(jnp.float32), (B, 3 * H))

        last = (l == num_layers - 1)
        seq_out = out_ref if last else hseq_ref

        h0 = h0_ref[l].astype(jnp.float32)

        def step(t, h):
            # ONE fused (B,H)x(H,3H) recurrent matmul on the serial h chain.
            gh = jnp.dot(h.astype(cdt), w_h,
                         preferred_element_type=jnp.float32) + bh3
            gi_t = gi_ref[t]                       # lane-dense (B, 3H) load
            r = jax.nn.sigmoid(gi_t[:, :H] + gh[:, :H])
            z = jax.nn.sigmoid(gi_t[:, H:2 * H] + gh[:, H:2 * H])
            n = jnp.tanh(gi_t[:, 2 * H:] + r * gh[:, 2 * H:])
            h_new = (1.0 - z) * n + z * h
            seq_out[t] = h_new.astype(seq_out.dtype)
            return h_new

        h_last = jax.lax.fori_loop(0, T, step, h0, unroll=unroll)
        hN_ref[l] = h_last.astype(hN_ref.dtype)

        if not last:
            # Next layer's batched projection consumes this layer's sequence.
            layer_in = hseq_ref[...].reshape(T * B, H)


def make_gru_layer_params(wih, whh, bih, bhh):
    """PyTorch-layout GRU weights -> fused per-layer kernel layout.

    wih: (3H, in)  whh: (3H, H)  bih, bhh: (3H,)   gate order r, z, n.
    """
    H = whh.shape[1]
    zeros = jnp.zeros((H,), bih.dtype)
    return {
        "w_i": wih.T,                                   # (in, 3H)
        "w_h": whh.T,                                   # (H, 3H)
        "b_i3": jnp.concatenate([bih[:H] + bhh[:H],
                                 bih[H:2 * H] + bhh[H:2 * H],
                                 bih[2 * H:]]).reshape(1, 3 * H),
        "b_h3": jnp.concatenate([zeros, zeros, bhh[2 * H:]]).reshape(1, 3 * H),
    }


def encoder_hier_attn_forward(x_bti, hidden, params, *,
                              num_batch_blocks=1, weights_dtype=None):
    """Equivalent of EncoderHierAttn.forward for rnnobject='GRU'.

    x_bti  : (B, T, input_size)   batch_first input
    hidden : (num_layers, B, H)   initial hidden state (used!)
    params : list of per-layer dicts from make_gru_layer_params
    num_batch_blocks : set 2 on v7x to spread batch over both TensorCores.
    weights_dtype    : e.g. jnp.bfloat16 to feed the MXU bf16 operands (v6e/v7x).
    returns (output: (B, T, H), hidden: (num_layers, B, H))
    """
    B, T, I = x_bti.shape
    L = len(params)
    H = hidden.shape[-1]
    assert hidden.shape == (L, B, H)

    # Pad batch so every batch block is a multiple of 8 (sublane height).
    mult = 8 * num_batch_blocks
    B_pad = ((B + mult - 1) // mult) * mult
    batch_block = B_pad // num_batch_blocks

    x_tbi = jnp.transpose(x_bti, (1, 0, 2))                 # time-major (T, B, I)
    if B_pad != B:
        x_tbi = jnp.pad(x_tbi, ((0, 0), (0, B_pad - B), (0, 0)))
        hidden_p = jnp.pad(hidden, ((0, 0), (0, B_pad - B), (0, 0)))
    else:
        hidden_p = hidden

    args = [x_tbi, hidden_p]
    in_specs = [
        pl.BlockSpec((T, batch_block, I), lambda c: (0, c, 0)),
        pl.BlockSpec((L, batch_block, H), lambda c: (0, c, 0)),
    ]
    for p in params:
        w_i, w_h = p["w_i"], p["w_h"]
        if weights_dtype is not None:
            w_i = w_i.astype(weights_dtype)
            w_h = w_h.astype(weights_dtype)
        args += [w_i, w_h, p["b_i3"], p["b_h3"]]
        in_specs += [
            pl.BlockSpec(tuple(w_i.shape), lambda c: (0, 0)),
            pl.BlockSpec(tuple(w_h.shape), lambda c: (0, 0)),
            pl.BlockSpec(tuple(p["b_i3"].shape), lambda c: (0, 0)),
            pl.BlockSpec(tuple(p["b_h3"].shape), lambda c: (0, 0)),
        ]

    out_specs = [
        pl.BlockSpec((T, batch_block, H), lambda c: (0, c, 0)),
        pl.BlockSpec((L, batch_block, H), lambda c: (0, c, 0)),
    ]
    scratch_shapes = [
        pltpu.VMEM((T, batch_block, 3 * H), jnp.float32),    # fused gate projections
        pltpu.VMEM((T, batch_block, H), jnp.float32),        # inter-layer activations
    ]

    # ---- Explicit VMEM budget (double-buffered blocked operands + scratch, 2x headroom)
    isz = lambda dt: jnp.dtype(dt).itemsize
    n_bytes = 2 * T * batch_block * I * isz(x_bti.dtype)
    n_bytes += 2 * L * batch_block * H * isz(hidden.dtype)
    for a in args[2:]:
        n_bytes += 2 * int(np.prod(a.shape)) * isz(a.dtype)
    n_bytes += 2 * T * batch_block * H * isz(x_bti.dtype)    # out block
    n_bytes += 2 * L * batch_block * H * isz(hidden.dtype)   # hN block
    n_bytes += T * batch_block * 3 * H * 4 + T * batch_block * H * 4
    vmem_limit = int(min(100 * 2**20, max(16 * 2**20, 2 * n_bytes)))

    kernel = functools.partial(_encoder_gru_kernel, num_layers=L, seq_len=T)
    out_tbh, h_final = pl.pallas_call(
        kernel,
        out_shape=(
            jax.ShapeDtypeStruct((T, B_pad, H), x_bti.dtype),
            jax.ShapeDtypeStruct((L, B_pad, H), hidden.dtype),
        ),
        grid_spec=pltpu.PrefetchScalarGridSpec(
            num_scalar_prefetch=0,
            grid=(num_batch_blocks,),
            in_specs=in_specs,
            out_specs=out_specs,
            scratch_shapes=scratch_shapes,
        ),
        compiler_params=pltpu.CompilerParams(
            dimension_semantics=("parallel",),
            vmem_limit_bytes=vmem_limit,
        ),
    )(*args)

    output = jnp.transpose(out_tbh[:, :B, :], (1, 0, 2))     # back to batch_first
    return output, h_final[:, :B, :]


# ---------------- pure-JAX reference (lax.scan GRU) for verification --------
def gru_layer_ref(x_tbi, h0, wih_t, whh_t, bih, bhh):
    H = h0.shape[-1]

    def step(h, x_t):
        gi = x_t.astype(jnp.float32) @ wih_t + bih
        gh = h @ whh_t + bhh
        i_r, i_z, i_n = gi[:, :H], gi[:, H:2 * H], gi[:, 2 * H:]
        h_r, h_z, h_n = gh[:, :H], gh[:, H:2 * H], gh[:, 2 * H:]
        r = jax.nn.sigmoid(i_r + h_r)
        z = jax.nn.sigmoid(i_z + h_z)
        n = jnp.tanh(i_n + r * h_n)
        h_new = (1.0 - z) * n + z * h
        return h_new, h_new

    h_final, out = jax.lax.scan(step, h0.astype(jnp.float32), x_tbi)
    return out, h_final


if __name__ == "__main__":
    # Module config (small, consistent with EncoderHierAttn.__init__)
    input_size = 16
    hidden_size = 32
    sequence_length = 8
    num_layers = 2
    batch_size = 4

    key = jax.random.PRNGKey(0)
    key, k_x, k_h = jax.random.split(key, 3)
    x = jax.random.normal(k_x, (batch_size, sequence_length, input_size),
                          dtype=jnp.float32)
    # Non-zero initial hidden to verify the `hidden` argument is honored
    # (initHidden() would give zeros; PyTorch semantics must hold either way).
    hidden0 = 0.1 * jax.random.normal(
        k_h, (num_layers, batch_size, hidden_size), dtype=jnp.float32)

    # Deterministic parameter init (PyTorch-style uniform(-1/sqrt(H), 1/sqrt(H)))
    bound = 1.0 / np.sqrt(hidden_size)
    params, raw = [], []
    for l in range(num_layers):
        in_sz = input_size if l == 0 else hidden_size
        key, k1, k2, k3, k4 = jax.random.split(key, 5)
        wih = jax.random.uniform(k1, (3 * hidden_size, in_sz), jnp.float32,
                                 -bound, bound)
        whh = jax.random.uniform(k2, (3 * hidden_size, hidden_size), jnp.float32,
                                 -bound, bound)
        bih = jax.random.uniform(k3, (3 * hidden_size,), jnp.float32, -bound, bound)
        bhh = jax.random.uniform(k4, (3 * hidden_size,), jnp.float32, -bound, bound)
        raw.append((wih, whh, bih, bhh))
        params.append(make_gru_layer_params(wih, whh, bih, bhh))

    output, hidden_out = encoder_hier_attn_forward(x, hidden0, params)
    output = jax.block_until_ready(output)
    hidden_out = jax.block_until_ready(hidden_out)

    # Verify against pure-JAX reference built from the raw (PyTorch-layout) weights
    layer_in = jnp.transpose(x, (1, 0, 2))
    finals_ref = []
    for l, (wih, whh, bih, bhh) in enumerate(raw):
        layer_in, h_fin = gru_layer_ref(layer_in, hidden0[l], wih.T, whh.T,
                                        bih.reshape(1, -1), bhh.reshape(1, -1))
        finals_ref.append(h_fin)
    out_ref_arr = jnp.transpose(layer_in, (1, 0, 2))
    hid_ref = jnp.stack(finals_ref, axis=0)

    assert output.shape == (batch_size, sequence_length, hidden_size)
    assert hidden_out.shape == (num_layers, batch_size, hidden_size)
    np.testing.assert_allclose(np.asarray(output), np.asarray(out_ref_arr),
                               rtol=1e-4, atol=1e-4)
    np.testing.assert_allclose(np.asarray(hidden_out), np.asarray(hid_ref),
                               rtol=1e-4, atol=1e-4)
    print("KERNEL_OK")
</pallas_src>

<mosaic_0001>
module attributes {stable_mosaic.version = 11 : i64} {
  func.func @_encoder_gru_kernel(%arg0: i32, %arg1: memref<8x8x16xf32, #tpu.memory_space<vmem>>, %arg2: memref<2x8x32xf32, #tpu.memory_space<vmem>>, %arg3: memref<16x96xf32, #tpu.memory_space<vmem>>, %arg4: memref<32x96xf32, #tpu.memory_space<vmem>>, %arg5: memref<1x96xf32, #tpu.memory_space<vmem>>, %arg6: memref<1x96xf32, #tpu.memory_space<vmem>>, %arg7: memref<32x96xf32, #tpu.memory_space<vmem>>, %arg8: memref<32x96xf32, #tpu.memory_space<vmem>>, %arg9: memref<1x96xf32, #tpu.memory_space<vmem>>, %arg10: memref<1x96xf32, #tpu.memory_space<vmem>>, %arg11: memref<8x8x32xf32, #tpu.memory_space<vmem>>, %arg12: memref<2x8x32xf32, #tpu.memory_space<vmem>>, %arg13: memref<8x8x96xf32, #tpu.memory_space<vmem>>, %arg14: memref<8x8x32xf32, #tpu.memory_space<vmem>>) attributes {dimension_semantics = [#tpu.dimension_semantics<parallel>], iteration_bounds = array<i64: 1>, scalar_prefetch = 0 : i64, scratch_operands = 2 : i64, tpu.core_type = #tpu.core_type<tc>, window_params = [{transform_indices = @transform_0, window_bounds = array<i64: 8, 8, 16>}, {transform_indices = @transform_1, window_bounds = array<i64: 2, 8, 32>}, {pipeline_mode = #tpu.pipeline_mode<synchronous>, transform_indices = @transform_2, window_bounds = array<i64: 16, 96>}, {pipeline_mode = #tpu.pipeline_mode<synchronous>, transform_indices = @transform_3, window_bounds = array<i64: 32, 96>}, {pipeline_mode = #tpu.pipeline_mode<synchronous>, transform_indices = @transform_4, window_bounds = array<i64: 1, 96>}, {pipeline_mode = #tpu.pipeline_mode<synchronous>, transform_indices = @transform_5, window_bounds = array<i64: 1, 96>}, {pipeline_mode = #tpu.pipeline_mode<synchronous>, transform_indices = @transform_6, window_bounds = array<i64: 32, 96>}, {pipeline_mode = #tpu.pipeline_mode<synchronous>, transform_indices = @transform_7, window_bounds = array<i64: 32, 96>}, {pipeline_mode = #tpu.pipeline_mode<synchronous>, transform_indices = @transform_8, window_bounds = array<i64: 1, 96>}, {pipeline_mode = #tpu.pipeline_mode<synchronous>, transform_indices = @transform_9, window_bounds = array<i64: 1, 96>}, {transform_indices = @transform_10, window_bounds = array<i64: 8, 8, 32>}, {transform_indices = @transform_11, window_bounds = array<i64: 2, 8, 32>}]} {
    %c0 = arith.constant 0 : index
    %c0_0 = arith.constant 0 : index
    %c0_1 = arith.constant 0 : index
    %0 = vector.load %arg1[%c0, %c0_0, %c0_1] : memref<8x8x16xf32, #tpu.memory_space<vmem>>, vector<8x8x16xf32>
    %1 = vector.shape_cast %0 : vector<8x8x16xf32> to vector<64x16xf32>
    %c0_2 = arith.constant 0 : index
    %c0_3 = arith.constant 0 : index
    %2 = vector.load %arg3[%c0_2, %c0_3] : memref<16x96xf32, #tpu.memory_space<vmem>>, vector<16x96xf32>
    %c0_4 = arith.constant 0 : index
    %c0_5 = arith.constant 0 : index
    %3 = vector.load %arg4[%c0_4, %c0_5] : memref<32x96xf32, #tpu.memory_space<vmem>>, vector<32x96xf32>
    %cst = arith.constant dense<0.000000e+00> : vector<64x96xf32>
    %4 = tpu.matmul %1, %2, %cst {dimension_numbers = #tpu.dot_dimension_numbers<[1], [0], [0], [1], [0, 0, 1, 1], [], []>} : vector<64x16xf32>, vector<16x96xf32>, vector<64x96xf32> -> vector<64x96xf32>
    %c0_6 = arith.constant 0 : index
    %c0_7 = arith.constant 0 : index
    %5 = vector.load %arg5[%c0_6, %c0_7] : memref<1x96xf32, #tpu.memory_space<vmem>>, vector<1x96xf32>
    %6 = vector.broadcast %5 : vector<1x96xf32> to vector<64x96xf32>
    %7 = arith.addf %4, %6 : vector<64x96xf32>
    %8 = vector.shape_cast %7 : vector<64x96xf32> to vector<8x8x96xf32>
    %c0_8 = arith.constant 0 : index
    %c0_9 = arith.constant 0 : index
    %c0_10 = arith.constant 0 : index
    %9 = vector.load %arg13[%c0_8, %c0_9, %c0_10] : memref<8x8x96xf32, #tpu.memory_space<vmem>>, vector<8x8x96xf32>
    tpu.vector_store %arg13[%c0_8, %c0_9, %c0_10], %8 {strides = array<i32>} : memref<8x8x96xf32, #tpu.memory_space<vmem>>, vector<8x8x96xf32>,
    %c0_11 = arith.constant 0 : index
    %c0_12 = arith.constant 0 : index
    %10 = vector.load %arg6[%c0_11, %c0_12] : memref<1x96xf32, #tpu.memory_space<vmem>>, vector<1x96xf32>
    %11 = vector.shape_cast %10 : vector<1x96xf32> to vector<1x96xf32>
    %12 = vector.broadcast %11 : vector<1x96xf32> to vector<8x96xf32>
    %c0_13 = arith.constant 0 : index
    %c0_14 = arith.constant 0 : index
    %c0_15 = arith.constant 0 : index
    %13 = vector.load %arg2[%c0_13, %c0_14, %c0_15] : memref<2x8x32xf32, #tpu.memory_space<vmem>>, vector<1x8x32xf32>
    %14 = vector.shape_cast %13 : vector<1x8x32xf32> to vector<8x32xf32>
    %c0_i32 = arith.constant 0 : i32
    %cst_16 = arith.constant dense<0.000000e+00> : vector<8x96xf32>
    %15 = tpu.matmul %14, %3, %cst_16 {dimension_numbers = #tpu.dot_dimension_numbers<[1], [0], [0], [1], [0, 0, 1, 1], [], []>} : vector<8x32xf32>, vector<32x96xf32>, vector<8x96xf32> -> vector<8x96xf32>
    %16 = arith.addf %15, %12 : vector<8x96xf32>
    %17 = arith.index_cast %c0_i32 : i32 to index
    %c0_17 = arith.constant 0 : index
    %c0_18 = arith.constant 0 : index
    %18 = vector.load %arg13[%17, %c0_17, %c0_18] : memref<8x8x96xf32, #tpu.memory_space<vmem>>, vector<1x8x96xf32>
    %19 = vector.shape_cast %18 : vector<1x8x96xf32> to vector<8x96xf32>
    %20 = vector.extract_strided_slice %19 {offsets = [0, 0], sizes = [8, 32], strides = [1, 1]} : vector<8x96xf32> to vector<8x32xf32>
    %21 = vector.extract_strided_slice %16 {offsets = [0, 0], sizes = [8, 32], strides = [1, 1]} : vector<8x96xf32> to vector<8x32xf32>
    %22 = arith.addf %20, %21 : vector<8x32xf32>
    %23 = arith.negf %22 : vector<8x32xf32>
    %24 = math.exp %23 : vector<8x32xf32>
    %cst_19 = arith.constant 1.000000e+00 : f32
    %25 = vector.broadcast %cst_19 : f32 to vector<8x32xf32>
    %26 = arith.addf %25, %24 : vector<8x32xf32>
    %27 = arith.divf %25, %26 : vector<8x32xf32>
    %28 = vector.extract_strided_slice %19 {offsets = [0, 32], sizes = [8, 32], strides = [1, 1]} : vector<8x96xf32> to vector<8x32xf32>
    %29 = vector.extract_strided_slice %16 {offsets = [0, 32], sizes = [8, 32], strides = [1, 1]} : vector<8x96xf32> to vector<8x32xf32>
    %30 = arith.addf %28, %29 : vector<8x32xf32>
    %31 = arith.negf %30 : vector<8x32xf32>
    %32 = math.exp %31 : vector<8x32xf32>
    %cst_20 = arith.constant 1.000000e+00 : f32
    %33 = vector.broadcast %cst_20 : f32 to vector<8x32xf32>
    %34 = arith.addf %33, %32 : vector<8x32xf32>
    %35 = arith.divf %33, %34 : vector<8x32xf32>
    %36 = vector.extract_strided_slice %19 {offsets = [0, 64], sizes = [8, 32], strides = [1, 1]} : vector<8x96xf32> to vector<8x32xf32>
    %37 = vector.extract_strided_slice %16 {offsets = [0, 64], sizes = [8, 32], strides = [1, 1]} : vector<8x96xf32> to vector<8x32xf32>
    %38 = arith.mulf %27, %37 : vector<8x32xf32>
    %39 = arith.addf %36, %38 : vector<8x32xf32>
    %40 = math.tanh %39 : vector<8x32xf32>
    %cst_21 = arith.constant 1.000000e+00 : f32
    %41 = vector.broadcast %cst_21 : f32 to vector<8x32xf32>
    %42 = arith.subf %41, %35 : vector<8x32xf32>
    %43 = arith.mulf %42, %40 : vector<8x32xf32>
    %44 = arith.mulf %35, %14 : vector<8x32xf32>
    %45 = arith.addf %43, %44 : vector<8x32xf32>
    %46 = arith.index_cast %c0_i32 : i32 to index
    %c0_22 = arith.constant 0 : index
    %c0_23 = arith.constant 0 : index
    %47 = vector.load %arg14[%46, %c0_22, %c0_23] : memref<8x8x32xf32, #tpu.memory_space<vmem>>, vector<1x8x32xf32>
    %48 = vector.shape_cast %47 : vector<1x8x32xf32> to vector<8x32xf32>
    %49 = vector.shape_cast %45 : vector<8x32xf32> to vector<1x8x32xf32>
    tpu.vector_store %arg14[%46, %c0_22, %c0_23], %49 {strides = array<i32>} : memref<8x8x32xf32, #tpu.memory_space<vmem>>, vector<1x8x32xf32>,
    %c1_i32 = arith.constant 1 : i32
    %cst_24 = arith.constant dense<0.000000e+00> : vector<8x96xf32>
    %50 = tpu.matmul %45, %3, %cst_24 {dimension_numbers = #tpu.dot_dimension_numbers<[1], [0], [0], [1], [0, 0, 1, 1], [], []>} : vector<8x32xf32>, vector<32x96xf32>, vector<8x96xf32> -> vector<8x96xf32>
    %51 = arith.addf %50, %12 : vector<8x96xf32>
    %52 = arith.index_cast %c1_i32 : i32 to index
    %c0_25 = arith.constant 0 : index
    %c0_26 = arith.constant 0 : index
    %53 = vector.load %arg13[%52, %c0_25, %c0_26] : memref<8x8x96xf32, #tpu.memory_space<vmem>>, vector<1x8x96xf32>
    %54 = vector.shape_cast %53 : vector<1x8x96xf32> to vector<8x96xf32>
    %55 = vector.extract_strided_slice %54 {offsets = [0, 0], sizes = [8, 32], strides = [1, 1]} : vector<8x96xf32> to vector<8x32xf32>
    %56 = vector.extract_strided_slice %51 {offsets = [0, 0], sizes = [8, 32], strides = [1, 1]} : vector<8x96xf32> to vector<8x32xf32>
    %57 = arith.addf %55, %56 : vector<8x32xf32>
    %58 = arith.negf %57 : vector<8x32xf32>
    %59 = math.exp %58 : vector<8x32xf32>
    %cst_27 = arith.constant 1.000000e+00 : f32
    %60 = vector.broadcast %cst_27 : f32 to vector<8x32xf32>
    %61 = arith.addf %60, %59 : vector<8x32xf32>
    %62 = arith.divf %60, %61 : vector<8x32xf32>
    %63 = vector.extract_strided_slice %54 {offsets = [0, 32], sizes = [8, 32], strides = [1, 1]} : vector<8x96xf32> to vector<8x32xf32>
    %64 = vector.extract_strided_slice %51 {offsets = [0, 32], sizes = [8, 32], strides = [1, 1]} : vector<8x96xf32> to vector<8x32xf32>
    %65 = arith.addf %63, %64 : vector<8x32xf32>
    %66 = arith.negf %65 : vector<8x32xf32>
    %67 = math.exp %66 : vector<8x32xf32>
    %cst_28 = arith.constant 1.000000e+00 : f32
    %68 = vector.broadcast %cst_28 : f32 to vector<8x32xf32>
    %69 = arith.addf %68, %67 : vector<8x32xf32>
    %70 = arith.divf %68, %69 : vector<8x32xf32>
    %71 = vector.extract_strided_slice %54 {offsets = [0, 64], sizes = [8, 32], strides = [1, 1]} : vector<8x96xf32> to vector<8x32xf32>
    %72 = vector.extract_strided_slice %51 {offsets = [0, 64], sizes = [8, 32], strides = [1, 1]} : vector<8x96xf32> to vector<8x32xf32>
    %73 = arith.mulf %62, %72 : vector<8x32xf32>
    %74 = arith.addf %71, %73 : vector<8x32xf32>
    %75 = math.tanh %74 : vector<8x32xf32>
    %cst_29 = arith.constant 1.000000e+00 : f32
    %76 = vector.broadcast %cst_29 : f32 to vector<8x32xf32>
    %77 = arith.subf %76, %70 : vector<8x32xf32>
    %78 = arith.mulf %77, %75 : vector<8x32xf32>
    %79 = arith.mulf %70, %45 : vector<8x32xf32>
    %80 = arith.addf %78, %79 : vector<8x32xf32>
    %81 = arith.index_cast %c1_i32 : i32 to index
    %c0_30 = arith.constant 0 : index
    %c0_31 = arith.constant 0 : index
    %82 = vector.load %arg14[%81, %c0_30, %c0_31] : memref<8x8x32xf32, #tpu.memory_space<vmem>>, vector<1x8x32xf32>
    %83 = vector.shape_cast %82 : vector<1x8x32xf32> to vector<8x32xf32>
    %84 = vector.shape_cast %80 : vector<8x32xf32> to vector<1x8x32xf32>
    tpu.vector_store %arg14[%81, %c0_30, %c0_31], %84 {strides = array<i32>} : memref<8x8x32xf32, #tpu.memory_space<vmem>>, vector<1x8x32xf32>,
    %c2_i32 = arith.constant 2 : i32
    %cst_32 = arith.constant dense<0.000000e+00> : vector<8x96xf32>
    %85 = tpu.matmul %80, %3, %cst_32 {dimension_numbers = #tpu.dot_dimension_numbers<[1], [0], [0], [1], [0, 0, 1, 1], [], []>} : vector<8x32xf32>, vector<32x96xf32>, vector<8x96xf32> -> vector<8x96xf32>
    %86 = arith.addf %85, %12 : vector<8x96xf32>
    %87 = arith.index_cast %c2_i32 : i32 to index
    %c0_33 = arith.constant 0 : index
    %c0_34 = arith.constant 0 : index
    %88 = vector.load %arg13[%87, %c0_33, %c0_34] : memref<8x8x96xf32, #tpu.memory_space<vmem>>, vector<1x8x96xf32>
    %89 = vector.shape_cast %88 : vector<1x8x96xf32> to vector<8x96xf32>
    %90 = vector.extract_strided_slice %89 {offsets = [0, 0], sizes = [8, 32], strides = [1, 1]} : vector<8x96xf32> to vector<8x32xf32>
    %91 = vector.extract_strided_slice %86 {offsets = [0, 0], sizes = [8, 32], strides = [1, 1]} : vector<8x96xf32> to vector<8x32xf32>
    %92 = arith.addf %90, %91 : vector<8x32xf32>
    %93 = arith.negf %92 : vector<8x32xf32>
    %94 = math.exp %93 : vector<8x32xf32>
    %cst_35 = arith.constant 1.000000e+00 : f32
    %95 = vector.broadcast %cst_35 : f32 to vector<8x32xf32>
    %96 = arith.addf %95, %94 : vector<8x32xf32>
    %97 = arith.divf %95, %96 : vector<8x32xf32>
    %98 = vector.extract_strided_slice %89 {offsets = [0, 32], sizes = [8, 32], strides = [1, 1]} : vector<8x96xf32> to vector<8x32xf32>
    %99 = vector.extract_strided_slice %86 {offsets = [0, 32], sizes = [8, 32], strides = [1, 1]} : vector<8x96xf32> to vector<8x32xf32>
    %100 = arith.addf %98, %99 : vector<8x32xf32>
    %101 = arith.negf %100 : vector<8x32xf32>
    %102 = math.exp %101 : vector<8x32xf32>
    %cst_36 = arith.constant 1.000000e+00 : f32
    %103 = vector.broadcast %cst_36 : f32 to vector<8x32xf32>
    %104 = arith.addf %103, %102 : vector<8x32xf32>
    %105 = arith.divf %103, %104 : vector<8x32xf32>
    %106 = vector.extract_strided_slice %89 {offsets = [0, 64], sizes = [8, 32], strides = [1, 1]} : vector<8x96xf32> to vector<8x32xf32>
    %107 = vector.extract_strided_slice %86 {offsets = [0, 64], sizes = [8, 32], strides = [1, 1]} : vector<8x96xf32> to vector<8x32xf32>
    %108 = arith.mulf %97, %107 : vector<8x32xf32>
    %109 = arith.addf %106, %108 : vector<8x32xf32>
    %110 = math.tanh %109 : vector<8x32xf32>
    %cst_37 = arith.constant 1.000000e+00 : f32
    %111 = vector.broadcast %cst_37 : f32 to vector<8x32xf32>
    %112 = arith.subf %111, %105 : vector<8x32xf32>
    %113 = arith.mulf %112, %110 : vector<8x32xf32>
    %114 = arith.mulf %105, %80 : vector<8x32xf32>
    %115 = arith.addf %113, %114 : vector<8x32xf32>
    %116 = arith.index_cast %c2_i32 : i32 to index
    %c0_38 = arith.constant 0 : index
    %c0_39 = arith.constant 0 : index
    %117 = vector.load %arg14[%116, %c0_38, %c0_39] : memref<8x8x32xf32, #tpu.memory_space<vmem>>, vector<1x8x32xf32>
    %118 = vector.shape_cast %117 : vector<1x8x32xf32> to vector<8x32xf32>
    %119 = vector.shape_cast %115 : vector<8x32xf32> to vector<1x8x32xf32>
    tpu.vector_store %arg14[%116, %c0_38, %c0_39], %119 {strides = array<i32>} : memref<8x8x32xf32, #tpu.memory_space<vmem>>, vector<1x8x32xf32>,
    %c3_i32 = arith.constant 3 : i32
    %cst_40 = arith.constant dense<0.000000e+00> : vector<8x96xf32>
    %120 = tpu.matmul %115, %3, %cst_40 {dimension_numbers = #tpu.dot_dimension_numbers<[1], [0], [0], [1], [0, 0, 1, 1], [], []>} : vector<8x32xf32>, vector<32x96xf32>, vector<8x96xf32> -> vector<8x96xf32>
    %121 = arith.addf %120, %12 : vector<8x96xf32>
    %122 = arith.index_cast %c3_i32 : i32 to index
    %c0_41 = arith.constant 0 : index
    %c0_42 = arith.constant 0 : index
    %123 = vector.load %arg13[%122, %c0_41, %c0_42] : memref<8x8x96xf32, #tpu.memory_space<vmem>>, vector<1x8x96xf32>
    %124 = vector.shape_cast %123 : vector<1x8x96xf32> to vector<8x96xf32>
    %125 = vector.extract_strided_slice %124 {offsets = [0, 0], sizes = [8, 32], strides = [1, 1]} : vector<8x96xf32> to vector<8x32xf32>
    %126 = vector.extract_strided_slice %121 {offsets = [0, 0], sizes = [8, 32], strides = [1, 1]} : vector<8x96xf32> to vector<8x32xf32>
    %127 = arith.addf %125, %126 : vector<8x32xf32>
    %128 = arith.negf %127 : vector<8x32xf32>
    %129 = math.exp %128 : vector<8x32xf32>
    %cst_43 = arith.constant 1.000000e+00 : f32
    %130 = vector.broadcast %cst_43 : f32 to vector<8x32xf32>
    %131 = arith.addf %130, %129 : vector<8x32xf32>
    %132 = arith.divf %130, %131 : vector<8x32xf32>
    %133 = vector.extract_strided_slice %124 {offsets = [0, 32], sizes = [8, 32], strides = [1, 1]} : vector<8x96xf32> to vector<8x32xf32>
    %134 = vector.extract_strided_slice %121 {offsets = [0, 32], sizes = [8, 32], strides = [1, 1]} : vector<8x96xf32> to vector<8x32xf32>
    %135 = arith.addf %133, %134 : vector<8x32xf32>
    %136 = arith.negf %135 : vector<8x32xf32>
    %137 = math.exp %136 : vector<8x32xf32>
    %cst_44 = arith.constant 1.000000e+00 : f32
    %138 = vector.broadcast %cst_44 : f32 to vector<8x32xf32>
    %139 = arith.addf %138, %137 : vector<8x32xf32>
    %140 = arith.divf %138, %139 : vector<8x32xf32>
    %141 = vector.extract_strided_slice %124 {offsets = [0, 64], sizes = [8, 32], strides = [1, 1]} : vector<8x96xf32> to vector<8x32xf32>
    %142 = vector.extract_strided_slice %121 {offsets = [0, 64], sizes = [8, 32], strides = [1, 1]} : vector<8x96xf32> to vector<8x32xf32>
    %143 = arith.mulf %132, %142 : vector<8x32xf32>
    %144 = arith.addf %141, %143 : vector<8x32xf32>
    %145 = math.tanh %144 : vector<8x32xf32>
    %cst_45 = arith.constant 1.000000e+00 : f32
    %146 = vector.broadcast %cst_45 : f32 to vector<8x32xf32>
    %147 = arith.subf %146, %140 : vector<8x32xf32>
    %148 = arith.mulf %147, %145 : vector<8x32xf32>
    %149 = arith.mulf %140, %115 : vector<8x32xf32>
    %150 = arith.addf %148, %149 : vector<8x32xf32>
    %151 = arith.index_cast %c3_i32 : i32 to index
    %c0_46 = arith.constant 0 : index
    %c0_47 = arith.constant 0 : index
    %152 = vector.load %arg14[%151, %c0_46, %c0_47] : memref<8x8x32xf32, #tpu.memory_space<vmem>>, vector<1x8x32xf32>
    %153 = vector.shape_cast %152 : vector<1x8x32xf32> to vector<8x32xf32>
    %154 = vector.shape_cast %150 : vector<8x32xf32> to vector<1x8x32xf32>
    tpu.vector_store %arg14[%151, %c0_46, %c0_47], %154 {strides = array<i32>} : memref<8x8x32xf32, #tpu.memory_space<vmem>>, vector<1x8x32xf32>,
    %c4_i32 = arith.constant 4 : i32
    %cst_48 = arith.constant dense<0.000000e+00> : vector<8x96xf32>
    %155 = tpu.matmul %150, %3, %cst_48 {dimension_numbers = #tpu.dot_dimension_numbers<[1], [0], [0], [1], [0, 0, 1, 1], [], []>} : vector<8x32xf32>, vector<32x96xf32>, vector<8x96xf32> -> vector<8x96xf32>
    %156 = arith.addf %155, %12 : vector<8x96xf32>
    %157 = arith.index_cast %c4_i32 : i32 to index
    %c0_49 = arith.constant 0 : index
    %c0_50 = arith.constant 0 : index
    %158 = vector.load %arg13[%157, %c0_49, %c0_50] : memref<8x8x96xf32, #tpu.memory_space<vmem>>, vector<1x8x96xf32>
    %159 = vector.shape_cast %158 : vector<1x8x96xf32> to vector<8x96xf32>
    %160 = vector.extract_strided_slice %159 {offsets = [0, 0], sizes = [8, 32], strides = [1, 1]} : vector<8x96xf32> to vector<8x32xf32>
    %161 = vector.extract_strided_slice %156 {offsets = [0, 0], sizes = [8, 32], strides = [1, 1]} : vector<8x96xf32> to vector<8x32xf32>
    %162 = arith.addf %160, %161 : vector<8x32xf32>
    %163 = arith.negf %162 : vector<8x32xf32>
    %164 = math.exp %163 : vector<8x32xf32>
    %cst_51 = arith.constant 1.000000e+00 : f32
    %165 = vector.broadcast %cst_51 : f32 to vector<8x32xf32>
    %166 = arith.addf %165, %164 : vector<8x32xf32>
    %167 = arith.divf %165, %166 : vector<8x32xf32>
    %168 = vector.extract_strided_slice %159 {offsets = [0, 32], sizes = [8, 32], strides = [1, 1]} : vector<8x96xf32> to vector<8x32xf32>
    %169 = vector.extract_strided_slice %156 {offsets = [0, 32], sizes = [8, 32], strides = [1, 1]} : vector<8x96xf32> to vector<8x32xf32>
    %170 = arith.addf %168, %169 : vector<8x32xf32>
    %171 = arith.negf %170 : vector<8x32xf32>
    %172 = math.exp %171 : vector<8x32xf32>
    %cst_52 = arith.constant 1.000000e+00 : f32
    %173 = vector.broadcast %cst_52 : f32 to vector<8x32xf32>
    %174 = arith.addf %173, %172 : vector<8x32xf32>
    %175 = arith.divf %173, %174 : vector<8x32xf32>
    %176 = vector.extract_strided_slice %159 {offsets = [0, 64], sizes = [8, 32], strides = [1, 1]} : vector<8x96xf32> to vector<8x32xf32>
    %177 = vector.extract_strided_slice %156 {offsets = [0, 64], sizes = [8, 32], strides = [1, 1]} : vector<8x96xf32> to vector<8x32xf32>
    %178 = arith.mulf %167, %177 : vector<8x32xf32>
    %179 = arith.addf %176, %178 : vector<8x32xf32>
    %180 = math.tanh %179 : vector<8x32xf32>
    %cst_53 = arith.constant 1.000000e+00 : f32
    %181 = vector.broadcast %cst_53 : f32 to vector<8x32xf32>
    %182 = arith.subf %181, %175 : vector<8x32xf32>
    %183 = arith.mulf %182, %180 : vector<8x32xf32>
    %184 = arith.mulf %175, %150 : vector<8x32xf32>
    %185 = arith.addf %183, %184 : vector<8x32xf32>
    %186 = arith.index_cast %c4_i32 : i32 to index
    %c0_54 = arith.constant 0 : index
    %c0_55 = arith.constant 0 : index
    %187 = vector.load %arg14[%186, %c0_54, %c0_55] : memref<8x8x32xf32, #tpu.memory_space<vmem>>, vector<1x8x32xf32>
    %188 = vector.shape_cast %187 : vector<1x8x32xf32> to vector<8x32xf32>
    %189 = vector.shape_cast %185 : vector<8x32xf32> to vector<1x8x32xf32>
    tpu.vector_store %arg14[%186, %c0_54, %c0_55], %189 {strides = array<i32>} : memref<8x8x32xf32, #tpu.memory_space<vmem>>, vector<1x8x32xf32>,
    %c5_i32 = arith.constant 5 : i32
    %cst_56 = arith.constant dense<0.000000e+00> : vector<8x96xf32>
    %190 = tpu.matmul %185, %3, %cst_56 {dimension_numbers = #tpu.dot_dimension_numbers<[1], [0], [0], [1], [0, 0, 1, 1], [], []>} : vector<8x32xf32>, vector<32x96xf32>, vector<8x96xf32> -> vector<8x96xf32>
    %191 = arith.addf %190, %12 : vector<8x96xf32>
    %192 = arith.index_cast %c5_i32 : i32 to index
    %c0_57 = arith.constant 0 : index
    %c0_58 = arith.constant 0 : index
    %193 = vector.load %arg13[%192, %c0_57, %c0_58] : memref<8x8x96xf32, #tpu.memory_space<vmem>>, vector<1x8x96xf32>
    %194 = vector.shape_cast %193 : vector<1x8x96xf32> to vector<8x96xf32>
    %195 = vector.extract_strided_slice %194 {offsets = [0, 0], sizes = [8, 32], strides = [1, 1]} : vector<8x96xf32> to vector<8x32xf32>
    %196 = vector.extract_strided_slice %191 {offsets = [0, 0], sizes = [8, 32], strides = [1, 1]} : vector<8x96xf32> to vector<8x32xf32>
    %197 = arith.addf %195, %196 : vector<8x32xf32>
    %198 = arith.negf %197 : vector<8x32xf32>
    %199 = math.exp %198 : vector<8x32xf32>
    %cst_59 = arith.constant 1.000000e+00 : f32
    %200 = vector.broadcast %cst_59 : f32 to vector<8x32xf32>
    %201 = arith.addf %200, %199 : vector<8x32xf32>
    %202 = arith.divf %200, %201 : vector<8x32xf32>
    %203 = vector.extract_strided_slice %194 {offsets = [0, 32], sizes = [8, 32], strides = [1, 1]} : vector<8x96xf32> to vector<8x32xf32>
    %204 = vector.extract_strided_slice %191 {offsets = [0, 32], sizes = [8, 32], strides = [1, 1]} : vector<8x96xf32> to vector<8x32xf32>
    %205 = arith.addf %203, %204 : vector<8x32xf32>
    %206 = arith.negf %205 : vector<8x32xf32>
    %207 = math.exp %206 : vector<8x32xf32>
    %cst_60 = arith.constant 1.000000e+00 : f32
    %208 = vector.broadcast %cst_60 : f32 to vector<8x32xf32>
    %209 = arith.addf %208, %207 : vector<8x32xf32>
    %210 = arith.divf %208, %209 : vector<8x32xf32>
    %211 = vector.extract_strided_slice %194 {offsets = [0, 64], sizes = [8, 32], strides = [1, 1]} : vector<8x96xf32> to vector<8x32xf32>
    %212 = vector.extract_strided_slice %191 {offsets = [0, 64], sizes = [8, 32], strides = [1, 1]} : vector<8x96xf32> to vector<8x32xf32>
    %213 = arith.mulf %202, %212 : vector<8x32xf32>
    %214 = arith.addf %211, %213 : vector<8x32xf32>
    %215 = math.tanh %214 : vector<8x32xf32>
    %cst_61 = arith.constant 1.000000e+00 : f32
    %216 = vector.broadcast %cst_61 : f32 to vector<8x32xf32>
    %217 = arith.subf %216, %210 : vector<8x32xf32>
    %218 = arith.mulf %217, %215 : vector<8x32xf32>
    %219 = arith.mulf %210, %185 : vector<8x32xf32>
    %220 = arith.addf %218, %219 : vector<8x32xf32>
    %221 = arith.index_cast %c5_i32 : i32 to index
    %c0_62 = arith.constant 0 : index
    %c0_63 = arith.constant 0 : index
    %222 = vector.load %arg14[%221, %c0_62, %c0_63] : memref<8x8x32xf32, #tpu.memory_space<vmem>>, vector<1x8x32xf32>
    %223 = vector.shape_cast %222 : vector<1x8x32xf32> to vector<8x32xf32>
    %224 = vector.shape_cast %220 : vector<8x32xf32> to vector<1x8x32xf32>
    tpu.vector_store %arg14[%221, %c0_62, %c0_63], %224 {strides = array<i32>} : memref<8x8x32xf32, #tpu.memory_space<vmem>>, vector<1x8x32xf32>,
    %c6_i32 = arith.constant 6 : i32
    %cst_64 = arith.constant dense<0.000000e+00> : vector<8x96xf32>
    %225 = tpu.matmul %220, %3, %cst_64 {dimension_numbers = #tpu.dot_dimension_numbers<[1], [0], [0], [1], [0, 0, 1, 1], [], []>} : vector<8x32xf32>, vector<32x96xf32>, vector<8x96xf32> -> vector<8x96xf32>
    %226 = arith.addf %225, %12 : vector<8x96xf32>
    %227 = arith.index_cast %c6_i32 : i32 to index
    %c0_65 = arith.constant 0 : index
    %c0_66 = arith.constant 0 : index
    %228 = vector.load %arg13[%227, %c0_65, %c0_66] : memref<8x8x96xf32, #tpu.memory_space<vmem>>, vector<1x8x96xf32>
    %229 = vector.shape_cast %228 : vector<1x8x96xf32> to vector<8x96xf32>
    %230 = vector.extract_strided_slice %229 {offsets = [0, 0], sizes = [8, 32], strides = [1, 1]} : vector<8x96xf32> to vector<8x32xf32>
    %231 = vector.extract_strided_slice %226 {offsets = [0, 0], sizes = [8, 32], strides = [1, 1]} : vector<8x96xf32> to vector<8x32xf32>
    %232 = arith.addf %230, %231 : vector<8x32xf32>
    %233 = arith.negf %232 : vector<8x32xf32>
    %234 = math.exp %233 : vector<8x32xf32>
    %cst_67 = arith.constant 1.000000e+00 : f32
    %235 = vector.broadcast %cst_67 : f32 to vector<8x32xf32>
    %236 = arith.addf %235, %234 : vector<8x32xf32>
    %237 = arith.divf %235, %236 : vector<8x32xf32>
    %238 = vector.extract_strided_slice %229 {offsets = [0, 32], sizes = [8, 32], strides = [1, 1]} : vector<8x96xf32> to vector<8x32xf32>
    %239 = vector.extract_strided_slice %226 {offsets = [0, 32], sizes = [8, 32], strides = [1, 1]} : vector<8x96xf32> to vector<8x32xf32>
    %240 = arith.addf %238, %239 : vector<8x32xf32>
    %241 = arith.negf %240 : vector<8x32xf32>
    %242 = math.exp %241 : vector<8x32xf32>
    %cst_68 = arith.constant 1.000000e+00 : f32
    %243 = vector.broadcast %cst_68 : f32 to vector<8x32xf32>
    %244 = arith.addf %243, %242 : vector<8x32xf32>
    %245 = arith.divf %243, %244 : vector<8x32xf32>
    %246 = vector.extract_strided_slice %229 {offsets = [0, 64], sizes = [8, 32], strides = [1, 1]} : vector<8x96xf32> to vector<8x32xf32>
    %247 = vector.extract_strided_slice %226 {offsets = [0, 64], sizes = [8, 32], strides = [1, 1]} : vector<8x96xf32> to vector<8x32xf32>
    %248 = arith.mulf %237, %247 : vector<8x32xf32>
    %249 = arith.addf %246, %248 : vector<8x32xf32>
    %250 = math.tanh %249 : vector<8x32xf32>
    %cst_69 = arith.constant 1.000000e+00 : f32
    %251 = vector.broadcast %cst_69 : f32 to vector<8x32xf32>
    %252 = arith.subf %251, %245 : vector<8x32xf32>
    %253 = arith.mulf %252, %250 : vector<8x32xf32>
    %254 = arith.mulf %245, %220 : vector<8x32xf32>
    %255 = arith.addf %253, %254 : vector<8x32xf32>
    %256 = arith.index_cast %c6_i32 : i32 to index
    %c0_70 = arith.constant 0 : index
    %c0_71 = arith.constant 0 : index
    %257 = vector.load %arg14[%256, %c0_70, %c0_71] : memref<8x8x32xf32, #tpu.memory_space<vmem>>, vector<1x8x32xf32>
    %258 = vector.shape_cast %257 : vector<1x8x32xf32> to vector<8x32xf32>
    %259 = vector.shape_cast %255 : vector<8x32xf32> to vector<1x8x32xf32>
    tpu.vector_store %arg14[%256, %c0_70, %c0_71], %259 {strides = array<i32>} : memref<8x8x32xf32, #tpu.memory_space<vmem>>, vector<1x8x32xf32>,
    %c7_i32 = arith.constant 7 : i32
    %cst_72 = arith.constant dense<0.000000e+00> : vector<8x96xf32>
    %260 = tpu.matmul %255, %3, %cst_72 {dimension_numbers = #tpu.dot_dimension_numbers<[1], [0], [0], [1], [0, 0, 1, 1], [], []>} : vector<8x32xf32>, vector<32x96xf32>, vector<8x96xf32> -> vector<8x96xf32>
    %261 = arith.addf %260, %12 : vector<8x96xf32>
    %262 = arith.index_cast %c7_i32 : i32 to index
    %c0_73 = arith.constant 0 : index
    %c0_74 = arith.constant 0 : index
    %263 = vector.load %arg13[%262, %c0_73, %c0_74] : memref<8x8x96xf32, #tpu.memory_space<vmem>>, vector<1x8x96xf32>
    %264 = vector.shape_cast %263 : vector<1x8x96xf32> to vector<8x96xf32>
    %265 = vector.extract_strided_slice %264 {offsets = [0, 0], sizes = [8, 32], strides = [1, 1]} : vector<8x96xf32> to vector<8x32xf32>
    %266 = vector.extract_strided_slice %261 {offsets = [0, 0], sizes = [8, 32], strides = [1, 1]} : vector<8x96xf32> to vector<8x32xf32>
    %267 = arith.addf %265, %266 : vector<8x32xf32>
    %268 = arith.negf %267 : vector<8x32xf32>
    %269 = math.exp %268 : vector<8x32xf32>
    %cst_75 = arith.constant 1.000000e+00 : f32
    %270 = vector.broadcast %cst_75 : f32 to vector<8x32xf32>
    %271 = arith.addf %270, %269 : vector<8x32xf32>
    %272 = arith.divf %270, %271 : vector<8x32xf32>
    %273 = vector.extract_strided_slice %264 {offsets = [0, 32], sizes = [8, 32], strides = [1, 1]} : vector<8x96xf32> to vector<8x32xf32>
    %274 = vector.extract_strided_slice %261 {offsets = [0, 32], sizes = [8, 32], strides = [1, 1]} : vector<8x96xf32> to vector<8x32xf32>
    %275 = arith.addf %273, %274 : vector<8x32xf32>
    %276 = arith.negf %275 : vector<8x32xf32>
    %277 = math.exp %276 : vector<8x32xf32>
    %cst_76 = arith.constant 1.000000e+00 : f32
    %278 = vector.broadcast %cst_76 : f32 to vector<8x32xf32>
    %279 = arith.addf %278, %277 : vector<8x32xf32>
    %280 = arith.divf %278, %279 : vector<8x32xf32>
    %281 = vector.extract_strided_slice %264 {offsets = [0, 64], sizes = [8, 32], strides = [1, 1]} : vector<8x96xf32> to vector<8x32xf32>
    %282 = vector.extract_strided_slice %261 {offsets = [0, 64], sizes = [8, 32], strides = [1, 1]} : vector<8x96xf32> to vector<8x32xf32>
    %283 = arith.mulf %272, %282 : vector<8x32xf32>
    %284 = arith.addf %281, %283 : vector<8x32xf32>
    %285 = math.tanh %284 : vector<8x32xf32>
    %cst_77 = arith.constant 1.000000e+00 : f32
    %286 = vector.broadcast %cst_77 : f32 to vector<8x32xf32>
    %287 = arith.subf %286, %280 : vector<8x32xf32>
    %288 = arith.mulf %287, %285 : vector<8x32xf32>
    %289 = arith.mulf %280, %255 : vector<8x32xf32>
    %290 = arith.addf %288, %289 : vector<8x32xf32>
    %291 = arith.index_cast %c7_i32 : i32 to index
    %c0_78 = arith.constant 0 : index
    %c0_79 = arith.constant 0 : index
    %292 = vector.load %arg14[%291, %c0_78, %c0_79] : memref<8x8x32xf32, #tpu.memory_space<vmem>>, vector<1x8x32xf32>
    %293 = vector.shape_cast %292 : vector<1x8x32xf32> to vector<8x32xf32>
    %294 = vector.shape_cast %290 : vector<8x32xf32> to vector<1x8x32xf32>
    tpu.vector_store %arg14[%291, %c0_78, %c0_79], %294 {strides = array<i32>} : memref<8x8x32xf32, #tpu.memory_space<vmem>>, vector<1x8x32xf32>,
    %c8_i32 = arith.constant 8 : i32
    %c0_80 = arith.constant 0 : index
    %c0_81 = arith.constant 0 : index
    %c0_82 = arith.constant 0 : index
    %295 = vector.load %arg12[%c0_80, %c0_81, %c0_82] : memref<2x8x32xf32, #tpu.memory_space<vmem>>, vector<1x8x32xf32>
    %296 = vector.shape_cast %295 : vector<1x8x32xf32> to vector<8x32xf32>
    %297 = vector.shape_cast %290 : vector<8x32xf32> to vector<1x8x32xf32>
    tpu.vector_store %arg12[%c0_80, %c0_81, %c0_82], %297 {strides = array<i32>} : memref<2x8x32xf32, #tpu.memory_space<vmem>>, vector<1x8x32xf32>,
    %c0_83 = arith.constant 0 : index
    %c0_84 = arith.constant 0 : index
    %c0_85 = arith.constant 0 : index
    %298 = vector.load %arg14[%c0_83, %c0_84, %c0_85] : memref<8x8x32xf32, #tpu.memory_space<vmem>>, vector<8x8x32xf32>
    %299 = vector.shape_cast %298 : vector<8x8x32xf32> to vector<64x32xf32>
    %c0_86 = arith.constant 0 : index
    %c0_87 = arith.constant 0 : index
    %300 = vector.load %arg7[%c0_86, %c0_87] : memref<32x96xf32, #tpu.memory_space<vmem>>, vector<32x96xf32>
    %c0_88 = arith.constant 0 : index
    %c0_89 = arith.constant 0 : index
    %301 = vector.load %arg8[%c0_88, %c0_89] : memref<32x96xf32, #tpu.memory_space<vmem>>, vector<32x96xf32>
    %cst_90 = arith.constant dense<0.000000e+00> : vector<64x96xf32>
    %302 = tpu.matmul %299, %300, %cst_90 {dimension_numbers = #tpu.dot_dimension_numbers<[1], [0], [0], [1], [0, 0, 1, 1], [], []>} : vector<64x32xf32>, vector<32x96xf32>, vector<64x96xf32> -> vector<64x96xf32>
    %c0_91 = arith.constant 0 : index
    %c0_92 = arith.constant 0 : index
    %303 = vector.load %arg9[%c0_91, %c0_92] : memref<1x96xf32, #tpu.memory_space<vmem>>, vector<1x96xf32>
    %304 = vector.broadcast %303 : vector<1x96xf32> to vector<64x96xf32>
    %305 = arith.addf %302, %304 : vector<64x96xf32>
    %306 = vector.shape_cast %305 : vector<64x96xf32> to vector<8x8x96xf32>
    %c0_93 = arith.constant 0 : index
    %c0_94 = arith.constant 0 : index
    %c0_95 = arith.constant 0 : index
    %307 = vector.load %arg13[%c0_93, %c0_94, %c0_95] : memref<8x8x96xf32, #tpu.memory_space<vmem>>, vector<8x8x96xf32>
    tpu.vector_store %arg13[%c0_93, %c0_94, %c0_95], %306 {strides = array<i32>} : memref<8x8x96xf32, #tpu.memory_space<vmem>>, vector<8x8x96xf32>,
    %c0_96 = arith.constant 0 : index
    %c0_97 = arith.constant 0 : index
    %308 = vector.load %arg10[%c0_96, %c0_97] : memref<1x96xf32, #tpu.memory_space<vmem>>, vector<1x96xf32>
    %309 = vector.shape_cast %308 : vector<1x96xf32> to vector<1x96xf32>
    %310 = vector.broadcast %309 : vector<1x96xf32> to vector<8x96xf32>
    %c1 = arith.constant 1 : index
    %c0_98 = arith.constant 0 : index
    %c0_99 = arith.constant 0 : index
    %311 = vector.load %arg2[%c1, %c0_98, %c0_99] : memref<2x8x32xf32, #tpu.memory_space<vmem>>, vector<1x8x32xf32>
    %312 = vector.shape_cast %311 : vector<1x8x32xf32> to vector<8x32xf32>
    %c0_i32_100 = arith.constant 0 : i32
    %cst_101 = arith.constant dense<0.000000e+00> : vector<8x96xf32>
    %313 = tpu.matmul %312, %301, %cst_101 {dimension_numbers = #tpu.dot_dimension_numbers<[1], [0], [0], [1], [0, 0, 1, 1], [], []>} : vector<8x32xf32>, vector<32x96xf32>, vector<8x96xf32> -> vector<8x96xf32>
    %314 = arith.addf %313, %310 : vector<8x96xf32>
    %315 = arith.index_cast %c0_i32_100 : i32 to index
    %c0_102 = arith.constant 0 : index
    %c0_103 = arith.constant 0 : index
    %316 = vector.load %arg13[%315, %c0_102, %c0_103] : memref<8x8x96xf32, #tpu.memory_space<vmem>>, vector<1x8x96xf32>
    %317 = vector.shape_cast %316 : vector<1x8x96xf32> to vector<8x96xf32>
    %318 = vector.extract_strided_slice %317 {offsets = [0, 0], sizes = [8, 32], strides = [1, 1]} : vector<8x96xf32> to vector<8x32xf32>
    %319 = vector.extract_strided_slice %314 {offsets = [0, 0], sizes = [8, 32], strides = [1, 1]} : vector<8x96xf32> to vector<8x32xf32>
    %320 = arith.addf %318, %319 : vector<8x32xf32>
    %321 = arith.negf %320 : vector<8x32xf32>
    %322 = math.exp %321 : vector<8x32xf32>
    %cst_104 = arith.constant 1.000000e+00 : f32
    %323 = vector.broadcast %cst_104 : f32 to vector<8x32xf32>
    %324 = arith.addf %323, %322 : vector<8x32xf32>
    %325 = arith.divf %323, %324 : vector<8x32xf32>
    %326 = vector.extract_strided_slice %317 {offsets = [0, 32], sizes = [8, 32], strides = [1, 1]} : vector<8x96xf32> to vector<8x32xf32>
    %327 = vector.extract_strided_slice %314 {offsets = [0, 32], sizes = [8, 32], strides = [1, 1]} : vector<8x96xf32> to vector<8x32xf32>
    %328 = arith.addf %326, %327 : vector<8x32xf32>
    %329 = arith.negf %328 : vector<8x32xf32>
    %330 = math.exp %329 : vector<8x32xf32>
    %cst_105 = arith.constant 1.000000e+00 : f32
    %331 = vector.broadcast %cst_105 : f32 to vector<8x32xf32>
    %332 = arith.addf %331, %330 : vector<8x32xf32>
    %333 = arith.divf %331, %332 : vector<8x32xf32>
    %334 = vector.extract_strided_slice %317 {offsets = [0, 64], sizes = [8, 32], strides = [1, 1]} : vector<8x96xf32> to vector<8x32xf32>
    %335 = vector.extract_strided_slice %314 {offsets = [0, 64], sizes = [8, 32], strides = [1, 1]} : vector<8x96xf32> to vector<8x32xf32>
    %336 = arith.mulf %325, %335 : vector<8x32xf32>
    %337 = arith.addf %334, %336 : vector<8x32xf32>
    %338 = math.tanh %337 : vector<8x32xf32>
    %cst_106 = arith.constant 1.000000e+00 : f32
    %339 = vector.broadcast %cst_106 : f32 to vector<8x32xf32>
    %340 = arith.subf %339, %333 : vector<8x32xf32>
    %341 = arith.mulf %340, %338 : vector<8x32xf32>
    %342 = arith.mulf %333, %312 : vector<8x32xf32>
    %343 = arith.addf %341, %342 : vector<8x32xf32>
    %344 = arith.index_cast %c0_i32_100 : i32 to index
    %c0_107 = arith.constant 0 : index
    %c0_108 = arith.constant 0 : index
    %345 = vector.load %arg11[%344, %c0_107, %c0_108] : memref<8x8x32xf32, #tpu.memory_space<vmem>>, vector<1x8x32xf32>
    %346 = vector.shape_cast %345 : vector<1x8x32xf32> to vector<8x32xf32>
    %347 = vector.shape_cast %343 : vector<8x32xf32> to vector<1x8x32xf32>
    tpu.vector_store %arg11[%344, %c0_107, %c0_108], %347 {strides = array<i32>} : memref<8x8x32xf32, #tpu.memory_space<vmem>>, vector<1x8x32xf32>,
    %c1_i32_109 = arith.constant 1 : i32
    %cst_110 = arith.constant dense<0.000000e+00> : vector<8x96xf32>
    %348 = tpu.matmul %343, %301, %cst_110 {dimension_numbers = #tpu.dot_dimension_numbers<[1], [0], [0], [1], [0, 0, 1, 1], [], []>} : vector<8x32xf32>, vector<32x96xf32>, vector<8x96xf32> -> vector<8x96xf32>
    %349 = arith.addf %348, %310 : vector<8x96xf32>
    %350 = arith.index_cast %c1_i32_109 : i32 to index
    %c0_111 = arith.constant 0 : index
    %c0_112 = arith.constant 0 : index
    %351 = vector.load %arg13[%350, %c0_111, %c0_112] : memref<8x8x96xf32, #tpu.memory_space<vmem>>, vector<1x8x96xf32>
    %352 = vector.shape_cast %351 : vector<1x8x96xf32> to vector<8x96xf32>
    %353 = vector.extract_strided_slice %352 {offsets = [0, 0], sizes = [8, 32], strides = [1, 1]} : vector<8x96xf32> to vector<8x32xf32>
    %354 = vector.extract_strided_slice %349 {offsets = [0, 0], sizes = [8, 32], strides = [1, 1]} : vector<8x96xf32> to vector<8x32xf32>
    %355 = arith.addf %353, %354 : vector<8x32xf32>
    %356 = arith.negf %355 : vector<8x32xf32>
    %357 = math.exp %356 : vector<8x32xf32>
    %cst_113 = arith.constant 1.000000e+00 : f32
    %358 = vector.broadcast %cst_113 : f32 to vector<8x32xf32>
    %359 = arith.addf %358, %357 : vector<8x32xf32>
    %360 = arith.divf %358, %359 : vector<8x32xf32>
    %361 = vector.extract_strided_slice %352 {offsets = [0, 32], sizes = [8, 32], strides = [1, 1]} : vector<8x96xf32> to vector<8x32xf32>
    %362 = vector.extract_strided_slice %349 {offsets = [0, 32], sizes = [8, 32], strides = [1, 1]} : vector<8x96xf32> to vector<8x32xf32>
    %363 = arith.addf %361, %362 : vector<8x32xf32>
    %364 = arith.negf %363 : vector<8x32xf32>
    %365 = math.exp %364 : vector<8x32xf32>
    %cst_114 = arith.constant 1.000000e+00 : f32
    %366 = vector.broadcast %cst_114 : f32 to vector<8x32xf32>
    %367 = arith.addf %366, %365 : vector<8x32xf32>
    %368 = arith.divf %366, %367 : vector<8x32xf32>
    %369 = vector.extract_strided_slice %352 {offsets = [0, 64], sizes = [8, 32], strides = [1, 1]} : vector<8x96xf32> to vector<8x32xf32>
    %370 = vector.extract_strided_slice %349 {offsets = [0, 64], sizes = [8, 32], strides = [1, 1]} : vector<8x96xf32> to vector<8x32xf32>
    %371 = arith.mulf %360, %370 : vector<8x32xf32>
    %372 = arith.addf %369, %371 : vector<8x32xf32>
    %373 = math.tanh %372 : vector<8x32xf32>
    %cst_115 = arith.constant 1.000000e+00 : f32
    %374 = vector.broadcast %cst_115 : f32 to vector<8x32xf32>
    %375 = arith.subf %374, %368 : vector<8x32xf32>
    %376 = arith.mulf %375, %373 : vector<8x32xf32>
    %377 = arith.mulf %368, %343 : vector<8x32xf32>
    %378 = arith.addf %376, %377 : vector<8x32xf32>
    %379 = arith.index_cast %c1_i32_109 : i32 to index
    %c0_116 = arith.constant 0 : index
    %c0_117 = arith.constant 0 : index
    %380 = vector.load %arg11[%379, %c0_116, %c0_117] : memref<8x8x32xf32, #tpu.memory_space<vmem>>, vector<1x8x32xf32>
    %381 = vector.shape_cast %380 : vector<1x8x32xf32> to vector<8x32xf32>
    %382 = vector.shape_cast %378 : vector<8x32xf32> to vector<1x8x32xf32>
    tpu.vector_store %arg11[%379, %c0_116, %c0_117], %382 {strides = array<i32>} : memref<8x8x32xf32, #tpu.memory_space<vmem>>, vector<1x8x32xf32>,
    %c2_i32_118 = arith.constant 2 : i32
    %cst_119 = arith.constant dense<0.000000e+00> : vector<8x96xf32>
    %383 = tpu.matmul %378, %301, %cst_119 {dimension_numbers = #tpu.dot_dimension_numbers<[1], [0], [0], [1], [0, 0, 1, 1], [], []>} : vector<8x32xf32>, vector<32x96xf32>, vector<8x96xf32> -> vector<8x96xf32>
    %384 = arith.addf %383, %310 : vector<8x96xf32>
    %385 = arith.index_cast %c2_i32_118 : i32 to index
    %c0_120 = arith.constant 0 : index
    %c0_121 = arith.constant 0 : index
    %386 = vector.load %arg13[%385, %c0_120, %c0_121] : memref<8x8x96xf32, #tpu.memory_space<vmem>>, vector<1x8x96xf32>
    %387 = vector.shape_cast %386 : vector<1x8x96xf32> to vector<8x96xf32>
    %388 = vector.extract_strided_slice %387 {offsets = [0, 0], sizes = [8, 32], strides = [1, 1]} : vector<8x96xf32> to vector<8x32xf32>
    %389 = vector.extract_strided_slice %384 {offsets = [0, 0], sizes = [8, 32], strides = [1, 1]} : vector<8x96xf32> to vector<8x32xf32>
    %390 = arith.addf %388, %389 : vector<8x32xf32>
    %391 = arith.negf %390 : vector<8x32xf32>
    %392 = math.exp %391 : vector<8x32xf32>
    %cst_122 = arith.constant 1.000000e+00 : f32
    %393 = vector.broadcast %cst_122 : f32 to vector<8x32xf32>
    %394 = arith.addf %393, %392 : vector<8x32xf32>
    %395 = arith.divf %393, %394 : vector<8x32xf32>
    %396 = vector.extract_strided_slice %387 {offsets = [0, 32], sizes = [8, 32], strides = [1, 1]} : vector<8x96xf32> to vector<8x32xf32>
    %397 = vector.extract_strided_slice %384 {offsets = [0, 32], sizes = [8, 32], strides = [1, 1]} : vector<8x96xf32> to vector<8x32xf32>
    %398 = arith.addf %396, %397 : vector<8x32xf32>
    %399 = arith.negf %398 : vector<8x32xf32>
    %400 = math.exp %399 : vector<8x32xf32>
    %cst_123 = arith.constant 1.000000e+00 : f32
    %401 = vector.broadcast %cst_123 : f32 to vector<8x32xf32>
    %402 = arith.addf %401, %400 : vector<8x32xf32>
    %403 = arith.divf %401, %402 : vector<8x32xf32>
    %404 = vector.extract_strided_slice %387 {offsets = [0, 64], sizes = [8, 32], strides = [1, 1]} : vector<8x96xf32> to vector<8x32xf32>
    %405 = vector.extract_strided_slice %384 {offsets = [0, 64], sizes = [8, 32], strides = [1, 1]} : vector<8x96xf32> to vector<8x32xf32>
    %406 = arith.mulf %395, %405 : vector<8x32xf32>
    %407 = arith.addf %404, %406 : vector<8x32xf32>
    %408 = math.tanh %407 : vector<8x32xf32>
    %cst_124 = arith.constant 1.000000e+00 : f32
    %409 = vector.broadcast %cst_124 : f32 to vector<8x32xf32>
    %410 = arith.subf %409, %403 : vector<8x32xf32>
    %411 = arith.mulf %410, %408 : vector<8x32xf32>
    %412 = arith.mulf %403, %378 : vector<8x32xf32>
    %413 = arith.addf %411, %412 : vector<8x32xf32>
    %414 = arith.index_cast %c2_i32_118 : i32 to index
    %c0_125 = arith.constant 0 : index
    %c0_126 = arith.constant 0 : index
    %415 = vector.load %arg11[%414, %c0_125, %c0_126] : memref<8x8x32xf32, #tpu.memory_space<vmem>>, vector<1x8x32xf32>
    %416 = vector.shape_cast %415 : vector<1x8x32xf32> to vector<8x32xf32>
    %417 = vector.shape_cast %413 : vector<8x32xf32> to vector<1x8x32xf32>
    tpu.vector_store %arg11[%414, %c0_125, %c0_126], %417 {strides = array<i32>} : memref<8x8x32xf32, #tpu.memory_space<vmem>>, vector<1x8x32xf32>,
    %c3_i32_127 = arith.constant 3 : i32
    %cst_128 = arith.constant dense<0.000000e+00> : vector<8x96xf32>
    %418 = tpu.matmul %413, %301, %cst_128 {dimension_numbers = #tpu.dot_dimension_numbers<[1], [0], [0], [1], [0, 0, 1, 1], [], []>} : vector<8x32xf32>, vector<32x96xf32>, vector<8x96xf32> -> vector<8x96xf32>
    %419 = arith.addf %418, %310 : vector<8x96xf32>
    %420 = arith.index_cast %c3_i32_127 : i32 to index
    %c0_129 = arith.constant 0 : index
    %c0_130 = arith.constant 0 : index
    %421 = vector.load %arg13[%420, %c0_129, %c0_130] : memref<8x8x96xf32, #tpu.memory_space<vmem>>, vector<1x8x96xf32>
    %422 = vector.shape_cast %421 : vector<1x8x96xf32> to vector<8x96xf32>
    %423 = vector.extract_strided_slice %422 {offsets = [0, 0], sizes = [8, 32], strides = [1, 1]} : vector<8x96xf32> to vector<8x32xf32>
    %424 = vector.extract_strided_slice %419 {offsets = [0, 0], sizes = [8, 32], strides = [1, 1]} : vector<8x96xf32> to vector<8x32xf32>
    %425 = arith.addf %423, %424 : vector<8x32xf32>
    %426 = arith.negf %425 : vector<8x32xf32>
    %427 = math.exp %426 : vector<8x32xf32>
    %cst_131 = arith.constant 1.000000e+00 : f32
    %428 = vector.broadcast %cst_131 : f32 to vector<8x32xf32>
    %429 = arith.addf %428, %427 : vector<8x32xf32>
    %430 = arith.divf %428, %429 : vector<8x32xf32>
    %431 = vector.extract_strided_slice %422 {offsets = [0, 32], sizes = [8, 32], strides = [1, 1]} : vector<8x96xf32> to vector<8x32xf32>
    %432 = vector.extract_strided_slice %419 {offsets = [0, 32], sizes = [8, 32], strides = [1, 1]} : vector<8x96xf32> to vector<8x32xf32>
    %433 = arith.addf %431, %432 : vector<8x32xf32>
    %434 = arith.negf %433 : vector<8x32xf32>
    %435 = math.exp %434 : vector<8x32xf32>
    %cst_132 = arith.constant 1.000000e+00 : f32
    %436 = vector.broadcast %cst_132 : f32 to vector<8x32xf32>
    %437 = arith.addf %436, %435 : vector<8x32xf32>
    %438 = arith.divf %436, %437 : vector<8x32xf32>
    %439 = vector.extract_strided_slice %422 {offsets = [0, 64], sizes = [8, 32], strides = [1, 1]} : vector<8x96xf32> to vector<8x32xf32>
    %440 = vector.extract_strided_slice %419 {offsets = [0, 64], sizes = [8, 32], strides = [1, 1]} : vector<8x96xf32> to vector<8x32xf32>
    %441 = arith.mulf %430, %440 : vector<8x32xf32>
    %442 = arith.addf %439, %441 : vector<8x32xf32>
    %443 = math.tanh %442 : vector<8x32xf32>
    %cst_133 = arith.constant 1.000000e+00 : f32
    %444 = vector.broadcast %cst_133 : f32 to vector<8x32xf32>
    %445 = arith.subf %444, %438 : vector<8x32xf32>
    %446 = arith.mulf %445, %443 : vector<8x32xf32>
    %447 = arith.mulf %438, %413 : vector<8x32xf32>
    %448 = arith.addf %446, %447 : vector<8x32xf32>
    %449 = arith.index_cast %c3_i32_127 : i32 to index
    %c0_134 = arith.constant 0 : index
    %c0_135 = arith.constant 0 : index
    %450 = vector.load %arg11[%449, %c0_134, %c0_135] : memref<8x8x32xf32, #tpu.memory_space<vmem>>, vector<1x8x32xf32>
    %451 = vector.shape_cast %450 : vector<1x8x32xf32> to vector<8x32xf32>
    %452 = vector.shape_cast %448 : vector<8x32xf32> to vector<1x8x32xf32>
    tpu.vector_store %arg11[%449, %c0_134, %c0_135], %452 {strides = array<i32>} : memref<8x8x32xf32, #tpu.memory_space<vmem>>, vector<1x8x32xf32>,
    %c4_i32_136 = arith.constant 4 : i32
    %cst_137 = arith.constant dense<0.000000e+00> : vector<8x96xf32>
    %453 = tpu.matmul %448, %301, %cst_137 {dimension_numbers = #tpu.dot_dimension_numbers<[1], [0], [0], [1], [0, 0, 1, 1], [], []>} : vector<8x32xf32>, vector<32x96xf32>, vector<8x96xf32> -> vector<8x96xf32>
    %454 = arith.addf %453, %310 : vector<8x96xf32>
    %455 = arith.index_cast %c4_i32_136 : i32 to index
    %c0_138 = arith.constant 0 : index
    %c0_139 = arith.constant 0 : index
    %456 = vector.load %arg13[%455, %c0_138, %c0_139] : memref<8x8x96xf32, #tpu.memory_space<vmem>>, vector<1x8x96xf32>
    %457 = vector.shape_cast %456 : vector<1x8x96xf32> to vector<8x96xf32>
    %458 = vector.extract_strided_slice %457 {offsets = [0, 0], sizes = [8, 32], strides = [1, 1]} : vector<8x96xf32> to vector<8x32xf32>
    %459 = vector.extract_strided_slice %454 {offsets = [0, 0], sizes = [8, 32], strides = [1, 1]} : vector<8x96xf32> to vector<8x32xf32>
    %460 = arith.addf %458, %459 : vector<8x32xf32>
    %461 = arith.negf %460 : vector<8x32xf32>
    %462 = math.exp %461 : vector<8x32xf32>
    %cst_140 = arith.constant 1.000000e+00 : f32
    %463 = vector.broadcast %cst_140 : f32 to vector<8x32xf32>
    %464 = arith.addf %463, %462 : vector<8x32xf32>
    %465 = arith.divf %463, %464 : vector<8x32xf32>
    %466 = vector.extract_strided_slice %457 {offsets = [0, 32], sizes = [8, 32], strides = [1, 1]} : vector<8x96xf32> to vector<8x32xf32>
    %467 = vector.extract_strided_slice %454 {offsets = [0, 32], sizes = [8, 32], strides = [1, 1]} : vector<8x96xf32> to vector<8x32xf32>
    %468 = arith.addf %466, %467 : vector<8x32xf32>
    %469 = arith.negf %468 : vector<8x32xf32>
    %470 = math.exp %469 : vector<8x32xf32>
    %cst_141 = arith.constant 1.000000e+00 : f32
    %471 = vector.broadcast %cst_141 : f32 to vector<8x32xf32>
    %472 = arith.addf %471, %470 : vector<8x32xf32>
    %473 = arith.divf %471, %472 : vector<8x32xf32>
    %474 = vector.extract_strided_slice %457 {offsets = [0, 64], sizes = [8, 32], strides = [1, 1]} : vector<8x96xf32> to vector<8x32xf32>
    %475 = vector.extract_strided_slice %454 {offsets = [0, 64], sizes = [8, 32], strides = [1, 1]} : vector<8x96xf32> to vector<8x32xf32>
    %476 = arith.mulf %465, %475 : vector<8x32xf32>
    %477 = arith.addf %474, %476 : vector<8x32xf32>
    %478 = math.tanh %477 : vector<8x32xf32>
    %cst_142 = arith.constant 1.000000e+00 : f32
    %479 = vector.broadcast %cst_142 : f32 to vector<8x32xf32>
    %480 = arith.subf %479, %473 : vector<8x32xf32>
    %481 = arith.mulf %480, %478 : vector<8x32xf32>
    %482 = arith.mulf %473, %448 : vector<8x32xf32>
    %483 = arith.addf %481, %482 : vector<8x32xf32>
    %484 = arith.index_cast %c4_i32_136 : i32 to index
    %c0_143 = arith.constant 0 : index
    %c0_144 = arith.constant 0 : index
    %485 = vector.load %arg11[%484, %c0_143, %c0_144] : memref<8x8x32xf32, #tpu.memory_space<vmem>>, vector<1x8x32xf32>
    %486 = vector.shape_cast %485 : vector<1x8x32xf32> to vector<8x32xf32>
    %487 = vector.shape_cast %483 : vector<8x32xf32> to vector<1x8x32xf32>
    tpu.vector_store %arg11[%484, %c0_143, %c0_144], %487 {strides = array<i32>} : memref<8x8x32xf32, #tpu.memory_space<vmem>>, vector<1x8x32xf32>,
    %c5_i32_145 = arith.constant 5 : i32
    %cst_146 = arith.constant dense<0.000000e+00> : vector<8x96xf32>
    %488 = tpu.matmul %483, %301, %cst_146 {dimension_numbers = #tpu.dot_dimension_numbers<[1], [0], [0], [1], [0, 0, 1, 1], [], []>} : vector<8x32xf32>, vector<32x96xf32>, vector<8x96xf32> -> vector<8x96xf32>
    %489 = arith.addf %488, %310 : vector<8x96xf32>
    %490 = arith.index_cast %c5_i32_145 : i32 to index
    %c0_147 = arith.constant 0 : index
    %c0_148 = arith.constant 0 : index
    %491 = vector.load %arg13[%490, %c0_147, %c0_148] : memref<8x8x96xf32, #tpu.memory_space<vmem>>, vector<1x8x96xf32>
    %492 = vector.shape_cast %491 : vector<1x8x96xf32> to vector<8x96xf32>
    %493 = vector.extract_strided_slice %492 {offsets = [0, 0], sizes = [8, 32], strides = [1, 1]} : vector<8x96xf32> to vector<8x32xf32>
    %494 = vector.extract_strided_slice %489 {offsets = [0, 0], sizes = [8, 32], strides = [1, 1]} : vector<8x96xf32> to vector<8x32xf32>
    %495 = arith.addf %493, %494 : vector<8x32xf32>
    %496 = arith.negf %495 : vector<8x32xf32>
    %497 = math.exp %496 : vector<8x32xf32>
    %cst_149 = arith.constant 1.000000e+00 : f32
    %498 = vector.broadcast %cst_149 : f32 to vector<8x32xf32>
    %499 = arith.addf %498, %497 : vector<8x32xf32>
    %500 = arith.divf %498, %499 : vector<8x32xf32>
    %501 = vector.extract_strided_slice %492 {offsets = [0, 32], sizes = [8, 32], strides = [1, 1]} : vector<8x96xf32> to vector<8x32xf32>
    %502 = vector.extract_strided_slice %489 {offsets = [0, 32], sizes = [8, 32], strides = [1, 1]} : vector<8x96xf32> to vector<8x32xf32>
    %503 = arith.addf %501, %502 : vector<8x32xf32>
    %504 = arith.negf %503 : vector<8x32xf32>
    %505 = math.exp %504 : vector<8x32xf32>
    %cst_150 = arith.constant 1.000000e+00 : f32
    %506 = vector.broadcast %cst_150 : f32 to vector<8x32xf32>
    %507 = arith.addf %506, %505 : vector<8x32xf32>
    %508 = arith.divf %506, %507 : vector<8x32xf32>
    %509 = vector.extract_strided_slice %492 {offsets = [0, 64], sizes = [8, 32], strides = [1, 1]} : vector<8x96xf32> to vector<8x32xf32>
    %510 = vector.extract_strided_slice %489 {offsets = [0, 64], sizes = [8, 32], strides = [1, 1]} : vector<8x96xf32> to vector<8x32xf32>
    %511 = arith.mulf %500, %510 : vector<8x32xf32>
    %512 = arith.addf %509, %511 : vector<8x32xf32>
    %513 = math.tanh %512 : vector<8x32xf32>
    %cst_151 = arith.constant 1.000000e+00 : f32
    %514 = vector.broadcast %cst_151 : f32 to vector<8x32xf32>
    %515 = arith.subf %514, %508 : vector<8x32xf32>
    %516 = arith.mulf %515, %513 : vector<8x32xf32>
    %517 = arith.mulf %508, %483 : vector<8x32xf32>
    %518 = arith.addf %516, %517 : vector<8x32xf32>
    %519 = arith.index_cast %c5_i32_145 : i32 to index
    %c0_152 = arith.constant 0 : index
    %c0_153 = arith.constant 0 : index
    %520 = vector.load %arg11[%519, %c0_152, %c0_153] : memref<8x8x32xf32, #tpu.memory_space<vmem>>, vector<1x8x32xf32>
    %521 = vector.shape_cast %520 : vector<1x8x32xf32> to vector<8x32xf32>
    %522 = vector.shape_cast %518 : vector<8x32xf32> to vector<1x8x32xf32>
    tpu.vector_store %arg11[%519, %c0_152, %c0_153], %522 {strides = array<i32>} : memref<8x8x32xf32, #tpu.memory_space<vmem>>, vector<1x8x32xf32>,
    %c6_i32_154 = arith.constant 6 : i32
    %cst_155 = arith.constant dense<0.000000e+00> : vector<8x96xf32>
    %523 = tpu.matmul %518, %301, %cst_155 {dimension_numbers = #tpu.dot_dimension_numbers<[1], [0], [0], [1], [0, 0, 1, 1], [], []>} : vector<8x32xf32>, vector<32x96xf32>, vector<8x96xf32> -> vector<8x96xf32>
    %524 = arith.addf %523, %310 : vector<8x96xf32>
    %525 = arith.index_cast %c6_i32_154 : i32 to index
    %c0_156 = arith.constant 0 : index
    %c0_157 = arith.constant 0 : index
    %526 = vector.load %arg13[%525, %c0_156, %c0_157] : memref<8x8x96xf32, #tpu.memory_space<vmem>>, vector<1x8x96xf32>
    %527 = vector.shape_cast %526 : vector<1x8x96xf32> to vector<8x96xf32>
    %528 = vector.extract_strided_slice %527 {offsets = [0, 0], sizes = [8, 32], strides = [1, 1]} : vector<8x96xf32> to vector<8x32xf32>
    %529 = vector.extract_strided_slice %524 {offsets = [0, 0], sizes = [8, 32], strides = [1, 1]} : vector<8x96xf32> to vector<8x32xf32>
    %530 = arith.addf %528, %529 : vector<8x32xf32>
    %531 = arith.negf %530 : vector<8x32xf32>
    %532 = math.exp %531 : vector<8x32xf32>
    %cst_158 = arith.constant 1.000000e+00 : f32
    %533 = vector.broadcast %cst_158 : f32 to vector<8x32xf32>
    %534 = arith.addf %533, %532 : vector<8x32xf32>
    %535 = arith.divf %533, %534 : vector<8x32xf32>
    %536 = vector.extract_strided_slice %527 {offsets = [0, 32], sizes = [8, 32], strides = [1, 1]} : vector<8x96xf32> to vector<8x32xf32>
    %537 = vector.extract_strided_slice %524 {offsets = [0, 32], sizes = [8, 32], strides = [1, 1]} : vector<8x96xf32> to vector<8x32xf32>
    %538 = arith.addf %536, %537 : vector<8x32xf32>
    %539 = arith.negf %538 : vector<8x32xf32>
    %540 = math.exp %539 : vector<8x32xf32>
    %cst_159 = arith.constant 1.000000e+00 : f32
    %541 = vector.broadcast %cst_159 : f32 to vector<8x32xf32>
    %542 = arith.addf %541, %540 : vector<8x32xf32>
    %543 = arith.divf %541, %542 : vector<8x32xf32>
    %544 = vector.extract_strided_slice %527 {offsets = [0, 64], sizes = [8, 32], strides = [1, 1]} : vector<8x96xf32> to vector<8x32xf32>
    %545 = vector.extract_strided_slice %524 {offsets = [0, 64], sizes = [8, 32], strides = [1, 1]} : vector<8x96xf32> to vector<8x32xf32>
    %546 = arith.mulf %535, %545 : vector<8x32xf32>
    %547 = arith.addf %544, %546 : vector<8x32xf32>
    %548 = math.tanh %547 : vector<8x32xf32>
    %cst_160 = arith.constant 1.000000e+00 : f32
    %549 = vector.broadcast %cst_160 : f32 to vector<8x32xf32>
    %550 = arith.subf %549, %543 : vector<8x32xf32>
    %551 = arith.mulf %550, %548 : vector<8x32xf32>
    %552 = arith.mulf %543, %518 : vector<8x32xf32>
    %553 = arith.addf %551, %552 : vector<8x32xf32>
    %554 = arith.index_cast %c6_i32_154 : i32 to index
    %c0_161 = arith.constant 0 : index
    %c0_162 = arith.constant 0 : index
    %555 = vector.load %arg11[%554, %c0_161, %c0_162] : memref<8x8x32xf32, #tpu.memory_space<vmem>>, vector<1x8x32xf32>
    %556 = vector.shape_cast %555 : vector<1x8x32xf32> to vector<8x32xf32>
    %557 = vector.shape_cast %553 : vector<8x32xf32> to vector<1x8x32xf32>
    tpu.vector_store %arg11[%554, %c0_161, %c0_162], %557 {strides = array<i32>} : memref<8x8x32xf32, #tpu.memory_space<vmem>>, vector<1x8x32xf32>,
    %c7_i32_163 = arith.constant 7 : i32
    %cst_164 = arith.constant dense<0.000000e+00> : vector<8x96xf32>
    %558 = tpu.matmul %553, %301, %cst_164 {dimension_numbers = #tpu.dot_dimension_numbers<[1], [0], [0], [1], [0, 0, 1, 1], [], []>} : vector<8x32xf32>, vector<32x96xf32>, vector<8x96xf32> -> vector<8x96xf32>
    %559 = arith.addf %558, %310 : vector<8x96xf32>
    %560 = arith.index_cast %c7_i32_163 : i32 to index
    %c0_165 = arith.constant 0 : index
    %c0_166 = arith.constant 0 : index
    %561 = vector.load %arg13[%560, %c0_165, %c0_166] : memref<8x8x96xf32, #tpu.memory_space<vmem>>, vector<1x8x96xf32>
    %562 = vector.shape_cast %561 : vector<1x8x96xf32> to vector<8x96xf32>
    %563 = vector.extract_strided_slice %562 {offsets = [0, 0], sizes = [8, 32], strides = [1, 1]} : vector<8x96xf32> to vector<8x32xf32>
    %564 = vector.extract_strided_slice %559 {offsets = [0, 0], sizes = [8, 32], strides = [1, 1]} : vector<8x96xf32> to vector<8x32xf32>
    %565 = arith.addf %563, %564 : vector<8x32xf32>
    %566 = arith.negf %565 : vector<8x32xf32>
    %567 = math.exp %566 : vector<8x32xf32>
    %cst_167 = arith.constant 1.000000e+00 : f32
    %568 = vector.broadcast %cst_167 : f32 to vector<8x32xf32>
    %569 = arith.addf %568, %567 : vector<8x32xf32>
    %570 = arith.divf %568, %569 : vector<8x32xf32>
    %571 = vector.extract_strided_slice %562 {offsets = [0, 32], sizes = [8, 32], strides = [1, 1]} : vector<8x96xf32> to vector<8x32xf32>
    %572 = vector.extract_strided_slice %559 {offsets = [0, 32], sizes = [8, 32], strides = [1, 1]} : vector<8x96xf32> to vector<8x32xf32>
    %573 = arith.addf %571, %572 : vector<8x32xf32>
    %574 = arith.negf %573 : vector<8x32xf32>
    %575 = math.exp %574 : vector<8x32xf32>
    %cst_168 = arith.constant 1.000000e+00 : f32
    %576 = vector.broadcast %cst_168 : f32 to vector<8x32xf32>
    %577 = arith.addf %576, %575 : vector<8x32xf32>
    %578 = arith.divf %576, %577 : vector<8x32xf32>
    %579 = vector.extract_strided_slice %562 {offsets = [0, 64], sizes = [8, 32], strides = [1, 1]} : vector<8x96xf32> to vector<8x32xf32>
    %580 = vector.extract_strided_slice %559 {offsets = [0, 64], sizes = [8, 32], strides = [1, 1]} : vector<8x96xf32> to vector<8x32xf32>
    %581 = arith.mulf %570, %580 : vector<8x32xf32>
    %582 = arith.addf %579, %581 : vector<8x32xf32>
    %583 = math.tanh %582 : vector<8x32xf32>
    %cst_169 = arith.constant 1.000000e+00 : f32
    %584 = vector.broadcast %cst_169 : f32 to vector<8x32xf32>
    %585 = arith.subf %584, %578 : vector<8x32xf32>
    %586 = arith.mulf %585, %583 : vector<8x32xf32>
    %587 = arith.mulf %578, %553 : vector<8x32xf32>
    %588 = arith.addf %586, %587 : vector<8x32xf32>
    %589 = arith.index_cast %c7_i32_163 : i32 to index
    %c0_170 = arith.constant 0 : index
    %c0_171 = arith.constant 0 : index
    %590 = vector.load %arg11[%589, %c0_170, %c0_171] : memref<8x8x32xf32, #tpu.memory_space<vmem>>, vector<1x8x32xf32>
    %591 = vector.shape_cast %590 : vector<1x8x32xf32> to vector<8x32xf32>
    %592 = vector.shape_cast %588 : vector<8x32xf32> to vector<1x8x32xf32>
    tpu.vector_store %arg11[%589, %c0_170, %c0_171], %592 {strides = array<i32>} : memref<8x8x32xf32, #tpu.memory_space<vmem>>, vector<1x8x32xf32>,
    %c8_i32_172 = arith.constant 8 : i32
    %c1_173 = arith.constant 1 : index
    %c0_174 = arith.constant 0 : index
    %c0_175 = arith.constant 0 : index
    %593 = vector.load %arg12[%c1_173, %c0_174, %c0_175] : memref<2x8x32xf32, #tpu.memory_space<vmem>>, vector<1x8x32xf32>
    %594 = vector.shape_cast %593 : vector<1x8x32xf32> to vector<8x32xf32>
    %595 = vector.shape_cast %588 : vector<8x32xf32> to vector<1x8x32xf32>
    tpu.vector_store %arg12[%c1_173, %c0_174, %c0_175], %595 {strides = array<i32>} : memref<2x8x32xf32, #tpu.memory_space<vmem>>, vector<1x8x32xf32>,
    return
  }
  func.func @transform_0(%arg0: i32) -> (i32, i32, i32) {
    %c0_i32 = arith.constant 0 : i32
    %c0_i32_0 = arith.constant 0 : i32
    %c0_i32_1 = arith.constant 0 : i32
    return %c0_i32, %arg0, %c0_i32_0 : i32, i32, i32
  }
  func.func @transform_1(%arg0: i32) -> (i32, i32, i32) {
    %c0_i32 = arith.constant 0 : i32
    %c0_i32_0 = arith.constant 0 : i32
    %c0_i32_1 = arith.constant 0 : i32
    return %c0_i32, %arg0, %c0_i32_0 : i32, i32, i32
  }
  func.func @transform_2(%arg0: i32) -> (i32, i32) {
    %c0_i32 = arith.constant 0 : i32
    %c0_i32_0 = arith.constant 0 : i32
    %c0_i32_1 = arith.constant 0 : i32
    return %c0_i32, %c0_i32_0 : i32, i32
  }
  func.func @transform_3(%arg0: i32) -> (i32, i32) {
    %c0_i32 = arith.constant 0 : i32
    %c0_i32_0 = arith.constant 0 : i32
    %c0_i32_1 = arith.constant 0 : i32
    return %c0_i32, %c0_i32_0 : i32, i32
  }
  func.func @transform_4(%arg0: i32) -> (i32, i32) {
    %c0_i32 = arith.constant 0 : i32
    %c0_i32_0 = arith.constant 0 : i32
    %c0_i32_1 = arith.constant 0 : i32
    return %c0_i32, %c0_i32_0 : i32, i32
  }
  func.func @transform_5(%arg0: i32) -> (i32, i32) {
    %c0_i32 = arith.constant 0 : i32
    %c0_i32_0 = arith.constant 0 : i32
    %c0_i32_1 = arith.constant 0 : i32
    return %c0_i32, %c0_i32_0 : i32, i32
  }
  func.func @transform_6(%arg0: i32) -> (i32, i32) {
    %c0_i32 = arith.constant 0 : i32
    %c0_i32_0 = arith.constant 0 : i32
    %c0_i32_1 = arith.constant 0 : i32
    return %c0_i32, %c0_i32_0 : i32, i32
  }
  func.func @transform_7(%arg0: i32) -> (i32, i32) {
    %c0_i32 = arith.constant 0 : i32
    %c0_i32_0 = arith.constant 0 : i32
    %c0_i32_1 = arith.constant 0 : i32
    return %c0_i32, %c0_i32_0 : i32, i32
  }
  func.func @transform_8(%arg0: i32) -> (i32, i32) {
    %c0_i32 = arith.constant 0 : i32
    %c0_i32_0 = arith.constant 0 : i32
    %c0_i32_1 = arith.constant 0 : i32
    return %c0_i32, %c0_i32_0 : i32, i32
  }
  func.func @transform_9(%arg0: i32) -> (i32, i32) {
    %c0_i32 = arith.constant 0 : i32
    %c0_i32_0 = arith.constant 0 : i32
    %c0_i32_1 = arith.constant 0 : i32
    return %c0_i32, %c0_i32_0 : i32, i32
  }
  func.func @transform_10(%arg0: i32) -> (i32, i32, i32) {
    %c0_i32 = arith.constant 0 : i32
    %c0_i32_0 = arith.constant 0 : i32
    %c0_i32_1 = arith.constant 0 : i32
    return %c0_i32, %arg0, %c0_i32_0 : i32, i32, i32
  }
  func.func @transform_11(%arg0: i32) -> (i32, i32, i32) {
    %c0_i32 = arith.constant 0 : i32
    %c0_i32_0 = arith.constant 0 : i32
    %c0_i32_1 = arith.constant 0 : i32
    return %c0_i32, %arg0, %c0_i32_0 : i32, i32, i32
  }
}

</mosaic_0001>

<llo_original>
// kernel: tpu_custom_call.1
$region0: #{tpu_custom_call.1}
  #allocation0 [shape = 'u32[]', space=smem, size = 0x4, offset = 0x4, fixed_abs, tag = 'smem constant byte address 0x4 - core index']
  #allocation1 [shape = 'u32[144,128]{1,0:T(1,128)}', space=vmem, size = 0x12000, scoped, tag = 'internal scratch']
  #allocation2 [shape = 'f32[8,8,96]{2,1,0:T(8,128)}', space=vmem, size = 0x8000, scoped, tag = 'scratch operand']
  #allocation3 [shape = 'f32[8,8,32]{2,1,0:T(8,128)}', space=vmem, size = 0x8000, scoped, tag = 'scratch operand']
  %s0 = inlined_call_operand.hbm [shape: f32[8,8,16], index: 0, kind: input, shape index: {}]
  %s1 = inlined_call_operand.hbm [shape: f32[2,8,32], index: 1, kind: input, shape index: {}]
  %s2 = inlined_call_operand.hbm [shape: f32[16,96], index: 2, kind: input, shape index: {}]
  %s3 = inlined_call_operand.hbm [shape: f32[32,96], index: 3, kind: input, shape index: {}]
  %s4 = inlined_call_operand.vmem [shape: f32[1,96], index: 4, kind: input, shape index: {}]
  %s5 = inlined_call_operand.vmem [shape: f32[1,96], index: 5, kind: input, shape index: {}]
  %s6 = inlined_call_operand.hbm [shape: f32[32,96], index: 6, kind: input, shape index: {}]
  %s7 = inlined_call_operand.hbm [shape: f32[32,96], index: 7, kind: input, shape index: {}]
  %s8 = inlined_call_operand.vmem [shape: f32[1,96], index: 8, kind: input, shape index: {}]
  %s9 = inlined_call_operand.vmem [shape: f32[1,96], index: 9, kind: input, shape index: {}]
  %s10 = inlined_call_operand.hbm [shape: f32[8,8,32], index: 10, kind: output, shape index: {0}]
  %s11 = inlined_call_operand.hbm [shape: f32[2,8,32], index: 11, kind: output, shape index: {1}]
  %12 = xla_tuple %s10, %s11
  %s13 = sld [smem:[#allocation0]]
  $region82: #{tpu_custom_call.1} parent=0
    _
  %s15 = ssub.s32 1, %s13
  %s16 = scalar_select 0, %s15, %s13
  $region1: #{tpu_custom_call.1} parent=0
    #allocation4 [shape = 'u8[32768]{0}', space=vmem, size = 0x8000, scoped, tag = 'input window, operand 0, single buffered']
    #allocation5 [shape = 's32[1]{0}', space=sflag, size = 0x4, scoped, tag = 'scoped memory for tpu_custom_call.1']
    #allocation6 [shape = 's32[1]{0}', space=sflag, size = 0x4, scoped, tag = 'scoped memory for tpu_custom_call.1']
    #allocation7 [shape = 'u8[8192]{0}', space=vmem, size = 0x2000, scoped, tag = 'input window, operand 1, single buffered']
    #allocation8 [shape = 's32[1]{0}', space=sflag, size = 0x4, scoped, tag = 'scoped memory for tpu_custom_call.1']
    #allocation9 [shape = 'u8[8192]{0}', space=vmem, size = 0x2000, scoped, tag = 'input window, operand 2, single buffered']
    #allocation10 [shape = 'u8[16384]{0}', space=vmem, size = 0x4000, scoped, tag = 'input window, operand 3, single buffered']
    #allocation11 [shape = 's32[1]{0}', space=sflag, size = 0x4, scoped, tag = 'scoped memory for tpu_custom_call.1']
    #allocation12 [shape = 'u8[16384]{0}', space=vmem, size = 0x4000, scoped, tag = 'input window, operand 6, single buffered']
    #allocation13 [shape = 'u8[16384]{0}', space=vmem, size = 0x4000, scoped, tag = 'input window, operand 7, single buffered']
    #allocation14 [shape = 's32[1]{0}', space=sflag, size = 0x4, scoped, tag = 'scoped memory for tpu_custom_call.1']
    #allocation15 [shape = 'u8[32768]{0}', space=vmem, size = 0x8000, scoped, tag = 'output window, operand 0, single buffered']
    #allocation16 [shape = 'u8[8192]{0}', space=vmem, size = 0x2000, scoped, tag = 'output window, operand 1, single buffered']
    #allocation17 [shape = 's32[1]{0}', space=sflag, size = 0x4, scoped, tag = 'scoped memory for tpu_custom_call.1']
    %17 = vsyncpa [#allocation5], 0
    %18 = vsyncpa [#allocation8], 0
    %19 = vsyncpa [#allocation11], 0
    %20 = vsyncpa [#allocation14], 0
    %21 = vsyncpa [#allocation6], 0
    %22 = vsyncpa [#allocation17], 0
    // Predicated region
    $region2: #{tpu_custom_call.1} parent=1 // pred_check
      _
    $region3: #{tpu_custom_call.1} parent=1 // pred_check_branch
      %24 = sbr.rel (0) target = $region5
    $region4: #{tpu_custom_call.1} parent=1 // pred_region
      %s26 = ssub.s32 1024, 1024
      %27 = vsyncadd [#allocation5], %s26
      %s28 = sshll.u32 [#allocation4], 4
      %s29 = int_to_ptr.vmem [resolvable:$true] %s28
      %34 = dma.hbm_to_vmem [thread:$0]  %s0, 1024, %s29, [#allocation5], 128, 128, 8
    $region5: #{tpu_custom_call.1} parent=1 // pred_fallthru
      _
    // Predicated region
    $region6: #{tpu_custom_call.1} parent=1 // pred_check
      _
    $region7: #{tpu_custom_call.1} parent=1 // pred_check_branch
      %36 = sbr.rel (0) target = $region9
    $region8: #{tpu_custom_call.1} parent=1 // pred_region
      %s38 = ssub.s32 256, 256
      %39 = vsyncadd [#allocation8], %s38
      %s40 = sshll.u32 [#allocation7], 4
      %s41 = int_to_ptr.vmem [resolvable:$true] %s40
      %46 = dma.hbm_to_vmem [thread:$0]  %s1, 256, %s41, [#allocation8], 128, 128, 8
    $region9: #{tpu_custom_call.1} parent=1 // pred_fallthru
      _
    // Predicated region
    $region10: #{tpu_custom_call.1} parent=1 // pred_check
      _
    $region11: #{tpu_custom_call.1} parent=1 // pred_check_branch
      %48 = sbr.rel (0) target = $region13
    $region12: #{tpu_custom_call.1} parent=1 // pred_region
      %s50 = ssub.s32 256, 256
      %51 = vsyncadd [#allocation8], %s50
      %s52 = sshll.u32 [#allocation9], 4
      %s53 = int_to_ptr.vmem [resolvable:$true] %s52
      %58 = dma.hbm_to_vmem [thread:$0]  %s2, 256, %s53, [#allocation8], 128, 128, 8
    $region13: #{tpu_custom_call.1} parent=1 // pred_fallthru
      _
    // Predicated region
    $region14: #{tpu_custom_call.1} parent=1 // pred_check
      _
    $region15: #{tpu_custom_call.1} parent=1 // pred_check_branch
      %60 = sbr.rel (0) target = $region17
    $region16: #{tpu_custom_call.1} parent=1 // pred_region
      %s62 = ssub.s32 512, 512
      %63 = vsyncadd [#allocation11], %s62
      %s64 = sshll.u32 [#allocation10], 4
      %s65 = int_to_ptr.vmem [resolvable:$true] %s64
      %70 = dma.hbm_to_vmem [thread:$0]  %s3, 512, %s65, [#allocation11], 128, 128, 8
    $region17: #{tpu_custom_call.1} parent=1 // pred_fallthru
      _
    // Predicated region
    $region18: #{tpu_custom_call.1} parent=1 // pred_check
      _
    $region19: #{tpu_custom_call.1} parent=1 // pred_check_branch
      %72 = sbr.rel (0) target = $region21
    $region20: #{tpu_custom_call.1} parent=1 // pred_region
      _
    $region21: #{tpu_custom_call.1} parent=1 // pred_fallthru
      _
    // Predicated region
    $region22: #{tpu_custom_call.1} parent=1 // pred_check
      _
    $region23: #{tpu_custom_call.1} parent=1 // pred_check_branch
      %74 = sbr.rel (0) target = $region25
    $region24: #{tpu_custom_call.1} parent=1 // pred_region
      _
    $region25: #{tpu_custom_call.1} parent=1 // pred_fallthru
      _
    // Predicated region
    $region26: #{tpu_custom_call.1} parent=1 // pred_check
      _
    $region27: #{tpu_custom_call.1} parent=1 // pred_check_branch
      %76 = sbr.rel (0) target = $region29
    $region28: #{tpu_custom_call.1} parent=1 // pred_region
      %s78 = ssub.s32 512, 512
      %79 = vsyncadd [#allocation11], %s78
      %s80 = sshll.u32 [#allocation12], 4
      %s81 = int_to_ptr.vmem [resolvable:$true] %s80
      %86 = dma.hbm_to_vmem [thread:$0]  %s6, 512, %s81, [#allocation11], 128, 128, 8
    $region29: #{tpu_custom_call.1} parent=1 // pred_fallthru
      _
    // Predicated region
    $region30: #{tpu_custom_call.1} parent=1 // pred_check
      _
    $region31: #{tpu_custom_call.1} parent=1 // pred_check_branch
      %88 = sbr.rel (0) target = $region33
    $region32: #{tpu_custom_call.1} parent=1 // pred_region
      %s90 = ssub.s32 512, 512
      %91 = vsyncadd [#allocation14], %s90
      %s92 = sshll.u32 [#allocation13], 4
      %s93 = int_to_ptr.vmem [resolvable:$true] %s92
      %98 = dma.hbm_to_vmem [thread:$0]  %s7, 512, %s93, [#allocation14], 128, 128, 8
    $region33: #{tpu_custom_call.1} parent=1 // pred_fallthru
      _
    // Predicated region
    $region34: #{tpu_custom_call.1} parent=1 // pred_check
      _
    $region35: #{tpu_custom_call.1} parent=1 // pred_check_branch
      %100 = sbr.rel (0) target = $region37
    $region36: #{tpu_custom_call.1} parent=1 // pred_region
      _
    $region37: #{tpu_custom_call.1} parent=1 // pred_fallthru
      _
    // Predicated region
    $region38: #{tpu_custom_call.1} parent=1 // pred_check
      _
    $region39: #{tpu_custom_call.1} parent=1 // pred_check_branch
      %102 = sbr.rel (0) target = $region41
    $region40: #{tpu_custom_call.1} parent=1 // pred_region
      _
    $region41: #{tpu_custom_call.1} parent=1 // pred_fallthru
      _
    // Predicated region
    $region42: #{tpu_custom_call.1} parent=1 // pred_check
      _
    $region43: #{tpu_custom_call.1} parent=1 // pred_check_branch
      %104 = sbr.rel (0) target = $region45
    $region44: #{tpu_custom_call.1} parent=1 // pred_region
      %105 = dma.done [#allocation5], 1024
    $region45: #{tpu_custom_call.1} parent=1 // pred_fallthru
      _
    // Predicated region
    $region46: #{tpu_custom_call.1} parent=1 // pred_check
      _
    $region47: #{tpu_custom_call.1} parent=1 // pred_check_branch
      %107 = sbr.rel (0) target = $region49
    $region48: #{tpu_custom_call.1} parent=1 // pred_region
      %108 = dma.done [#allocation8], 256
    $region49: #{tpu_custom_call.1} parent=1 // pred_fallthru
      _
    // Predicated region
    $region50: #{tpu_custom_call.1} parent=1 // pred_check
      _
    $region51: #{tpu_custom_call.1} parent=1 // pred_check_branch
      %110 = sbr.rel (0) target = $region53
    $region52: #{tpu_custom_call.1} parent=1 // pred_region
      %111 = dma.done [#allocation8], 256
    $region53: #{tpu_custom_call.1} parent=1 // pred_fallthru
      _
    // Predicated region
    $region54: #{tpu_custom_call.1} parent=1 // pred_check
      _
    $region55: #{tpu_custom_call.1} parent=1 // pred_check_branch
      %113 = sbr.rel (0) target = $region57
    $region56: #{tpu_custom_call.1} parent=1 // pred_region
      %114 = dma.done [#allocation11], 512
    $region57: #{tpu_custom_call.1} parent=1 // pred_fallthru
      _
    // Predicated region
    $region58: #{tpu_custom_call.1} parent=1 // pred_check
      _
    $region59: #{tpu_custom_call.1} parent=1 // pred_check_branch
      %116 = sbr.rel (0) target = $region61
    $region60: #{tpu_custom_call.1} parent=1 // pred_region
      %117 = dma.done [#allocation11], 512
    $region61: #{tpu_custom_call.1} parent=1 // pred_fallthru
      _
    // Predicated region
    $region62: #{tpu_custom_call.1} parent=1 // pred_check
      _
    $region63: #{tpu_custom_call.1} parent=1 // pred_check_branch
      %119 = sbr.rel (0) target = $region65
    $region64: #{tpu_custom_call.1} parent=1 // pred_region
      %120 = dma.done [#allocation14], 512
    $region65: #{tpu_custom_call.1} parent=1 // pred_fallthru
      _
    %v121 = vld [vmem:[#allocation4] sm:$0xff]
    %v122 = vld [vmem:[#allocation4 + $0x8] sm:$0xff]
    %v123 = vld [vmem:[#allocation4 + $0x10] sm:$0xff]
    %v124 = vld [vmem:[#allocation4 + $0x18] sm:$0xff]
    %v125 = vld [vmem:[#allocation4 + $0x20] sm:$0xff]
    %v126 = vld [vmem:[#allocation4 + $0x28] sm:$0xff]
    %v127 = vld [vmem:[#allocation4 + $0x30] sm:$0xff]
    %v128 = vld [vmem:[#allocation4 + $0x38] sm:$0xff]
    %v129 = vld [vmem:[#allocation9] sm:$0xff]
    %v130 = vld [vmem:[#allocation9 + $0x8] sm:$0xff]
    %v131 = vld [vmem:[#allocation10] sm:$0xff]
    %v132 = vld [vmem:[#allocation10 + $0x8] sm:$0xff]
    %v133 = vld [vmem:[#allocation10 + $0x10] sm:$0xff]
    %v134 = vld [vmem:[#allocation10 + $0x18] sm:$0xff]
    %v135 = vld [vmem:[%s4] sm:$0x1]
    %v137 = vlaneseq
    %v138 = vshrl.u32 %v137, 7
    %v139 = vsub.s32 0, %v138
    %v140 = vrot.slane %v135, %v139
    %vm142 = vcmask 130048
    %v144 = vsel %vm142, %v121, 0
    %v147 = vsel %vm142, %v122, 0
    %v150 = vsel %vm142, %v123, 0
    %v153 = vsel %vm142, %v124, 0
    %v156 = vsel %vm142, %v125, 0
    %v159 = vsel %vm142, %v126, 0
    %v162 = vsel %vm142, %v127, 0
    %v165 = vsel %vm142, %v128, 0
    %167 = vmatprep.subr.mxu0 0.0
    %168 = vmatpush1.msra.mxu0 0.0
    %169 = vmatprep.subr.mxu0 0.0
    %170 = vmatpush1.msra.mxu0 0.0
    %171 = vmatprep.subr.mxu0 0.0
    %172 = vmatpush1.msra.mxu0 0.0
    %173 = vmatprep.subr.mxu0 0.0
    %174 = vmatpush1.msra.mxu0 0.0
    %175 = vmatprep.subr.mxu0 0.0
    %176 = vmatpush1.msra.mxu0 0.0
    %177 = vmatprep.subr.mxu0 0.0
    %178 = vmatpush1.msra.mxu0 0.0
    %179 = vmatprep.subr.mxu0 0.0
    %180 = vmatpush1.msra.mxu0 0.0
    %181 = vmatprep.subr.mxu0 0.0
    %182 = vmatpush1.msra.mxu0 0.0
    %183 = vmatprep.subr.mxu0 0.0
    %184 = vmatpush1.msra.mxu0 0.0
    %185 = vmatprep.subr.mxu0 0.0
    %186 = vmatpush1.msra.mxu0 0.0
    %187 = vmatprep.subr.mxu0 0.0
    %188 = vmatpush1.msra.mxu0 0.0
    %189 = vmatprep.subr.mxu0 0.0
    %190 = vmatpush1.msra.mxu0 0.0
    %191 = vmatprep.subr.mxu0 0.0
    %192 = vmatpush1.msra.mxu0 0.0
    %193 = vmatprep.subr.mxu0 0.0
    %194 = vmatpush1.msra.mxu0 0.0
    %195 = vmatprep.subr.mxu0 0.0
    %196 = vmatpush1.msra.mxu0 %v130
    %197 = vmatprep.subr.mxu0 0.0
    %198 = vmatpush1.msra.mxu0 %v129
    %199 = vmatprep.subr.mxu0 0.0
    %200 = vmatpush2.msra.mxu0 0.0
    %201 = vmatprep.subr.mxu0 0.0
    %202 = vmatpush2.msra.mxu0 0.0
    %203 = vmatprep.subr.mxu0 0.0
    %204 = vmatpush2.msra.mxu0 0.0
    %205 = vmatprep.subr.mxu0 0.0
    %206 = vmatpush2.msra.mxu0 0.0
    %207 = vmatprep.subr.mxu0 0.0
    %208 = vmatpush2.msra.mxu0 0.0
    %209 = vmatprep.subr.mxu0 0.0
    %210 = vmatpush2.msra.mxu0 0.0
    %211 = vmatprep.subr.mxu0 0.0
    %212 = vmatpush2.msra.mxu0 0.0
    %213 = vmatprep.subr.mxu0 0.0
    %214 = vmatpush2.msra.mxu0 0.0
    %215 = vmatprep.subr.mxu0 0.0
    %216 = vmatpush2.msra.mxu0 0.0
    %217 = vmatprep.subr.mxu0 0.0
    %218 = vmatpush2.msra.mxu0 0.0
    %219 = vmatprep.subr.mxu0 0.0
    %220 = vmatpush2.msra.mxu0 0.0
    %221 = vmatprep.subr.mxu0 0.0
    %222 = vmatpush2.msra.mxu0 0.0
    %223 = vmatprep.subr.mxu0 0.0
    %224 = vmatpush2.msra.mxu0 0.0
    %225 = vmatprep.subr.mxu0 0.0
    %226 = vmatpush2.msra.mxu0 0.0
    %227 = vmatprep.subr.mxu0 0.0
    %228 = vmatpush2.msra.mxu0 0.0
    %229 = vmatprep.subr.mxu0 0.0
    %230 = vmatpush2.msra.mxu0 0.0
    %231 = vmatprep.mubr.f32.mxu0 0.0
    %232 = vmatmul.mubr.f32.gmra.mxu0 %v144
    %v233 = vpop.f32.mrf.mxu0
    %v234 = vadd.f32 %v140, %v233
    %v235 = vpop.f32.mrf.mxu0
    %236 = vmatprep.mubr.f32.mxu0 0.0
    %237 = vmatmul.mubr.f32.gmra.mxu0 %v147
    %v238 = vpop.f32.mrf.mxu0
    %v239 = vadd.f32 %v140, %v238
    %v240 = vpop.f32.mrf.mxu0
    %241 = vmatprep.mubr.f32.mxu0 0.0
    %242 = vmatmul.mubr.f32.gmra.mxu0 %v150
    %v243 = vpop.f32.mrf.mxu0
    %v244 = vadd.f32 %v140, %v243
    %v245 = vpop.f32.mrf.mxu0
    %246 = vmatprep.mubr.f32.mxu0 0.0
    %247 = vmatmul.mubr.f32.gmra.mxu0 %v153
    %v248 = vpop.f32.mrf.mxu0
    %v249 = vadd.f32 %v140, %v248
    %v250 = vpop.f32.mrf.mxu0
    %251 = vmatprep.mubr.f32.mxu0 0.0
    %252 = vmatmul.mubr.f32.gmra.mxu0 %v156
    %v253 = vpop.f32.mrf.mxu0
    %v254 = vadd.f32 %v140, %v253
    %v255 = vpop.f32.mrf.mxu0
    %256 = vmatprep.mubr.f32.mxu0 0.0
    %257 = vmatmul.mubr.f32.gmra.mxu0 %v159
    %v258 = vpop.f32.mrf.mxu0
    %v259 = vadd.f32 %v140, %v258
    %v260 = vpop.f32.mrf.mxu0
    %261 = vmatprep.mubr.f32.mxu0 0.0
    %262 = vmatmul.mubr.f32.gmra.mxu0 %v162
    %v263 = vpop.f32.mrf.mxu0
    %v264 = vadd.f32 %v140, %v263
    %v265 = vpop.f32.mrf.mxu0
    %266 = vmatprep.mubr.f32.mxu0 0.0
    %267 = vmatmul.mubr.f32.gmra.mxu0 %v165
    %v268 = vpop.f32.mrf.mxu0
    %v269 = vadd.f32 %v140, %v268
    %v270 = vpop.f32.mrf.mxu0
    %271 = vdwg.mxu0
    %vm272 = vcmask 785408
    %273 = vst.msk [vmem:[#allocation2] sm:$0xff] %vm272, %v234
    %274 = vst.msk [vmem:[#allocation2 + $0x8] sm:$0xff] %vm272, %v239
    %275 = vst.msk [vmem:[#allocation2 + $0x10] sm:$0xff] %vm272, %v244
    %276 = vst.msk [vmem:[#allocation2 + $0x18] sm:$0xff] %vm272, %v249
    %277 = vst.msk [vmem:[#allocation2 + $0x20] sm:$0xff] %vm272, %v254
    %278 = vst.msk [vmem:[#allocation2 + $0x28] sm:$0xff] %vm272, %v259
    %279 = vst.msk [vmem:[#allocation2 + $0x30] sm:$0xff] %vm272, %v264
    %280 = vst.msk [vmem:[#allocation2 + $0x38] sm:$0xff] %vm272, %v269
    %v281 = vld [vmem:[%s5] sm:$0x1]
    %v283 = vlaneseq
    %v284 = vshrl.u32 %v283, 7
    %v285 = vsub.s32 0, %v284
    %v286 = vrot.slane %v281, %v285
    %v288 = vld [vmem:[#allocation7] sm:$0xff]
    %vm289 = vcmask 261120
    %v291 = vsel %vm289, %v288, 0
    %293 = vmatprep.subr.mxu0 0.0
    %294 = vmatpush1.msra.mxu0 0.0
    %295 = vmatprep.subr.mxu0 0.0
    %296 = vmatpush1.msra.mxu0 0.0
    %297 = vmatprep.subr.mxu0 0.0
    %298 = vmatpush1.msra.mxu0 0.0
    %299 = vmatprep.subr.mxu0 0.0
    %300 = vmatpush1.msra.mxu0 0.0
    %301 = vmatprep.subr.mxu0 0.0
    %302 = vmatpush1.msra.mxu0 0.0
    %303 = vmatprep.subr.mxu0 0.0
    %304 = vmatpush1.msra.mxu0 0.0
    %305 = vmatprep.subr.mxu0 0.0
    %306 = vmatpush1.msra.mxu0 0.0
    %307 = vmatprep.subr.mxu0 0.0
    %308 = vmatpush1.msra.mxu0 0.0
    %309 = vmatprep.subr.mxu0 0.0
    %310 = vmatpush1.msra.mxu0 0.0
    %311 = vmatprep.subr.mxu0 0.0
    %312 = vmatpush1.msra.mxu0 0.0
    %313 = vmatprep.subr.mxu0 0.0
    %314 = vmatpush1.msra.mxu0 0.0
    %315 = vmatprep.subr.mxu0 0.0
    %316 = vmatpush1.msra.mxu0 0.0
    %317 = vmatprep.subr.mxu0 0.0
    %318 = vmatpush1.msra.mxu0 %v134
    %319 = vmatprep.subr.mxu0 0.0
    %320 = vmatpush1.msra.mxu0 %v133
    %321 = vmatprep.subr.mxu0 0.0
    %322 = vmatpush1.msra.mxu0 %v132
    %323 = vmatprep.subr.mxu0 0.0
    %324 = vmatpush1.msra.mxu0 %v131
    %325 = vmatprep.subr.mxu0 0.0
    %326 = vmatpush2.msra.mxu0 0.0
    %327 = vmatprep.subr.mxu0 0.0
    %328 = vmatpush2.msra.mxu0 0.0
    %329 = vmatprep.subr.mxu0 0.0
    %330 = vmatpush2.msra.mxu0 0.0
    %331 = vmatprep.subr.mxu0 0.0
    %332 = vmatpush2.msra.mxu0 0.0
    %333 = vmatprep.subr.mxu0 0.0
    %334 = vmatpush2.msra.mxu0 0.0
    %335 = vmatprep.subr.mxu0 0.0
    %336 = vmatpush2.msra.mxu0 0.0
    %337 = vmatprep.subr.mxu0 0.0
    %338 = vmatpush2.msra.mxu0 0.0
    %339 = vmatprep.subr.mxu0 0.0
    %340 = vmatpush2.msra.mxu0 0.0
    %341 = vmatprep.subr.mxu0 0.0
    %342 = vmatpush2.msra.mxu0 0.0
    %343 = vmatprep.subr.mxu0 0.0
    %344 = vmatpush2.msra.mxu0 0.0
    %345 = vmatprep.subr.mxu0 0.0
    %346 = vmatpush2.msra.mxu0 0.0
    %347 = vmatprep.subr.mxu0 0.0
    %348 = vmatpush2.msra.mxu0 0.0
    %349 = vmatprep.subr.mxu0 0.0
    %350 = vmatpush2.msra.mxu0 0.0
    %351 = vmatprep.subr.mxu0 0.0
    %352 = vmatpush2.msra.mxu0 0.0
    %353 = vmatprep.subr.mxu0 0.0
    %354 = vmatpush2.msra.mxu0 0.0
    %355 = vmatprep.subr.mxu0 0.0
    %356 = vmatpush2.msra.mxu0 0.0
    %357 = vmatprep.mubr.f32.mxu0 0.0
    %358 = vmatmul.mubr.f32.gmra.mxu0 %v291
    %v359 = vpop.f32.mrf.mxu0
    %v360 = vadd.f32 %v286, %v359
    %v361 = vpop.f32.mrf.mxu0
    %362 = vdwg.mxu0
    %v363 = vld [vmem:[#allocation2] sm:$0xff]
    %v364 = vadd.f32 %v363, %v360
    %v365 = vxor.u32 %v364, 2147483648
    %v366 = vmul.f32 %v365, 1.442695
    %v367 = vpow.pop %v366
    %v368 = vadd.f32 %v367, 1.0
    %v369 = vrcp.pop %v368
    %v370 = vmul.f32 1.0, %v369
    %372 = vrot.lane.b32.xlu0 %v360, 64
    %v373 = vpop.permute.xlu0 %372
    %v375 = vmul.f32 %v370, %v373
    %377 = vrot.lane.b32.xlu0 %v375, 64
    %v378 = vpop.permute.xlu0 %377
    %v380 = vadd.f32 %v363, %v378
    %v381 = vtanh.pop %v380
    %v382 = vsub.f32 1.0, %v370
    %384 = vrot.lane.b32.xlu0 %v381, 96
    %v385 = vpop.permute.xlu0 %384
    %v387 = vmul.f32 %v382, %v385
    %388 = vrot.lane.b32.xlu0 %v288, 32
    %v389 = vpop.permute.xlu0 %388
    %v391 = vmul.f32 %v370, %v389
    %v392 = vadd.f32 %v387, %v391
    %394 = vrot.lane.b32.xlu0 %v392, 96
    %v395 = vpop.permute.xlu0 %394
    %397 = vst.msk [vmem:[#allocation3] sm:$0xff] %vm289, %v395
    %v398 = vsel %vm289, %v395, 0
    %400 = vmatprep.subr.mxu0 0.0
    %401 = vmatpush1.msra.mxu0 0.0
    %402 = vmatprep.subr.mxu0 0.0
    %403 = vmatpush1.msra.mxu0 0.0
    %404 = vmatprep.subr.mxu0 0.0
    %405 = vmatpush1.msra.mxu0 0.0
    %406 = vmatprep.subr.mxu0 0.0
    %407 = vmatpush1.msra.mxu0 0.0
    %408 = vmatprep.subr.mxu0 0.0
    %409 = vmatpush1.msra.mxu0 0.0
    %410 = vmatprep.subr.mxu0 0.0
    %411 = vmatpush1.msra.mxu0 0.0
    %412 = vmatprep.subr.mxu0 0.0
    %413 = vmatpush1.msra.mxu0 0.0
    %414 = vmatprep.subr.mxu0 0.0
    %415 = vmatpush1.msra.mxu0 0.0
    %416 = vmatprep.subr.mxu0 0.0
    %417 = vmatpush1.msra.mxu0 0.0
    %418 = vmatprep.subr.mxu0 0.0
    %419 = vmatpush1.msra.mxu0 0.0
    %420 = vmatprep.subr.mxu0 0.0
    %421 = vmatpush1.msra.mxu0 0.0
    %422 = vmatprep.subr.mxu0 0.0
    %423 = vmatpush1.msra.mxu0 0.0
    %424 = vmatprep.subr.mxu0 0.0
    %425 = vmatpush1.msra.mxu0 %v134
    %426 = vmatprep.subr.mxu0 0.0
    %427 = vmatpush1.msra.mxu0 %v133
    %428 = vmatprep.subr.mxu0 0.0
    %429 = vmatpush1.msra.mxu0 %v132
    %430 = vmatprep.subr.mxu0 0.0
    %431 = vmatpush1.msra.mxu0 %v131
    %432 = vmatprep.subr.mxu0 0.0
    %433 = vmatpush2.msra.mxu0 0.0
    %434 = vmatprep.subr.mxu0 0.0
    %435 = vmatpush2.msra.mxu0 0.0
    %436 = vmatprep.subr.mxu0 0.0
    %437 = vmatpush2.msra.mxu0 0.0
    %438 = vmatprep.subr.mxu0 0.0
    %439 = vmatpush2.msra.mxu0 0.0
    %440 = vmatprep.subr.mxu0 0.0
    %441 = vmatpush2.msra.mxu0 0.0
    %442 = vmatprep.subr.mxu0 0.0
    %443 = vmatpush2.msra.mxu0 0.0
    %444 = vmatprep.subr.mxu0 0.0
    %445 = vmatpush2.msra.mxu0 0.0
    %446 = vmatprep.subr.mxu0 0.0
    %447 = vmatpush2.msra.mxu0 0.0
    %448 = vmatprep.subr.mxu0 0.0
    %449 = vmatpush2.msra.mxu0 0.0
    %450 = vmatprep.subr.mxu0 0.0
    %451 = vmatpush2.msra.mxu0 0.0
    %452 = vmatprep.subr.mxu0 0.0
    %453 = vmatpush2.msra.mxu0 0.0
    %454 = vmatprep.subr.mxu0 0.0
    %455 = vmatpush2.msra.mxu0 0.0
    %456 = vmatprep.subr.mxu0 0.0
    %457 = vmatpush2.msra.mxu0 0.0
    %458 = vmatprep.subr.mxu0 0.0
    %459 = vmatpush2.msra.mxu0 0.0
    %460 = vmatprep.subr.mxu0 0.0
    %461 = vmatpush2.msra.mxu0 0.0
    %462 = vmatprep.subr.mxu0 0.0
    %463 = vmatpush2.msra.mxu0 0.0
    %464 = vmatprep.mubr.f32.mxu0 0.0
    %465 = vmatmul.mubr.f32.gmra.mxu0 %v398
    %v466 = vpop.f32.mrf.mxu0
    %v467 = vadd.f32 %v286, %v466
    %v468 = vpop.f32.mrf.mxu0
    %469 = vdwg.mxu0
    %s470 = scalar_lea.vmem [#allocation2], 8
    %v471 = vld [vmem:[%s470] sm:$0xff]
    %v472 = vadd.f32 %v471, %v467
    %v473 = vxor.u32 %v472, 2147483648
    %v474 = vmul.f32 %v473, 1.442695
    %v475 = vpow.pop %v474
    %v476 = vadd.f32 %v475, 1.0
    %v477 = vrcp.pop %v476
    %v478 = vmul.f32 1.0, %v477
    %480 = vrot.lane.b32.xlu0 %v467, 64
    %v481 = vpop.permute.xlu0 %480
    %v483 = vmul.f32 %v478, %v481
    %485 = vrot.lane.b32.xlu0 %v483, 64
    %v486 = vpop.permute.xlu0 %485
    %v488 = vadd.f32 %v471, %v486
    %v489 = vtanh.pop %v488
    %v490 = vsub.f32 1.0, %v478
    %492 = vrot.lane.b32.xlu0 %v489, 96
    %v493 = vpop.permute.xlu0 %492
    %v495 = vmul.f32 %v490, %v493
    %v496 = vmul.f32 %v478, %v392
    %v497 = vadd.f32 %v495, %v496
    %499 = vrot.lane.b32.xlu0 %v497, 96
    %v500 = vpop.permute.xlu0 %499
    %s502 = scalar_lea.vmem [#allocation3], 8
    %503 = vst.msk [vmem:[%s502] sm:$0xff] %vm289, %v500
    %v504 = vsel %vm289, %v500, 0
    %506 = vmatprep.subr.mxu0 0.0
    %507 = vmatpush1.msra.mxu0 0.0
    %508 = vmatprep.subr.mxu0 0.0
    %509 = vmatpush1.msra.mxu0 0.0
    %510 = vmatprep.subr.mxu0 0.0
    %511 = vmatpush1.msra.mxu0 0.0
    %512 = vmatprep.subr.mxu0 0.0
    %513 = vmatpush1.msra.mxu0 0.0
    %514 = vmatprep.subr.mxu0 0.0
    %515 = vmatpush1.msra.mxu0 0.0
    %516 = vmatprep.subr.mxu0 0.0
    %517 = vmatpush1.msra.mxu0 0.0
    %518 = vmatprep.subr.mxu0 0.0
    %519 = vmatpush1.msra.mxu0 0.0
    %520 = vmatprep.subr.mxu0 0.0
    %521 = vmatpush1.msra.mxu0 0.0
    %522 = vmatprep.subr.mxu0 0.0
    %523 = vmatpush1.msra.mxu0 0.0
    %524 = vmatprep.subr.mxu0 0.0
    %525 = vmatpush1.msra.mxu0 0.0
    %526 = vmatprep.subr.mxu0 0.0
    %527 = vmatpush1.msra.mxu0 0.0
    %528 = vmatprep.subr.mxu0 0.0
    %529 = vmatpush1.msra.mxu0 0.0
    %530 = vmatprep.subr.mxu0 0.0
    %531 = vmatpush1.msra.mxu0 %v134
    %532 = vmatprep.subr.mxu0 0.0
    %533 = vmatpush1.msra.mxu0 %v133
    %534 = vmatprep.subr.mxu0 0.0
    %535 = vmatpush1.msra.mxu0 %v132
    %536 = vmatprep.subr.mxu0 0.0
    %537 = vmatpush1.msra.mxu0 %v131
    %538 = vmatprep.subr.mxu0 0.0
    %539 = vmatpush2.msra.mxu0 0.0
    %540 = vmatprep.subr.mxu0 0.0
    %541 = vmatpush2.msra.mxu0 0.0
    %542 = vmatprep.subr.mxu0 0.0
    %543 = vmatpush2.msra.mxu0 0.0
    %544 = vmatprep.subr.mxu0 0.0
    %545 = vmatpush2.msra.mxu0 0.0
    %546 = vmatprep.subr.mxu0 0.0
    %547 = vmatpush2.msra.mxu0 0.0
    %548 = vmatprep.subr.mxu0 0.0
    %549 = vmatpush2.msra.mxu0 0.0
    %550 = vmatprep.subr.mxu0 0.0
    %551 = vmatpush2.msra.mxu0 0.0
    %552 = vmatprep.subr.mxu0 0.0
    %553 = vmatpush2.msra.mxu0 0.0
    %554 = vmatprep.subr.mxu0 0.0
    %555 = vmatpush2.msra.mxu0 0.0
    %556 = vmatprep.subr.mxu0 0.0
    %557 = vmatpush2.msra.mxu0 0.0
    %558 = vmatprep.subr.mxu0 0.0
    %559 = vmatpush2.msra.mxu0 0.0
    %560 = vmatprep.subr.mxu0 0.0
    %561 = vmatpush2.msra.mxu0 0.0
    %562 = vmatprep.subr.mxu0 0.0
    %563 = vmatpush2.msra.mxu0 0.0
    %564 = vmatprep.subr.mxu0 0.0
    %565 = vmatpush2.msra.mxu0 0.0
    %566 = vmatprep.subr.mxu0 0.0
    %567 = vmatpush2.msra.mxu0 0.0
    %568 = vmatprep.subr.mxu0 0.0
    %569 = vmatpush2.msra.mxu0 0.0
    %570 = vmatprep.mubr.f32.mxu0 0.0
    %571 = vmatmul.mubr.f32.gmra.mxu0 %v504
    %v572 = vpop.f32.mrf.mxu0
    %v573 = vadd.f32 %v286, %v572
    %v574 = vpop.f32.mrf.mxu0
    %575 = vdwg.mxu0
    %s576 = scalar_lea.vmem [#allocation2], 16
    %v577 = vld [vmem:[%s576] sm:$0xff]
    %v578 = vadd.f32 %v577, %v573
    %v579 = vxor.u32 %v578, 2147483648
    %v580 = vmul.f32 %v579, 1.442695
    %v581 = vpow.pop %v580
    %v582 = vadd.f32 %v581, 1.0
    %v583 = vrcp.pop %v582
    %v584 = vmul.f32 1.0, %v583
    %586 = vrot.lane.b32.xlu0 %v573, 64
    %v587 = vpop.permute.xlu0 %586
    %v589 = vmul.f32 %v584, %v587
    %591 = vrot.lane.b32.xlu0 %v589, 64
    %v592 = vpop.permute.xlu0 %591
    %v594 = vadd.f32 %v577, %v592
    %v595 = vtanh.pop %v594
    %v596 = vsub.f32 1.0, %v584
    %598 = vrot.lane.b32.xlu0 %v595, 96
    %v599 = vpop.permute.xlu0 %598
    %v601 = vmul.f32 %v596, %v599
    %v602 = vmul.f32 %v584, %v497
    %v603 = vadd.f32 %v601, %v602
    %605 = vrot.lane.b32.xlu0 %v603, 96
    %v606 = vpop.permute.xlu0 %605
    %s608 = scalar_lea.vmem [#allocation3], 16
    %609 = vst.msk [vmem:[%s608] sm:$0xff] %vm289, %v606
    %v610 = vsel %vm289, %v606, 0
    %612 = vmatprep.subr.mxu0 0.0
    %613 = vmatpush1.msra.mxu0 0.0
    %614 = vmatprep.subr.mxu0 0.0
    %615 = vmatpush1.msra.mxu0 0.0
    %616 = vmatprep.subr.mxu0 0.0
    %617 = vmatpush1.msra.mxu0 0.0
    %618 = vmatprep.subr.mxu0 0.0
    %619 = vmatpush1.msra.mxu0 0.0
    %620 = vmatprep.subr.mxu0 0.0
    %621 = vmatpush1.msra.mxu0 0.0
    %622 = vmatprep.subr.mxu0 0.0
    %623 = vmatpush1.msra.mxu0 0.0
    %624 = vmatprep.subr.mxu0 0.0
    %625 = vmatpush1.msra.mxu0 0.0
    %626 = vmatprep.subr.mxu0 0.0
    %627 = vmatpush1.msra.mxu0 0.0
    %628 = vmatprep.subr.mxu0 0.0
    %629 = vmatpush1.msra.mxu0 0.0
    %630 = vmatprep.subr.mxu0 0.0
    %631 = vmatpush1.msra.mxu0 0.0
    %632 = vmatprep.subr.mxu0 0.0
    %633 = vmatpush1.msra.mxu0 0.0
    %634 = vmatprep.subr.mxu0 0.0
    %635 = vmatpush1.msra.mxu0 0.0
    %636 = vmatprep.subr.mxu0 0.0
    %637 = vmatpush1.msra.mxu0 %v134
    %638 = vmatprep.subr.mxu0 0.0
    %639 = vmatpush1.msra.mxu0 %v133
    %640 = vmatprep.subr.mxu0 0.0
    %641 = vmatpush1.msra.mxu0 %v132
    %642 = vmatprep.subr.mxu0 0.0
    %643 = vmatpush1.msra.mxu0 %v131
    %644 = vmatprep.subr.mxu0 0.0
    %645 = vmatpush2.msra.mxu0 0.0
    %646 = vmatprep.subr.mxu0 0.0
    %647 = vmatpush2.msra.mxu0 0.0
    %648 = vmatprep.subr.mxu0 0.0
    %649 = vmatpush2.msra.mxu0 0.0
    %650 = vmatprep.subr.mxu0 0.0
    %651 = vmatpush2.msra.mxu0 0.0
    %652 = vmatprep.subr.mxu0 0.0
    %653 = vmatpush2.msra.mxu0 0.0
    %654 = vmatprep.subr.mxu0 0.0
    %655 = vmatpush2.msra.mxu0 0.0
    %656 = vmatprep.subr.mxu0 0.0
    %657 = vmatpush2.msra.mxu0 0.0
    %658 = vmatprep.subr.mxu0 0.0
    %659 = vmatpush2.msra.mxu0 0.0
    %660 = vmatprep.subr.mxu0 0.0
    %661 = vmatpush2.msra.mxu0 0.0
    %662 = vmatprep.subr.mxu0 0.0
    %663 = vmatpush2.msra.mxu0 0.0
    %664 = vmatprep.subr.mxu0 0.0
    %665 = vmatpush2.msra.mxu0 0.0
    %666 = vmatprep.subr.mxu0 0.0
    %667 = vmatpush2.msra.mxu0 0.0
    %668 = vmatprep.subr.mxu0 0.0
    %669 = vmatpush2.msra.mxu0 0.0
    %670 = vmatprep.subr.mxu0 0.0
    %671 = vmatpush2.msra.mxu0 0.0
    %672 = vmatprep.subr.mxu0 0.0
    %673 = vmatpush2.msra.mxu0 0.0
    %674 = vmatprep.subr.mxu0 0.0
    %675 = vmatpush2.msra.mxu0 0.0
    %676 = vmatprep.mubr.f32.mxu0 0.0
    %677 = vmatmul.mubr.f32.gmra.mxu0 %v610
    %v678 = vpop.f32.mrf.mxu0
    %v679 = vadd.f32 %v286, %v678
    %v680 = vpop.f32.mrf.mxu0
    %681 = vdwg.mxu0
    %s682 = scalar_lea.vmem [#allocation2], 24
    %v683 = vld [vmem:[%s682] sm:$0xff]
    %v684 = vadd.f32 %v683, %v679
    %v685 = vxor.u32 %v684, 2147483648
    %v686 = vmul.f32 %v685, 1.442695
    %v687 = vpow.pop %v686
    %v688 = vadd.f32 %v687, 1.0
    %v689 = vrcp.pop %v688
    %v690 = vmul.f32 1.0, %v689
    %692 = vrot.lane.b32.xlu0 %v679, 64
    %v693 = vpop.permute.xlu0 %692
    %v695 = vmul.f32 %v690, %v693
    %697 = vrot.lane.b32.xlu0 %v695, 64
    %v698 = vpop.permute.xlu0 %697
    %v700 = vadd.f32 %v683, %v698
    %v701 = vtanh.pop %v700
    %v702 = vsub.f32 1.0, %v690
    %704 = vrot.lane.b32.xlu0 %v701, 96
    %v705 = vpop.permute.xlu0 %704
    %v707 = vmul.f32 %v702, %v705
    %v708 = vmul.f32 %v690, %v603
    %v709 = vadd.f32 %v707, %v708
    %711 = vrot.lane.b32.xlu0 %v709, 96
    %v712 = vpop.permute.xlu0 %711
    %s714 = scalar_lea.vmem [#allocation3], 24
    %715 = vst.msk [vmem:[%s714] sm:$0xff] %vm289, %v712
    %v716 = vsel %vm289, %v712, 0
    %718 = vmatprep.subr.mxu0 0.0
    %719 = vmatpush1.msra.mxu0 0.0
    %720 = vmatprep.subr.mxu0 0.0
    %721 = vmatpush1.msra.mxu0 0.0
    %722 = vmatprep.subr.mxu0 0.0
    %723 = vmatpush1.msra.mxu0 0.0
    %724 = vmatprep.subr.mxu0 0.0
    %725 = vmatpush1.msra.mxu0 0.0
    %726 = vmatprep.subr.mxu0 0.0
    %727 = vmatpush1.msra.mxu0 0.0
    %728 = vmatprep.subr.mxu0 0.0
    %729 = vmatpush1.msra.mxu0 0.0
    %730 = vmatprep.subr.mxu0 0.0
    %731 = vmatpush1.msra.mxu0 0.0
    %732 = vmatprep.subr.mxu0 0.0
    %733 = vmatpush1.msra.mxu0 0.0
    %734 = vmatprep.subr.mxu0 0.0
    %735 = vmatpush1.msra.mxu0 0.0
    %736 = vmatprep.subr.mxu0 0.0
    %737 = vmatpush1.msra.mxu0 0.0
    %738 = vmatprep.subr.mxu0 0.0
    %739 = vmatpush1.msra.mxu0 0.0
    %740 = vmatprep.subr.mxu0 0.0
    %741 = vmatpush1.msra.mxu0 0.0
    %742 = vmatprep.subr.mxu0 0.0
    %743 = vmatpush1.msra.mxu0 %v134
    %744 = vmatprep.subr.mxu0 0.0
    %745 = vmatpush1.msra.mxu0 %v133
    %746 = vmatprep.subr.mxu0 0.0
    %747 = vmatpush1.msra.mxu0 %v132
    %748 = vmatprep.subr.mxu0 0.0
    %749 = vmatpush1.msra.mxu0 %v131
    %750 = vmatprep.subr.mxu0 0.0
    %751 = vmatpush2.msra.mxu0 0.0
    %752 = vmatprep.subr.mxu0 0.0
    %753 = vmatpush2.msra.mxu0 0.0
    %754 = vmatprep.subr.mxu0 0.0
    %755 = vmatpush2.msra.mxu0 0.0
    %756 = vmatprep.subr.mxu0 0.0
    %757 = vmatpush2.msra.mxu0 0.0
    %758 = vmatprep.subr.mxu0 0.0
    %759 = vmatpush2.msra.mxu0 0.0
    %760 = vmatprep.subr.mxu0 0.0
    %761 = vmatpush2.msra.mxu0 0.0
    %762 = vmatprep.subr.mxu0 0.0
    %763 = vmatpush2.msra.mxu0 0.0
    %764 = vmatprep.subr.mxu0 0.0
    %765 = vmatpush2.msra.mxu0 0.0
    %766 = vmatprep.subr.mxu0 0.0
    %767 = vmatpush2.msra.mxu0 0.0
    %768 = vmatprep.subr.mxu0 0.0
    %769 = vmatpush2.msra.mxu0 0.0
    %770 = vmatprep.subr.mxu0 0.0
    %771 = vmatpush2.msra.mxu0 0.0
    %772 = vmatprep.subr.mxu0 0.0
    %773 = vmatpush2.msra.mxu0 0.0
    %774 = vmatprep.subr.mxu0 0.0
    %775 = vmatpush2.msra.mxu0 0.0
    %776 = vmatprep.subr.mxu0 0.0
    %777 = vmatpush2.msra.mxu0 0.0
    %778 = vmatprep.subr.mxu0 0.0
    %779 = vmatpush2.msra.mxu0 0.0
    %780 = vmatprep.subr.mxu0 0.0
    %781 = vmatpush2.msra.mxu0 0.0
    %782 = vmatprep.mubr.f32.mxu0 0.0
    %783 = vmatmul.mubr.f32.gmra.mxu0 %v716
    %v784 = vpop.f32.mrf.mxu0
    %v785 = vadd.f32 %v286, %v784
    %v786 = vpop.f32.mrf.mxu0
    %787 = vdwg.mxu0
    %s788 = scalar_lea.vmem [#allocation2], 32
    %v789 = vld [vmem:[%s788] sm:$0xff]
    %v790 = vadd.f32 %v789, %v785
    %v791 = vxor.u32 %v790, 2147483648
    %v792 = vmul.f32 %v791, 1.442695
    %v793 = vpow.pop %v792
    %v794 = vadd.f32 %v793, 1.0
    %v795 = vrcp.pop %v794
    %v796 = vmul.f32 1.0, %v795
    %798 = vrot.lane.b32.xlu0 %v785, 64
    %v799 = vpop.permute.xlu0 %798
    %v801 = vmul.f32 %v796, %v799
    %803 = vrot.lane.b32.xlu0 %v801, 64
    %v804 = vpop.permute.xlu0 %803
    %v806 = vadd.f32 %v789, %v804
    %v807 = vtanh.pop %v806
    %v808 = vsub.f32 1.0, %v796
    %810 = vrot.lane.b32.xlu0 %v807, 96
    %v811 = vpop.permute.xlu0 %810
    %v813 = vmul.f32 %v808, %v811
    %v814 = vmul.f32 %v796, %v709
    %v815 = vadd.f32 %v813, %v814
    %817 = vrot.lane.b32.xlu0 %v815, 96
    %v818 = vpop.permute.xlu0 %817
    %s820 = scalar_lea.vmem [#allocation3], 32
    %821 = vst.msk [vmem:[%s820] sm:$0xff] %vm289, %v818
    %v822 = vsel %vm289, %v818, 0
    %824 = vmatprep.subr.mxu0 0.0
    %825 = vmatpush1.msra.mxu0 0.0
    %826 = vmatprep.subr.mxu0 0.0
    %827 = vmatpush1.msra.mxu0 0.0
    %828 = vmatprep.subr.mxu0 0.0
    %829 = vmatpush1.msra.mxu0 0.0
    %830 = vmatprep.subr.mxu0 0.0
    %831 = vmatpush1.msra.mxu0 0.0
    %832 = vmatprep.subr.mxu0 0.0
    %833 = vmatpush1.msra.mxu0 0.0
    %834 = vmatprep.subr.mxu0 0.0
    %835 = vmatpush1.msra.mxu0 0.0
    %836 = vmatprep.subr.mxu0 0.0
    %837 = vmatpush1.msra.mxu0 0.0
    %838 = vmatprep.subr.mxu0 0.0
    %839 = vmatpush1.msra.mxu0 0.0
    %840 = vmatprep.subr.mxu0 0.0
    %841 = vmatpush1.msra.mxu0 0.0
    %842 = vmatprep.subr.mxu0 0.0
    %843 = vmatpush1.msra.mxu0 0.0
    %844 = vmatprep.subr.mxu0 0.0
    %845 = vmatpush1.msra.mxu0 0.0
    %846 = vmatprep.subr.mxu0 0.0
    %847 = vmatpush1.msra.mxu0 0.0
    %848 = vmatprep.subr.mxu0 0.0
    %849 = vmatpush1.msra.mxu0 %v134
    %850 = vmatprep.subr.mxu0 0.0
    %851 = vmatpush1.msra.mxu0 %v133
    %852 = vmatprep.subr.mxu0 0.0
    %853 = vmatpush1.msra.mxu0 %v132
    %854 = vmatprep.subr.mxu0 0.0
    %855 = vmatpush1.msra.mxu0 %v131
    %856 = vmatprep.subr.mxu0 0.0
    %857 = vmatpush2.msra.mxu0 0.0
    %858 = vmatprep.subr.mxu0 0.0
    %859 = vmatpush2.msra.mxu0 0.0
    %860 = vmatprep.subr.mxu0 0.0
    %861 = vmatpush2.msra.mxu0 0.0
    %862 = vmatprep.subr.mxu0 0.0
    %863 = vmatpush2.msra.mxu0 0.0
    %864 = vmatprep.subr.mxu0 0.0
    %865 = vmatpush2.msra.mxu0 0.0
    %866 = vmatprep.subr.mxu0 0.0
    %867 = vmatpush2.msra.mxu0 0.0
    %868 = vmatprep.subr.mxu0 0.0
    %869 = vmatpush2.msra.mxu0 0.0
    %870 = vmatprep.subr.mxu0 0.0
    %871 = vmatpush2.msra.mxu0 0.0
    %872 = vmatprep.subr.mxu0 0.0
    %873 = vmatpush2.msra.mxu0 0.0
    %874 = vmatprep.subr.mxu0 0.0
    %875 = vmatpush2.msra.mxu0 0.0
    %876 = vmatprep.subr.mxu0 0.0
    %877 = vmatpush2.msra.mxu0 0.0
    %878 = vmatprep.subr.mxu0 0.0
    %879 = vmatpush2.msra.mxu0 0.0
    %880 = vmatprep.subr.mxu0 0.0
    %881 = vmatpush2.msra.mxu0 0.0
    %882 = vmatprep.subr.mxu0 0.0
    %883 = vmatpush2.msra.mxu0 0.0
    %884 = vmatprep.subr.mxu0 0.0
    %885 = vmatpush2.msra.mxu0 0.0
    %886 = vmatprep.subr.mxu0 0.0
    %887 = vmatpush2.msra.mxu0 0.0
    %888 = vmatprep.mubr.f32.mxu0 0.0
    %889 = vmatmul.mubr.f32.gmra.mxu0 %v822
    %v890 = vpop.f32.mrf.mxu0
    %v891 = vadd.f32 %v286, %v890
    %v892 = vpop.f32.mrf.mxu0
    %893 = vdwg.mxu0
    %s894 = scalar_lea.vmem [#allocation2], 40
    %v895 = vld [vmem:[%s894] sm:$0xff]
    %v896 = vadd.f32 %v895, %v891
    %v897 = vxor.u32 %v896, 2147483648
    %v898 = vmul.f32 %v897, 1.442695
    %v899 = vpow.pop %v898
    %v900 = vadd.f32 %v899, 1.0
    %v901 = vrcp.pop %v900
    %v902 = vmul.f32 1.0, %v901
    %904 = vrot.lane.b32.xlu0 %v891, 64
    %v905 = vpop.permute.xlu0 %904
    %v907 = vmul.f32 %v902, %v905
    %909 = vrot.lane.b32.xlu0 %v907, 64
    %v910 = vpop.permute.xlu0 %909
    %v912 = vadd.f32 %v895, %v910
    %v913 = vtanh.pop %v912
    %v914 = vsub.f32 1.0, %v902
    %916 = vrot.lane.b32.xlu0 %v913, 96
    %v917 = vpop.permute.xlu0 %916
    %v919 = vmul.f32 %v914, %v917
    %v920 = vmul.f32 %v902, %v815
    %v921 = vadd.f32 %v919, %v920
    %923 = vrot.lane.b32.xlu0 %v921, 96
    %v924 = vpop.permute.xlu0 %923
    %s926 = scalar_lea.vmem [#allocation3], 40
    %927 = vst.msk [vmem:[%s926] sm:$0xff] %vm289, %v924
    %v928 = vsel %vm289, %v924, 0
    %930 = vmatprep.subr.mxu0 0.0
    %931 = vmatpush1.msra.mxu0 0.0
    %932 = vmatprep.subr.mxu0 0.0
    %933 = vmatpush1.msra.mxu0 0.0
    %934 = vmatprep.subr.mxu0 0.0
    %935 = vmatpush1.msra.mxu0 0.0
    %936 = vmatprep.subr.mxu0 0.0
    %937 = vmatpush1.msra.mxu0 0.0
    %938 = vmatprep.subr.mxu0 0.0
    %939 = vmatpush1.msra.mxu0 0.0
    %940 = vmatprep.subr.mxu0 0.0
    %941 = vmatpush1.msra.mxu0 0.0
    %942 = vmatprep.subr.mxu0 0.0
    %943 = vmatpush1.msra.mxu0 0.0
    %944 = vmatprep.subr.mxu0 0.0
    %945 = vmatpush1.msra.mxu0 0.0
    %946 = vmatprep.subr.mxu0 0.0
    %947 = vmatpush1.msra.mxu0 0.0
    %948 = vmatprep.subr.mxu0 0.0
    %949 = vmatpush1.msra.mxu0 0.0
    %950 = vmatprep.subr.mxu0 0.0
    %951 = vmatpush1.msra.mxu0 0.0
    %952 = vmatprep.subr.mxu0 0.0
    %953 = vmatpush1.msra.mxu0 0.0
    %954 = vmatprep.subr.mxu0 0.0
    %955 = vmatpush1.msra.mxu0 %v134
    %956 = vmatprep.subr.mxu0 0.0
    %957 = vmatpush1.msra.mxu0 %v133
    %958 = vmatprep.subr.mxu0 0.0
    %959 = vmatpush1.msra.mxu0 %v132
    %960 = vmatprep.subr.mxu0 0.0
    %961 = vmatpush1.msra.mxu0 %v131
    %962 = vmatprep.subr.mxu0 0.0
    %963 = vmatpush2.msra.mxu0 0.0
    %964 = vmatprep.subr.mxu0 0.0
    %965 = vmatpush2.msra.mxu0 0.0
    %966 = vmatprep.subr.mxu0 0.0
    %967 = vmatpush2.msra.mxu0 0.0
    %968 = vmatprep.subr.mxu0 0.0
    %969 = vmatpush2.msra.mxu0 0.0
    %970 = vmatprep.subr.mxu0 0.0
    %971 = vmatpush2.msra.mxu0 0.0
    %972 = vmatprep.subr.mxu0 0.0
    %973 = vmatpush2.msra.mxu0 0.0
    %974 = vmatprep.subr.mxu0 0.0
    %975 = vmatpush2.msra.mxu0 0.0
    %976 = vmatprep.subr.mxu0 0.0
    %977 = vmatpush2.msra.mxu0 0.0
    %978 = vmatprep.subr.mxu0 0.0
    %979 = vmatpush2.msra.mxu0 0.0
    %980 = vmatprep.subr.mxu0 0.0
    %981 = vmatpush2.msra.mxu0 0.0
    %982 = vmatprep.subr.mxu0 0.0
    %983 = vmatpush2.msra.mxu0 0.0
    %984 = vmatprep.subr.mxu0 0.0
    %985 = vmatpush2.msra.mxu0 0.0
    %986 = vmatprep.subr.mxu0 0.0
    %987 = vmatpush2.msra.mxu0 0.0
    %988 = vmatprep.subr.mxu0 0.0
    %989 = vmatpush2.msra.mxu0 0.0
    %990 = vmatprep.subr.mxu0 0.0
    %991 = vmatpush2.msra.mxu0 0.0
    %992 = vmatprep.subr.mxu0 0.0
    %993 = vmatpush2.msra.mxu0 0.0
    %994 = vmatprep.mubr.f32.mxu0 0.0
    %995 = vmatmul.mubr.f32.gmra.mxu0 %v928
    %v996 = vpop.f32.mrf.mxu0
    %v997 = vadd.f32 %v286, %v996
    %v998 = vpop.f32.mrf.mxu0
    %999 = vdwg.mxu0
    %s1000 = scalar_lea.vmem [#allocation2], 48
    %v1001 = vld [vmem:[%s1000] sm:$0xff]
    %v1002 = vadd.f32 %v1001, %v997
    %v1003 = vxor.u32 %v1002, 2147483648
    %v1004 = vmul.f32 %v1003, 1.442695
    %v1005 = vpow.pop %v1004
    %v1006 = vadd.f32 %v1005, 1.0
    %v1007 = vrcp.pop %v1006
    %v1008 = vmul.f32 1.0, %v1007
    %1010 = vrot.lane.b32.xlu0 %v997, 64
    %v1011 = vpop.permute.xlu0 %1010
    %v1013 = vmul.f32 %v1008, %v1011
    %1015 = vrot.lane.b32.xlu0 %v1013, 64
    %v1016 = vpop.permute.xlu0 %1015
    %v1018 = vadd.f32 %v1001, %v1016
    %v1019 = vtanh.pop %v1018
    %v1020 = vsub.f32 1.0, %v1008
    %1022 = vrot.lane.b32.xlu0 %v1019, 96
    %v1023 = vpop.permute.xlu0 %1022
    %v1025 = vmul.f32 %v1020, %v1023
    %v1026 = vmul.f32 %v1008, %v921
    %v1027 = vadd.f32 %v1025, %v1026
    %1029 = vrot.lane.b32.xlu0 %v1027, 96
    %v1030 = vpop.permute.xlu0 %1029
    %s1032 = scalar_lea.vmem [#allocation3], 48
    %1033 = vst.msk [vmem:[%s1032] sm:$0xff] %vm289, %v1030
    %v1034 = vsel %vm289, %v1030, 0
    %1036 = vmatprep.subr.mxu0 0.0
    %1037 = vmatpush1.msra.mxu0 0.0
    %1038 = vmatprep.subr.mxu0 0.0
    %1039 = vmatpush1.msra.mxu0 0.0
    %1040 = vmatprep.subr.mxu0 0.0
    %1041 = vmatpush1.msra.mxu0 0.0
    %1042 = vmatprep.subr.mxu0 0.0
    %1043 = vmatpush1.msra.mxu0 0.0
    %1044 = vmatprep.subr.mxu0 0.0
    %1045 = vmatpush1.msra.mxu0 0.0
    %1046 = vmatprep.subr.mxu0 0.0
    %1047 = vmatpush1.msra.mxu0 0.0
    %1048 = vmatprep.subr.mxu0 0.0
    %1049 = vmatpush1.msra.mxu0 0.0
    %1050 = vmatprep.subr.mxu0 0.0
    %1051 = vmatpush1.msra.mxu0 0.0
    %1052 = vmatprep.subr.mxu0 0.0
    %1053 = vmatpush1.msra.mxu0 0.0
    %1054 = vmatprep.subr.mxu0 0.0
    %1055 = vmatpush1.msra.mxu0 0.0
    %1056 = vmatprep.subr.mxu0 0.0
    %1057 = vmatpush1.msra.mxu0 0.0
    %1058 = vmatprep.subr.mxu0 0.0
    %1059 = vmatpush1.msra.mxu0 0.0
    %1060 = vmatprep.subr.mxu0 0.0
    %1061 = vmatpush1.msra.mxu0 %v134
    %1062 = vmatprep.subr.mxu0 0.0
    %1063 = vmatpush1.msra.mxu0 %v133
    %1064 = vmatprep.subr.mxu0 0.0
    %1065 = vmatpush1.msra.mxu0 %v132
    %1066 = vmatprep.subr.mxu0 0.0
    %1067 = vmatpush1.msra.mxu0 %v131
    %1068 = vmatprep.subr.mxu0 0.0
    %1069 = vmatpush2.msra.mxu0 0.0
    %1070 = vmatprep.subr.mxu0 0.0
    %1071 = vmatpush2.msra.mxu0 0.0
    %1072 = vmatprep.subr.mxu0 0.0
    %1073 = vmatpush2.msra.mxu0 0.0
    %1074 = vmatprep.subr.mxu0 0.0
    %1075 = vmatpush2.msra.mxu0 0.0
    %1076 = vmatprep.subr.mxu0 0.0
    %1077 = vmatpush2.msra.mxu0 0.0
    %1078 = vmatprep.subr.mxu0 0.0
    %1079 = vmatpush2.msra.mxu0 0.0
    %1080 = vmatprep.subr.mxu0 0.0
    %1081 = vmatpush2.msra.mxu0 0.0
    %1082 = vmatprep.subr.mxu0 0.0
    %1083 = vmatpush2.msra.mxu0 0.0
    %1084 = vmatprep.subr.mxu0 0.0
    %1085 = vmatpush2.msra.mxu0 0.0
    %1086 = vmatprep.subr.mxu0 0.0
    %1087 = vmatpush2.msra.mxu0 0.0
    %1088 = vmatprep.subr.mxu0 0.0
    %1089 = vmatpush2.msra.mxu0 0.0
    %1090 = vmatprep.subr.mxu0 0.0
    %1091 = vmatpush2.msra.mxu0 0.0
    %1092 = vmatprep.subr.mxu0 0.0
    %1093 = vmatpush2.msra.mxu0 0.0
    %1094 = vmatprep.subr.mxu0 0.0
    %1095 = vmatpush2.msra.mxu0 0.0
    %1096 = vmatprep.subr.mxu0 0.0
    %1097 = vmatpush2.msra.mxu0 0.0
    %1098 = vmatprep.subr.mxu0 0.0
    %1099 = vmatpush2.msra.mxu0 0.0
    %1100 = vmatprep.mubr.f32.mxu0 0.0
    %1101 = vmatmul.mubr.f32.gmra.mxu0 %v1034
    %v1102 = vpop.f32.mrf.mxu0
    %v1103 = vadd.f32 %v286, %v1102
    %v1104 = vpop.f32.mrf.mxu0
    %1105 = vdwg.mxu0
    %s1106 = scalar_lea.vmem [#allocation2], 56
    %v1107 = vld [vmem:[%s1106] sm:$0xff]
    %v1108 = vadd.f32 %v1107, %v1103
    %v1109 = vxor.u32 %v1108, 2147483648
    %v1110 = vmul.f32 %v1109, 1.442695
    %v1111 = vpow.pop %v1110
    %v1112 = vadd.f32 %v1111, 1.0
    %v1113 = vrcp.pop %v1112
    %v1114 = vmul.f32 1.0, %v1113
    %1116 = vrot.lane.b32.xlu0 %v1103, 64
    %v1117 = vpop.permute.xlu0 %1116
    %v1119 = vmul.f32 %v1114, %v1117
    %1121 = vrot.lane.b32.xlu0 %v1119, 64
    %v1122 = vpop.permute.xlu0 %1121
    %v1124 = vadd.f32 %v1107, %v1122
    %v1125 = vtanh.pop %v1124
    %v1126 = vsub.f32 1.0, %v1114
    %1128 = vrot.lane.b32.xlu0 %v1125, 96
    %v1129 = vpop.permute.xlu0 %1128
    %v1131 = vmul.f32 %v1126, %v1129
    %v1132 = vmul.f32 %v1114, %v1027
    %v1133 = vadd.f32 %v1131, %v1132
    %1135 = vrot.lane.b32.xlu0 %v1133, 96
    %v1136 = vpop.permute.xlu0 %1135
    %s1138 = scalar_lea.vmem [#allocation3], 56
    %1139 = vst.msk [vmem:[%s1138] sm:$0xff] %vm289, %v1136
    %1140 = vst.msk [vmem:[#allocation16] sm:$0xff] %vm289, %v1136
    %v1141 = vld [vmem:[#allocation3] sm:$0xff]
    %v1142 = vld [vmem:[#allocation3 + $0x8] sm:$0xff]
    %v1143 = vld [vmem:[#allocation3 + $0x10] sm:$0xff]
    %v1144 = vld [vmem:[#allocation3 + $0x18] sm:$0xff]
    %v1145 = vld [vmem:[#allocation3 + $0x20] sm:$0xff]
    %v1146 = vld [vmem:[#allocation3 + $0x28] sm:$0xff]
    %v1147 = vld [vmem:[#allocation3 + $0x30] sm:$0xff]
    %v1148 = vld [vmem:[#allocation3 + $0x38] sm:$0xff]
    %v1149 = vld [vmem:[#allocation12] sm:$0xff]
    %v1150 = vld [vmem:[#allocation12 + $0x8] sm:$0xff]
    %v1151 = vld [vmem:[#allocation12 + $0x10] sm:$0xff]
    %v1152 = vld [vmem:[#allocation12 + $0x18] sm:$0xff]
    %v1153 = vld [vmem:[#allocation13] sm:$0xff]
    %v1154 = vld [vmem:[#allocation13 + $0x8] sm:$0xff]
    %v1155 = vld [vmem:[#allocation13 + $0x10] sm:$0xff]
    %v1156 = vld [vmem:[#allocation13 + $0x18] sm:$0xff]
    %v1157 = vld [vmem:[%s8] sm:$0x1]
    %v1159 = vlaneseq
    %v1160 = vshrl.u32 %v1159, 7
    %v1161 = vsub.s32 0, %v1160
    %v1162 = vrot.slane %v1157, %v1161
    %v1165 = vsel %vm289, %v1141, 0
    %v1168 = vsel %vm289, %v1142, 0
    %v1171 = vsel %vm289, %v1143, 0
    %v1174 = vsel %vm289, %v1144, 0
    %v1177 = vsel %vm289, %v1145, 0
    %v1180 = vsel %vm289, %v1146, 0
    %v1183 = vsel %vm289, %v1147, 0
    %v1186 = vsel %vm289, %v1148, 0
    %1188 = vmatprep.subr.mxu0 0.0
    %1189 = vmatpush1.msra.mxu0 0.0
    %1190 = vmatprep.subr.mxu0 0.0
    %1191 = vmatpush1.msra.mxu0 0.0
    %1192 = vmatprep.subr.mxu0 0.0
    %1193 = vmatpush1.msra.mxu0 0.0
    %1194 = vmatprep.subr.mxu0 0.0
    %1195 = vmatpush1.msra.mxu0 0.0
    %1196 = vmatprep.subr.mxu0 0.0
    %1197 = vmatpush1.msra.mxu0 0.0
    %1198 = vmatprep.subr.mxu0 0.0
    %1199 = vmatpush1.msra.mxu0 0.0
    %1200 = vmatprep.subr.mxu0 0.0
    %1201 = vmatpush1.msra.mxu0 0.0
    %1202 = vmatprep.subr.mxu0 0.0
    %1203 = vmatpush1.msra.mxu0 0.0
    %1204 = vmatprep.subr.mxu0 0.0
    %1205 = vmatpush1.msra.mxu0 0.0
    %1206 = vmatprep.subr.mxu0 0.0
    %1207 = vmatpush1.msra.mxu0 0.0
    %1208 = vmatprep.subr.mxu0 0.0
    %1209 = vmatpush1.msra.mxu0 0.0
    %1210 = vmatprep.subr.mxu0 0.0
    %1211 = vmatpush1.msra.mxu0 0.0
    %1212 = vmatprep.subr.mxu0 0.0
    %1213 = vmatpush1.msra.mxu0 %v1152
    %1214 = vmatprep.subr.mxu0 0.0
    %1215 = vmatpush1.msra.mxu0 %v1151
    %1216 = vmatprep.subr.mxu0 0.0
    %1217 = vmatpush1.msra.mxu0 %v1150
    %1218 = vmatprep.subr.mxu0 0.0
    %1219 = vmatpush1.msra.mxu0 %v1149
    %1220 = vmatprep.subr.mxu0 0.0
    %1221 = vmatpush2.msra.mxu0 0.0
    %1222 = vmatprep.subr.mxu0 0.0
    %1223 = vmatpush2.msra.mxu0 0.0
    %1224 = vmatprep.subr.mxu0 0.0
    %1225 = vmatpush2.msra.mxu0 0.0
    %1226 = vmatprep.subr.mxu0 0.0
    %1227 = vmatpush2.msra.mxu0 0.0
    %1228 = vmatprep.subr.mxu0 0.0
    %1229 = vmatpush2.msra.mxu0 0.0
    %1230 = vmatprep.subr.mxu0 0.0
    %1231 = vmatpush2.msra.mxu0 0.0
    %1232 = vmatprep.subr.mxu0 0.0
    %1233 = vmatpush2.msra.mxu0 0.0
    %1234 = vmatprep.subr.mxu0 0.0
    %1235 = vmatpush2.msra.mxu0 0.0
    %1236 = vmatprep.subr.mxu0 0.0
    %1237 = vmatpush2.msra.mxu0 0.0
    %1238 = vmatprep.subr.mxu0 0.0
    %1239 = vmatpush2.msra.mxu0 0.0
    %1240 = vmatprep.subr.mxu0 0.0
    %1241 = vmatpush2.msra.mxu0 0.0
    %1242 = vmatprep.subr.mxu0 0.0
    %1243 = vmatpush2.msra.mxu0 0.0
    %1244 = vmatprep.subr.mxu0 0.0
    %1245 = vmatpush2.msra.mxu0 0.0
    %1246 = vmatprep.subr.mxu0 0.0
    %1247 = vmatpush2.msra.mxu0 0.0
    %1248 = vmatprep.subr.mxu0 0.0
    %1249 = vmatpush2.msra.mxu0 0.0
    %1250 = vmatprep.subr.mxu0 0.0
    %1251 = vmatpush2.msra.mxu0 0.0
    %1252 = vmatprep.mubr.f32.mxu0 0.0
    %1253 = vmatmul.mubr.f32.gmra.mxu0 %v1165
    %v1254 = vpop.f32.mrf.mxu0
    %v1255 = vadd.f32 %v1162, %v1254
    %v1256 = vpop.f32.mrf.mxu0
    %1257 = vmatprep.mubr.f32.mxu0 0.0
    %1258 = vmatmul.mubr.f32.gmra.mxu0 %v1168
    %v1259 = vpop.f32.mrf.mxu0
    %v1260 = vadd.f32 %v1162, %v1259
    %v1261 = vpop.f32.mrf.mxu0
    %1262 = vmatprep.mubr.f32.mxu0 0.0
    %1263 = vmatmul.mubr.f32.gmra.mxu0 %v1171
    %v1264 = vpop.f32.mrf.mxu0
    %v1265 = vadd.f32 %v1162, %v1264
    %v1266 = vpop.f32.mrf.mxu0
    %1267 = vmatprep.mubr.f32.mxu0 0.0
    %1268 = vmatmul.mubr.f32.gmra.mxu0 %v1174
    %v1269 = vpop.f32.mrf.mxu0
    %v1270 = vadd.f32 %v1162, %v1269
    %v1271 = vpop.f32.mrf.mxu0
    %1272 = vmatprep.mubr.f32.mxu0 0.0
    %1273 = vmatmul.mubr.f32.gmra.mxu0 %v1177
    %v1274 = vpop.f32.mrf.mxu0
    %v1275 = vadd.f32 %v1162, %v1274
    %v1276 = vpop.f32.mrf.mxu0
    %1277 = vmatprep.mubr.f32.mxu0 0.0
    %1278 = vmatmul.mubr.f32.gmra.mxu0 %v1180
    %v1279 = vpop.f32.mrf.mxu0
    %v1280 = vadd.f32 %v1162, %v1279
    %v1281 = vpop.f32.mrf.mxu0
    %1282 = vmatprep.mubr.f32.mxu0 0.0
    %1283 = vmatmul.mubr.f32.gmra.mxu0 %v1183
    %v1284 = vpop.f32.mrf.mxu0
    %v1285 = vadd.f32 %v1162, %v1284
    %v1286 = vpop.f32.mrf.mxu0
    %1287 = vmatprep.mubr.f32.mxu0 0.0
    %1288 = vmatmul.mubr.f32.gmra.mxu0 %v1186
    %v1289 = vpop.f32.mrf.mxu0
    %v1290 = vadd.f32 %v1162, %v1289
    %v1291 = vpop.f32.mrf.mxu0
    %1292 = vdwg.mxu0
    %1293 = vst.msk [vmem:[#allocation2] sm:$0xff] %vm272, %v1255
    %1294 = vst.msk [vmem:[#allocation2 + $0x8] sm:$0xff] %vm272, %v1260
    %1295 = vst.msk [vmem:[#allocation2 + $0x10] sm:$0xff] %vm272, %v1265
    %1296 = vst.msk [vmem:[#allocation2 + $0x18] sm:$0xff] %vm272, %v1270
    %1297 = vst.msk [vmem:[#allocation2 + $0x20] sm:$0xff] %vm272, %v1275
    %1298 = vst.msk [vmem:[#allocation2 + $0x28] sm:$0xff] %vm272, %v1280
    %1299 = vst.msk [vmem:[#allocation2 + $0x30] sm:$0xff] %vm272, %v1285
    %1300 = vst.msk [vmem:[#allocation2 + $0x38] sm:$0xff] %vm272, %v1290
    %v1301 = vld [vmem:[%s9] sm:$0x1]
    %v1303 = vlaneseq
    %v1304 = vshrl.u32 %v1303, 7
    %v1305 = vsub.s32 0, %v1304
    %v1306 = vrot.slane %v1301, %v1305
    %s1308 = scalar_lea.vmem [#allocation7], 8
    %v1309 = vld [vmem:[%s1308] sm:$0xff]
    %v1311 = vsel %vm289, %v1309, 0
    %1313 = vmatprep.subr.mxu0 0.0
    %1314 = vmatpush1.msra.mxu0 0.0
    %1315 = vmatprep.subr.mxu0 0.0
    %1316 = vmatpush1.msra.mxu0 0.0
    %1317 = vmatprep.subr.mxu0 0.0
    %1318 = vmatpush1.msra.mxu0 0.0
    %1319 = vmatprep.subr.mxu0 0.0
    %1320 = vmatpush1.msra.mxu0 0.0
    %1321 = vmatprep.subr.mxu0 0.0
    %1322 = vmatpush1.msra.mxu0 0.0
    %1323 = vmatprep.subr.mxu0 0.0
    %1324 = vmatpush1.msra.mxu0 0.0
    %1325 = vmatprep.subr.mxu0 0.0
    %1326 = vmatpush1.msra.mxu0 0.0
    %1327 = vmatprep.subr.mxu0 0.0
    %1328 = vmatpush1.msra.mxu0 0.0
    %1329 = vmatprep.subr.mxu0 0.0
    %1330 = vmatpush1.msra.mxu0 0.0
    %1331 = vmatprep.subr.mxu0 0.0
    %1332 = vmatpush1.msra.mxu0 0.0
    %1333 = vmatprep.subr.mxu0 0.0
    %1334 = vmatpush1.msra.mxu0 0.0
    %1335 = vmatprep.subr.mxu0 0.0
    %1336 = vmatpush1.msra.mxu0 0.0
    %1337 = vmatprep.subr.mxu0 0.0
    %1338 = vmatpush1.msra.mxu0 %v1156
    %1339 = vmatprep.subr.mxu0 0.0
    %1340 = vmatpush1.msra.mxu0 %v1155
    %1341 = vmatprep.subr.mxu0 0.0
    %1342 = vmatpush1.msra.mxu0 %v1154
    %1343 = vmatprep.subr.mxu0 0.0
    %1344 = vmatpush1.msra.mxu0 %v1153
    %1345 = vmatprep.subr.mxu0 0.0
    %1346 = vmatpush2.msra.mxu0 0.0
    %1347 = vmatprep.subr.mxu0 0.0
    %1348 = vmatpush2.msra.mxu0 0.0
    %1349 = vmatprep.subr.mxu0 0.0
    %1350 = vmatpush2.msra.mxu0 0.0
    %1351 = vmatprep.subr.mxu0 0.0
    %1352 = vmatpush2.msra.mxu0 0.0
    %1353 = vmatprep.subr.mxu0 0.0
    %1354 = vmatpush2.msra.mxu0 0.0
    %1355 = vmatprep.subr.mxu0 0.0
    %1356 = vmatpush2.msra.mxu0 0.0
    %1357 = vmatprep.subr.mxu0 0.0
    %1358 = vmatpush2.msra.mxu0 0.0
    %1359 = vmatprep.subr.mxu0 0.0
    %1360 = vmatpush2.msra.mxu0 0.0
    %1361 = vmatprep.subr.mxu0 0.0
    %1362 = vmatpush2.msra.mxu0 0.0
    %1363 = vmatprep.subr.mxu0 0.0
    %1364 = vmatpush2.msra.mxu0 0.0
    %1365 = vmatprep.subr.mxu0 0.0
    %1366 = vmatpush2.msra.mxu0 0.0
    %1367 = vmatprep.subr.mxu0 0.0
    %1368 = vmatpush2.msra.mxu0 0.0
    %1369 = vmatprep.subr.mxu0 0.0
    %1370 = vmatpush2.msra.mxu0 0.0
    %1371 = vmatprep.subr.mxu0 0.0
    %1372 = vmatpush2.msra.mxu0 0.0
    %1373 = vmatprep.subr.mxu0 0.0
    %1374 = vmatpush2.msra.mxu0 0.0
    %1375 = vmatprep.subr.mxu0 0.0
    %1376 = vmatpush2.msra.mxu0 0.0
    %1377 = vmatprep.mubr.f32.mxu0 0.0
    %1378 = vmatmul.mubr.f32.gmra.mxu0 %v1311
    %v1379 = vpop.f32.mrf.mxu0
    %v1380 = vadd.f32 %v1306, %v1379
    %v1381 = vpop.f32.mrf.mxu0
    %1382 = vdwg.mxu0
    %v1383 = vld [vmem:[#allocation2] sm:$0xff]
    %v1384 = vadd.f32 %v1383, %v1380
    %v1385 = vxor.u32 %v1384, 2147483648
    %v1386 = vmul.f32 %v1385, 1.442695
    %v1387 = vpow.pop %v1386
    %v1388 = vadd.f32 %v1387, 1.0
    %v1389 = vrcp.pop %v1388
    %v1390 = vmul.f32 1.0, %v1389
    %1392 = vrot.lane.b32.xlu0 %v1380, 64
    %v1393 = vpop.permute.xlu0 %1392
    %v1395 = vmul.f32 %v1390, %v1393
    %1397 = vrot.lane.b32.xlu0 %v1395, 64
    %v1398 = vpop.permute.xlu0 %1397
    %v1400 = vadd.f32 %v1383, %v1398
    %v1401 = vtanh.pop %v1400
    %v1402 = vsub.f32 1.0, %v1390
    %1404 = vrot.lane.b32.xlu0 %v1401, 96
    %v1405 = vpop.permute.xlu0 %1404
    %v1407 = vmul.f32 %v1402, %v1405
    %1408 = vrot.lane.b32.xlu0 %v1309, 32
    %v1409 = vpop.permute.xlu0 %1408
    %v1411 = vmul.f32 %v1390, %v1409
    %v1412 = vadd.f32 %v1407, %v1411
    %1414 = vrot.lane.b32.xlu0 %v1412, 96
    %v1415 = vpop.permute.xlu0 %1414
    %1417 = vst.msk [vmem:[#allocation15] sm:$0xff] %vm289, %v1415
    %v1418 = vsel %vm289, %v1415, 0
    %1420 = vmatprep.subr.mxu0 0.0
    %1421 = vmatpush1.msra.mxu0 0.0
    %1422 = vmatprep.subr.mxu0 0.0
    %1423 = vmatpush1.msra.mxu0 0.0
    %1424 = vmatprep.subr.mxu0 0.0
    %1425 = vmatpush1.msra.mxu0 0.0
    %1426 = vmatprep.subr.mxu0 0.0
    %1427 = vmatpush1.msra.mxu0 0.0
    %1428 = vmatprep.subr.mxu0 0.0
    %1429 = vmatpush1.msra.mxu0 0.0
    %1430 = vmatprep.subr.mxu0 0.0
    %1431 = vmatpush1.msra.mxu0 0.0
    %1432 = vmatprep.subr.mxu0 0.0
    %1433 = vmatpush1.msra.mxu0 0.0
    %1434 = vmatprep.subr.mxu0 0.0
    %1435 = vmatpush1.msra.mxu0 0.0
    %1436 = vmatprep.subr.mxu0 0.0
    %1437 = vmatpush1.msra.mxu0 0.0
    %1438 = vmatprep.subr.mxu0 0.0
    %1439 = vmatpush1.msra.mxu0 0.0
    %1440 = vmatprep.subr.mxu0 0.0
    %1441 = vmatpush1.msra.mxu0 0.0
    %1442 = vmatprep.subr.mxu0 0.0
    %1443 = vmatpush1.msra.mxu0 0.0
    %1444 = vmatprep.subr.mxu0 0.0
    %1445 = vmatpush1.msra.mxu0 %v1156
    %1446 = vmatprep.subr.mxu0 0.0
    %1447 = vmatpush1.msra.mxu0 %v1155
    %1448 = vmatprep.subr.mxu0 0.0
    %1449 = vmatpush1.msra.mxu0 %v1154
    %1450 = vmatprep.subr.mxu0 0.0
    %1451 = vmatpush1.msra.mxu0 %v1153
    %1452 = vmatprep.subr.mxu0 0.0
    %1453 = vmatpush2.msra.mxu0 0.0
    %1454 = vmatprep.subr.mxu0 0.0
    %1455 = vmatpush2.msra.mxu0 0.0
    %1456 = vmatprep.subr.mxu0 0.0
    %1457 = vmatpush2.msra.mxu0 0.0
    %1458 = vmatprep.subr.mxu0 0.0
    %1459 = vmatpush2.msra.mxu0 0.0
    %1460 = vmatprep.subr.mxu0 0.0
    %1461 = vmatpush2.msra.mxu0 0.0
    %1462 = vmatprep.subr.mxu0 0.0
    %1463 = vmatpush2.msra.mxu0 0.0
    %1464 = vmatprep.subr.mxu0 0.0
    %1465 = vmatpush2.msra.mxu0 0.0
    %1466 = vmatprep.subr.mxu0 0.0
    %1467 = vmatpush2.msra.mxu0 0.0
    %1468 = vmatprep.subr.mxu0 0.0
    %1469 = vmatpush2.msra.mxu0 0.0
    %1470 = vmatprep.subr.mxu0 0.0
    %1471 = vmatpush2.msra.mxu0 0.0
    %1472 = vmatprep.subr.mxu0 0.0
    %1473 = vmatpush2.msra.mxu0 0.0
    %1474 = vmatprep.subr.mxu0 0.0
    %1475 = vmatpush2.msra.mxu0 0.0
    %1476 = vmatprep.subr.mxu0 0.0
    %1477 = vmatpush2.msra.mxu0 0.0
    %1478 = vmatprep.subr.mxu0 0.0
    %1479 = vmatpush2.msra.mxu0 0.0
    %1480 = vmatprep.subr.mxu0 0.0
    %1481 = vmatpush2.msra.mxu0 0.0
    %1482 = vmatprep.subr.mxu0 0.0
    %1483 = vmatpush2.msra.mxu0 0.0
    %1484 = vmatprep.mubr.f32.mxu0 0.0
    %1485 = vmatmul.mubr.f32.gmra.mxu0 %v1418
    %v1486 = vpop.f32.mrf.mxu0
    %v1487 = vadd.f32 %v1306, %v1486
    %v1488 = vpop.f32.mrf.mxu0
    %1489 = vdwg.mxu0
    %v1490 = vld [vmem:[%s470] sm:$0xff]
    %v1491 = vadd.f32 %v1490, %v1487
    %v1492 = vxor.u32 %v1491, 2147483648
    %v1493 = vmul.f32 %v1492, 1.442695
    %v1494 = vpow.pop %v1493
    %v1495 = vadd.f32 %v1494, 1.0
    %v1496 = vrcp.pop %v1495
    %v1497 = vmul.f32 1.0, %v1496
    %1499 = vrot.lane.b32.xlu0 %v1487, 64
    %v1500 = vpop.permute.xlu0 %1499
    %v1502 = vmul.f32 %v1497, %v1500
    %1504 = vrot.lane.b32.xlu0 %v1502, 64
    %v1505 = vpop.permute.xlu0 %1504
    %v1507 = vadd.f32 %v1490, %v1505
    %v1508 = vtanh.pop %v1507
    %v1509 = vsub.f32 1.0, %v1497
    %1511 = vrot.lane.b32.xlu0 %v1508, 96
    %v1512 = vpop.permute.xlu0 %1511
    %v1514 = vmul.f32 %v1509, %v1512
    %v1515 = vmul.f32 %v1497, %v1412
    %v1516 = vadd.f32 %v1514, %v1515
    %1518 = vrot.lane.b32.xlu0 %v1516, 96
    %v1519 = vpop.permute.xlu0 %1518
    %s1521 = scalar_lea.vmem [#allocation15], 8
    %1522 = vst.msk [vmem:[%s1521] sm:$0xff] %vm289, %v1519
    %v1523 = vsel %vm289, %v1519, 0
    %1525 = vmatprep.subr.mxu0 0.0
    %1526 = vmatpush1.msra.mxu0 0.0
    %1527 = vmatprep.subr.mxu0 0.0
    %1528 = vmatpush1.msra.mxu0 0.0
    %1529 = vmatprep.subr.mxu0 0.0
    %1530 = vmatpush1.msra.mxu0 0.0
    %1531 = vmatprep.subr.mxu0 0.0
    %1532 = vmatpush1.msra.mxu0 0.0
    %1533 = vmatprep.subr.mxu0 0.0
    %1534 = vmatpush1.msra.mxu0 0.0
    %1535 = vmatprep.subr.mxu0 0.0
    %1536 = vmatpush1.msra.mxu0 0.0
    %1537 = vmatprep.subr.mxu0 0.0
    %1538 = vmatpush1.msra.mxu0 0.0
    %1539 = vmatprep.subr.mxu0 0.0
    %1540 = vmatpush1.msra.mxu0 0.0
    %1541 = vmatprep.subr.mxu0 0.0
    %1542 = vmatpush1.msra.mxu0 0.0
    %1543 = vmatprep.subr.mxu0 0.0
    %1544 = vmatpush1.msra.mxu0 0.0
    %1545 = vmatprep.subr.mxu0 0.0
    %1546 = vmatpush1.msra.mxu0 0.0
    %1547 = vmatprep.subr.mxu0 0.0
    %1548 = vmatpush1.msra.mxu0 0.0
    %1549 = vmatprep.subr.mxu0 0.0
    %1550 = vmatpush1.msra.mxu0 %v1156
    %1551 = vmatprep.subr.mxu0 0.0
    %1552 = vmatpush1.msra.mxu0 %v1155
    %1553 = vmatprep.subr.mxu0 0.0
    %1554 = vmatpush1.msra.mxu0 %v1154
    %1555 = vmatprep.subr.mxu0 0.0
    %1556 = vmatpush1.msra.mxu0 %v1153
    %1557 = vmatprep.subr.mxu0 0.0
    %1558 = vmatpush2.msra.mxu0 0.0
    %1559 = vmatprep.subr.mxu0 0.0
    %1560 = vmatpush2.msra.mxu0 0.0
    %1561 = vmatprep.subr.mxu0 0.0
    %1562 = vmatpush2.msra.mxu0 0.0
    %1563 = vmatprep.subr.mxu0 0.0
    %1564 = vmatpush2.msra.mxu0 0.0
    %1565 = vmatprep.subr.mxu0 0.0
    %1566 = vmatpush2.msra.mxu0 0.0
    %1567 = vmatprep.subr.mxu0 0.0
    %1568 = vmatpush2.msra.mxu0 0.0
    %1569 = vmatprep.subr.mxu0 0.0
    %1570 = vmatpush2.msra.mxu0 0.0
    %1571 = vmatprep.subr.mxu0 0.0
    %1572 = vmatpush2.msra.mxu0 0.0
    %1573 = vmatprep.subr.mxu0 0.0
    %1574 = vmatpush2.msra.mxu0 0.0
    %1575 = vmatprep.subr.mxu0 0.0
    %1576 = vmatpush2.msra.mxu0 0.0
    %1577 = vmatprep.subr.mxu0 0.0
    %1578 = vmatpush2.msra.mxu0 0.0
    %1579 = vmatprep.subr.mxu0 0.0
    %1580 = vmatpush2.msra.mxu0 0.0
    %1581 = vmatprep.subr.mxu0 0.0
    %1582 = vmatpush2.msra.mxu0 0.0
    %1583 = vmatprep.subr.mxu0 0.0
    %1584 = vmatpush2.msra.mxu0 0.0
    %1585 = vmatprep.subr.mxu0 0.0
    %1586 = vmatpush2.msra.mxu0 0.0
    %1587 = vmatprep.subr.mxu0 0.0
    %1588 = vmatpush2.msra.mxu0 0.0
    %1589 = vmatprep.mubr.f32.mxu0 0.0
    %1590 = vmatmul.mubr.f32.gmra.mxu0 %v1523
    %v1591 = vpop.f32.mrf.mxu0
    %v1592 = vadd.f32 %v1306, %v1591
    %v1593 = vpop.f32.mrf.mxu0
    %1594 = vdwg.mxu0
    %v1595 = vld [vmem:[%s576] sm:$0xff]
    %v1596 = vadd.f32 %v1595, %v1592
    %v1597 = vxor.u32 %v1596, 2147483648
    %v1598 = vmul.f32 %v1597, 1.442695
    %v1599 = vpow.pop %v1598
    %v1600 = vadd.f32 %v1599, 1.0
    %v1601 = vrcp.pop %v1600
    %v1602 = vmul.f32 1.0, %v1601
    %1604 = vrot.lane.b32.xlu0 %v1592, 64
    %v1605 = vpop.permute.xlu0 %1604
    %v1607 = vmul.f32 %v1602, %v1605
    %1609 = vrot.lane.b32.xlu0 %v1607, 64
    %v1610 = vpop.permute.xlu0 %1609
    %v1612 = vadd.f32 %v1595, %v1610
    %v1613 = vtanh.pop %v1612
    %v1614 = vsub.f32 1.0, %v1602
    %1616 = vrot.lane.b32.xlu0 %v1613, 96
    %v1617 = vpop.permute.xlu0 %1616
    %v1619 = vmul.f32 %v1614, %v1617
    %v1620 = vmul.f32 %v1602, %v1516
    %v1621 = vadd.f32 %v1619, %v1620
    %1623 = vrot.lane.b32.xlu0 %v1621, 96
    %v1624 = vpop.permute.xlu0 %1623
    %s1626 = scalar_lea.vmem [#allocation15], 16
    %1627 = vst.msk [vmem:[%s1626] sm:$0xff] %vm289, %v1624
    %v1628 = vsel %vm289, %v1624, 0
    %1630 = vmatprep.subr.mxu0 0.0
    %1631 = vmatpush1.msra.mxu0 0.0
    %1632 = vmatprep.subr.mxu0 0.0
    %1633 = vmatpush1.msra.mxu0 0.0
    %1634 = vmatprep.subr.mxu0 0.0
    %1635 = vmatpush1.msra.mxu0 0.0
    %1636 = vmatprep.subr.mxu0 0.0
    %1637 = vmatpush1.msra.mxu0 0.0
    %1638 = vmatprep.subr.mxu0 0.0
    %1639 = vmatpush1.msra.mxu0 0.0
    %1640 = vmatprep.subr.mxu0 0.0
    %1641 = vmatpush1.msra.mxu0 0.0
    %1642 = vmatprep.subr.mxu0 0.0
    %1643 = vmatpush1.msra.mxu0 0.0
    %1644 = vmatprep.subr.mxu0 0.0
    %1645 = vmatpush1.msra.mxu0 0.0
    %1646 = vmatprep.subr.mxu0 0.0
    %1647 = vmatpush1.msra.mxu0 0.0
    %1648 = vmatprep.subr.mxu0 0.0
    %1649 = vmatpush1.msra.mxu0 0.0
    %1650 = vmatprep.subr.mxu0 0.0
    %1651 = vmatpush1.msra.mxu0 0.0
    %1652 = vmatprep.subr.mxu0 0.0
    %1653 = vmatpush1.msra.mxu0 0.0
    %1654 = vmatprep.subr.mxu0 0.0
    %1655 = vmatpush1.msra.mxu0 %v1156
    %1656 = vmatprep.subr.mxu0 0.0
    %1657 = vmatpush1.msra.mxu0 %v1155
    %1658 = vmatprep.subr.mxu0 0.0
    %1659 = vmatpush1.msra.mxu0 %v1154
    %1660 = vmatprep.subr.mxu0 0.0
    %1661 = vmatpush1.msra.mxu0 %v1153
    %1662 = vmatprep.subr.mxu0 0.0
    %1663 = vmatpush2.msra.mxu0 0.0
    %1664 = vmatprep.subr.mxu0 0.0
    %1665 = vmatpush2.msra.mxu0 0.0
    %1666 = vmatprep.subr.mxu0 0.0
    %1667 = vmatpush2.msra.mxu0 0.0
    %1668 = vmatprep.subr.mxu0 0.0
    %1669 = vmatpush2.msra.mxu0 0.0
    %1670 = vmatprep.subr.mxu0 0.0
    %1671 = vmatpush2.msra.mxu0 0.0
    %1672 = vmatprep.subr.mxu0 0.0
    %1673 = vmatpush2.msra.mxu0 0.0
    %1674 = vmatprep.subr.mxu0 0.0
    %1675 = vmatpush2.msra.mxu0 0.0
    %1676 = vmatprep.subr.mxu0 0.0
    %1677 = vmatpush2.msra.mxu0 0.0
    %1678 = vmatprep.subr.mxu0 0.0
    %1679 = vmatpush2.msra.mxu0 0.0
    %1680 = vmatprep.subr.mxu0 0.0
    %1681 = vmatpush2.msra.mxu0 0.0
    %1682 = vmatprep.subr.mxu0 0.0
    %1683 = vmatpush2.msra.mxu0 0.0
    %1684 = vmatprep.subr.mxu0 0.0
    %1685 = vmatpush2.msra.mxu0 0.0
    %1686 = vmatprep.subr.mxu0 0.0
    %1687 = vmatpush2.msra.mxu0 0.0
    %1688 = vmatprep.subr.mxu0 0.0
    %1689 = vmatpush2.msra.mxu0 0.0
    %1690 = vmatprep.subr.mxu0 0.0
    %1691 = vmatpush2.msra.mxu0 0.0
    %1692 = vmatprep.subr.mxu0 0.0
    %1693 = vmatpush2.msra.mxu0 0.0
    %1694 = vmatprep.mubr.f32.mxu0 0.0
    %1695 = vmatmul.mubr.f32.gmra.mxu0 %v1628
    %v1696 = vpop.f32.mrf.mxu0
    %v1697 = vadd.f32 %v1306, %v1696
    %v1698 = vpop.f32.mrf.mxu0
    %1699 = vdwg.mxu0
    %v1700 = vld [vmem:[%s682] sm:$0xff]
    %v1701 = vadd.f32 %v1700, %v1697
    %v1702 = vxor.u32 %v1701, 2147483648
    %v1703 = vmul.f32 %v1702, 1.442695
    %v1704 = vpow.pop %v1703
    %v1705 = vadd.f32 %v1704, 1.0
    %v1706 = vrcp.pop %v1705
    %v1707 = vmul.f32 1.0, %v1706
    %1709 = vrot.lane.b32.xlu0 %v1697, 64
    %v1710 = vpop.permute.xlu0 %1709
    %v1712 = vmul.f32 %v1707, %v1710
    %1714 = vrot.lane.b32.xlu0 %v1712, 64
    %v1715 = vpop.permute.xlu0 %1714
    %v1717 = vadd.f32 %v1700, %v1715
    %v1718 = vtanh.pop %v1717
    %v1719 = vsub.f32 1.0, %v1707
    %1721 = vrot.lane.b32.xlu0 %v1718, 96
    %v1722 = vpop.permute.xlu0 %1721
    %v1724 = vmul.f32 %v1719, %v1722
    %v1725 = vmul.f32 %v1707, %v1621
    %v1726 = vadd.f32 %v1724, %v1725
    %1728 = vrot.lane.b32.xlu0 %v1726, 96
    %v1729 = vpop.permute.xlu0 %1728
    %s1731 = scalar_lea.vmem [#allocation15], 24
    %1732 = vst.msk [vmem:[%s1731] sm:$0xff] %vm289, %v1729
    %v1733 = vsel %vm289, %v1729, 0
    %1735 = vmatprep.subr.mxu0 0.0
    %1736 = vmatpush1.msra.mxu0 0.0
    %1737 = vmatprep.subr.mxu0 0.0
    %1738 = vmatpush1.msra.mxu0 0.0
    %1739 = vmatprep.subr.mxu0 0.0
    %1740 = vmatpush1.msra.mxu0 0.0
    %1741 = vmatprep.subr.mxu0 0.0
    %1742 = vmatpush1.msra.mxu0 0.0
    %1743 = vmatprep.subr.mxu0 0.0
    %1744 = vmatpush1.msra.mxu0 0.0
    %1745 = vmatprep.subr.mxu0 0.0
    %1746 = vmatpush1.msra.mxu0 0.0
    %1747 = vmatprep.subr.mxu0 0.0
    %1748 = vmatpush1.msra.mxu0 0.0
    %1749 = vmatprep.subr.mxu0 0.0
    %1750 = vmatpush1.msra.mxu0 0.0
    %1751 = vmatprep.subr.mxu0 0.0
    %1752 = vmatpush1.msra.mxu0 0.0
    %1753 = vmatprep.subr.mxu0 0.0
    %1754 = vmatpush1.msra.mxu0 0.0
    %1755 = vmatprep.subr.mxu0 0.0
    %1756 = vmatpush1.msra.mxu0 0.0
    %1757 = vmatprep.subr.mxu0 0.0
    %1758 = vmatpush1.msra.mxu0 0.0
    %1759 = vmatprep.subr.mxu0 0.0
    %1760 = vmatpush1.msra.mxu0 %v1156
    %1761 = vmatprep.subr.mxu0 0.0
    %1762 = vmatpush1.msra.mxu0 %v1155
    %1763 = vmatprep.subr.mxu0 0.0
    %1764 = vmatpush1.msra.mxu0 %v1154
    %1765 = vmatprep.subr.mxu0 0.0
    %1766 = vmatpush1.msra.mxu0 %v1153
    %1767 = vmatprep.subr.mxu0 0.0
    %1768 = vmatpush2.msra.mxu0 0.0
    %1769 = vmatprep.subr.mxu0 0.0
    %1770 = vmatpush2.msra.mxu0 0.0
    %1771 = vmatprep.subr.mxu0 0.0
    %1772 = vmatpush2.msra.mxu0 0.0
    %1773 = vmatprep.subr.mxu0 0.0
    %1774 = vmatpush2.msra.mxu0 0.0
    %1775 = vmatprep.subr.mxu0 0.0
    %1776 = vmatpush2.msra.mxu0 0.0
    %1777 = vmatprep.subr.mxu0 0.0
    %1778 = vmatpush2.msra.mxu0 0.0
    %1779 = vmatprep.subr.mxu0 0.0
    %1780 = vmatpush2.msra.mxu0 0.0
    %1781 = vmatprep.subr.mxu0 0.0
    %1782 = vmatpush2.msra.mxu0 0.0
    %1783 = vmatprep.subr.mxu0 0.0
    %1784 = vmatpush2.msra.mxu0 0.0
    %1785 = vmatprep.subr.mxu0 0.0
    %1786 = vmatpush2.msra.mxu0 0.0
    %1787 = vmatprep.subr.mxu0 0.0
    %1788 = vmatpush2.msra.mxu0 0.0
    %1789 = vmatprep.subr.mxu0 0.0
    %1790 = vmatpush2.msra.mxu0 0.0
    %1791 = vmatprep.subr.mxu0 0.0
    %1792 = vmatpush2.msra.mxu0 0.0
    %1793 = vmatprep.subr.mxu0 0.0
    %1794 = vmatpush2.msra.mxu0 0.0
    %1795 = vmatprep.subr.mxu0 0.0
    %1796 = vmatpush2.msra.mxu0 0.0
    %1797 = vmatprep.subr.mxu0 0.0
    %1798 = vmatpush2.msra.mxu0 0.0
    %1799 = vmatprep.mubr.f32.mxu0 0.0
    %1800 = vmatmul.mubr.f32.gmra.mxu0 %v1733
    %v1801 = vpop.f32.mrf.mxu0
    %v1802 = vadd.f32 %v1306, %v1801
    %v1803 = vpop.f32.mrf.mxu0
    %1804 = vdwg.mxu0
    %v1805 = vld [vmem:[%s788] sm:$0xff]
    %v1806 = vadd.f32 %v1805, %v1802
    %v1807 = vxor.u32 %v1806, 2147483648
    %v1808 = vmul.f32 %v1807, 1.442695
    %v1809 = vpow.pop %v1808
    %v1810 = vadd.f32 %v1809, 1.0
    %v1811 = vrcp.pop %v1810
    %v1812 = vmul.f32 1.0, %v1811
    %1814 = vrot.lane.b32.xlu0 %v1802, 64
    %v1815 = vpop.permute.xlu0 %1814
    %v1817 = vmul.f32 %v1812, %v1815
    %1819 = vrot.lane.b32.xlu0 %v1817, 64
    %v1820 = vpop.permute.xlu0 %1819
    %v1822 = vadd.f32 %v1805, %v1820
    %v1823 = vtanh.pop %v1822
    %v1824 = vsub.f32 1.0, %v1812
    %1826 = vrot.lane.b32.xlu0 %v1823, 96
    %v1827 = vpop.permute.xlu0 %1826
    %v1829 = vmul.f32 %v1824, %v1827
    %v1830 = vmul.f32 %v1812, %v1726
    %v1831 = vadd.f32 %v1829, %v1830
    %1833 = vrot.lane.b32.xlu0 %v1831, 96
    %v1834 = vpop.permute.xlu0 %1833
    %s1836 = scalar_lea.vmem [#allocation15], 32
    %1837 = vst.msk [vmem:[%s1836] sm:$0xff] %vm289, %v1834
    %v1838 = vsel %vm289, %v1834, 0
    %1840 = vmatprep.subr.mxu0 0.0
    %1841 = vmatpush1.msra.mxu0 0.0
    %1842 = vmatprep.subr.mxu0 0.0
    %1843 = vmatpush1.msra.mxu0 0.0
    %1844 = vmatprep.subr.mxu0 0.0
    %1845 = vmatpush1.msra.mxu0 0.0
    %1846 = vmatprep.subr.mxu0 0.0
    %1847 = vmatpush1.msra.mxu0 0.0
    %1848 = vmatprep.subr.mxu0 0.0
    %1849 = vmatpush1.msra.mxu0 0.0
    %1850 = vmatprep.subr.mxu0 0.0
    %1851 = vmatpush1.msra.mxu0 0.0
    %1852 = vmatprep.subr.mxu0 0.0
    %1853 = vmatpush1.msra.mxu0 0.0
    %1854 = vmatprep.subr.mxu0 0.0
    %1855 = vmatpush1.msra.mxu0 0.0
    %1856 = vmatprep.subr.mxu0 0.0
    %1857 = vmatpush1.msra.mxu0 0.0
    %1858 = vmatprep.subr.mxu0 0.0
    %1859 = vmatpush1.msra.mxu0 0.0
    %1860 = vmatprep.subr.mxu0 0.0
    %1861 = vmatpush1.msra.mxu0 0.0
    %1862 = vmatprep.subr.mxu0 0.0
    %1863 = vmatpush1.msra.mxu0 0.0
    %1864 = vmatprep.subr.mxu0 0.0
    %1865 = vmatpush1.msra.mxu0 %v1156
    %1866 = vmatprep.subr.mxu0 0.0
    %1867 = vmatpush1.msra.mxu0 %v1155
    %1868 = vmatprep.subr.mxu0 0.0
    %1869 = vmatpush1.msra.mxu0 %v1154
    %1870 = vmatprep.subr.mxu0 0.0
    %1871 = vmatpush1.msra.mxu0 %v1153
    %1872 = vmatprep.subr.mxu0 0.0
    %1873 = vmatpush2.msra.mxu0 0.0
    %1874 = vmatprep.subr.mxu0 0.0
    %1875 = vmatpush2.msra.mxu0 0.0
    %1876 = vmatprep.subr.mxu0 0.0
    %1877 = vmatpush2.msra.mxu0 0.0
    %1878 = vmatprep.subr.mxu0 0.0
    %1879 = vmatpush2.msra.mxu0 0.0
    %1880 = vmatprep.subr.mxu0 0.0
    %1881 = vmatpush2.msra.mxu0 0.0
    %1882 = vmatprep.subr.mxu0 0.0
    %1883 = vmatpush2.msra.mxu0 0.0
    %1884 = vmatprep.subr.mxu0 0.0
    %1885 = vmatpush2.msra.mxu0 0.0
    %1886 = vmatprep.subr.mxu0 0.0
    %1887 = vmatpush2.msra.mxu0 0.0
    %1888 = vmatprep.subr.mxu0 0.0
    %1889 = vmatpush2.msra.mxu0 0.0
    %1890 = vmatprep.subr.mxu0 0.0
    %1891 = vmatpush2.msra.mxu0 0.0
    %1892 = vmatprep.subr.mxu0 0.0
    %1893 = vmatpush2.msra.mxu0 0.0
    %1894 = vmatprep.subr.mxu0 0.0
    %1895 = vmatpush2.msra.mxu0 0.0
    %1896 = vmatprep.subr.mxu0 0.0
    %1897 = vmatpush2.msra.mxu0 0.0
    %1898 = vmatprep.subr.mxu0 0.0
    %1899 = vmatpush2.msra.mxu0 0.0
    %1900 = vmatprep.subr.mxu0 0.0
    %1901 = vmatpush2.msra.mxu0 0.0
    %1902 = vmatprep.subr.mxu0 0.0
    %1903 = vmatpush2.msra.mxu0 0.0
    %1904 = vmatprep.mubr.f32.mxu0 0.0
    %1905 = vmatmul.mubr.f32.gmra.mxu0 %v1838
    %v1906 = vpop.f32.mrf.mxu0
    %v1907 = vadd.f32 %v1306, %v1906
    %v1908 = vpop.f32.mrf.mxu0
    %1909 = vdwg.mxu0
    %v1910 = vld [vmem:[%s894] sm:$0xff]
    %v1911 = vadd.f32 %v1910, %v1907
    %v1912 = vxor.u32 %v1911, 2147483648
    %v1913 = vmul.f32 %v1912, 1.442695
    %v1914 = vpow.pop %v1913
    %v1915 = vadd.f32 %v1914, 1.0
    %v1916 = vrcp.pop %v1915
    %v1917 = vmul.f32 1.0, %v1916
    %1919 = vrot.lane.b32.xlu0 %v1907, 64
    %v1920 = vpop.permute.xlu0 %1919
    %v1922 = vmul.f32 %v1917, %v1920
    %1924 = vrot.lane.b32.xlu0 %v1922, 64
    %v1925 = vpop.permute.xlu0 %1924
    %v1927 = vadd.f32 %v1910, %v1925
    %v1928 = vtanh.pop %v1927
    %v1929 = vsub.f32 1.0, %v1917
    %1931 = vrot.lane.b32.xlu0 %v1928, 96
    %v1932 = vpop.permute.xlu0 %1931
    %v1934 = vmul.f32 %v1929, %v1932
    %v1935 = vmul.f32 %v1917, %v1831
    %v1936 = vadd.f32 %v1934, %v1935
    %1938 = vrot.lane.b32.xlu0 %v1936, 96
    %v1939 = vpop.permute.xlu0 %1938
    %s1941 = scalar_lea.vmem [#allocation15], 40
    %1942 = vst.msk [vmem:[%s1941] sm:$0xff] %vm289, %v1939
    %v1943 = vsel %vm289, %v1939, 0
    %1945 = vmatprep.subr.mxu0 0.0
    %1946 = vmatpush1.msra.mxu0 0.0
    %1947 = vmatprep.subr.mxu0 0.0
    %1948 = vmatpush1.msra.mxu0 0.0
    %1949 = vmatprep.subr.mxu0 0.0
    %1950 = vmatpush1.msra.mxu0 0.0
    %1951 = vmatprep.subr.mxu0 0.0
    %1952 = vmatpush1.msra.mxu0 0.0
    %1953 = vmatprep.subr.mxu0 0.0
    %1954 = vmatpush1.msra.mxu0 0.0
    %1955 = vmatprep.subr.mxu0 0.0
    %1956 = vmatpush1.msra.mxu0 0.0
    %1957 = vmatprep.subr.mxu0 0.0
    %1958 = vmatpush1.msra.mxu0 0.0
    %1959 = vmatprep.subr.mxu0 0.0
    %1960 = vmatpush1.msra.mxu0 0.0
    %1961 = vmatprep.subr.mxu0 0.0
    %1962 = vmatpush1.msra.mxu0 0.0
    %1963 = vmatprep.subr.mxu0 0.0
    %1964 = vmatpush1.msra.mxu0 0.0
    %1965 = vmatprep.subr.mxu0 0.0
    %1966 = vmatpush1.msra.mxu0 0.0
    %1967 = vmatprep.subr.mxu0 0.0
    %1968 = vmatpush1.msra.mxu0 0.0
    %1969 = vmatprep.subr.mxu0 0.0
    %1970 = vmatpush1.msra.mxu0 %v1156
    %1971 = vmatprep.subr.mxu0 0.0
    %1972 = vmatpush1.msra.mxu0 %v1155
    %1973 = vmatprep.subr.mxu0 0.0
    %1974 = vmatpush1.msra.mxu0 %v1154
    %1975 = vmatprep.subr.mxu0 0.0
    %1976 = vmatpush1.msra.mxu0 %v1153
    %1977 = vmatprep.subr.mxu0 0.0
    %1978 = vmatpush2.msra.mxu0 0.0
    %1979 = vmatprep.subr.mxu0 0.0
    %1980 = vmatpush2.msra.mxu0 0.0
    %1981 = vmatprep.subr.mxu0 0.0
    %1982 = vmatpush2.msra.mxu0 0.0
    %1983 = vmatprep.subr.mxu0 0.0
    %1984 = vmatpush2.msra.mxu0 0.0
    %1985 = vmatprep.subr.mxu0 0.0
    %1986 = vmatpush2.msra.mxu0 0.0
    %1987 = vmatprep.subr.mxu0 0.0
    %1988 = vmatpush2.msra.mxu0 0.0
    %1989 = vmatprep.subr.mxu0 0.0
    %1990 = vmatpush2.msra.mxu0 0.0
    %1991 = vmatprep.subr.mxu0 0.0
    %1992 = vmatpush2.msra.mxu0 0.0
    %1993 = vmatprep.subr.mxu0 0.0
    %1994 = vmatpush2.msra.mxu0 0.0
    %1995 = vmatprep.subr.mxu0 0.0
    %1996 = vmatpush2.msra.mxu0 0.0
    %1997 = vmatprep.subr.mxu0 0.0
    %1998 = vmatpush2.msra.mxu0 0.0
    %1999 = vmatprep.subr.mxu0 0.0
    %2000 = vmatpush2.msra.mxu0 0.0
    %2001 = vmatprep.subr.mxu0 0.0
    %2002 = vmatpush2.msra.mxu0 0.0
    %2003 = vmatprep.subr.mxu0 0.0
    %2004 = vmatpush2.msra.mxu0 0.0
    %2005 = vmatprep.subr.mxu0 0.0
    %2006 = vmatpush2.msra.mxu0 0.0
    %2007 = vmatprep.subr.mxu0 0.0
    %2008 = vmatpush2.msra.mxu0 0.0
    %2009 = vmatprep.mubr.f32.mxu0 0.0
    %2010 = vmatmul.mubr.f32.gmra.mxu0 %v1943
    %v2011 = vpop.f32.mrf.mxu0
    %v2012 = vadd.f32 %v1306, %v2011
    %v2013 = vpop.f32.mrf.mxu0
    %2014 = vdwg.mxu0
    %v2015 = vld [vmem:[%s1000] sm:$0xff]
    %v2016 = vadd.f32 %v2015, %v2012
    %v2017 = vxor.u32 %v2016, 2147483648
    %v2018 = vmul.f32 %v2017, 1.442695
    %v2019 = vpow.pop %v2018
    %v2020 = vadd.f32 %v2019, 1.0
    %v2021 = vrcp.pop %v2020
    %v2022 = vmul.f32 1.0, %v2021
    %2024 = vrot.lane.b32.xlu0 %v2012, 64
    %v2025 = vpop.permute.xlu0 %2024
    %v2027 = vmul.f32 %v2022, %v2025
    %2029 = vrot.lane.b32.xlu0 %v2027, 64
    %v2030 = vpop.permute.xlu0 %2029
    %v2032 = vadd.f32 %v2015, %v2030
    %v2033 = vtanh.pop %v2032
    %v2034 = vsub.f32 1.0, %v2022
    %2036 = vrot.lane.b32.xlu0 %v2033, 96
    %v2037 = vpop.permute.xlu0 %2036
    %v2039 = vmul.f32 %v2034, %v2037
    %v2040 = vmul.f32 %v2022, %v1936
    %v2041 = vadd.f32 %v2039, %v2040
    %2043 = vrot.lane.b32.xlu0 %v2041, 96
    %v2044 = vpop.permute.xlu0 %2043
    %s2046 = scalar_lea.vmem [#allocation15], 48
    %2047 = vst.msk [vmem:[%s2046] sm:$0xff] %vm289, %v2044
    %v2048 = vsel %vm289, %v2044, 0
    %2050 = vmatprep.subr.mxu0 0.0
    %2051 = vmatpush1.msra.mxu0 0.0
    %2052 = vmatprep.subr.mxu0 0.0
    %2053 = vmatpush1.msra.mxu0 0.0
    %2054 = vmatprep.subr.mxu0 0.0
    %2055 = vmatpush1.msra.mxu0 0.0
    %2056 = vmatprep.subr.mxu0 0.0
    %2057 = vmatpush1.msra.mxu0 0.0
    %2058 = vmatprep.subr.mxu0 0.0
    %2059 = vmatpush1.msra.mxu0 0.0
    %2060 = vmatprep.subr.mxu0 0.0
    %2061 = vmatpush1.msra.mxu0 0.0
    %2062 = vmatprep.subr.mxu0 0.0
    %2063 = vmatpush1.msra.mxu0 0.0
    %2064 = vmatprep.subr.mxu0 0.0
    %2065 = vmatpush1.msra.mxu0 0.0
    %2066 = vmatprep.subr.mxu0 0.0
    %2067 = vmatpush1.msra.mxu0 0.0
    %2068 = vmatprep.subr.mxu0 0.0
    %2069 = vmatpush1.msra.mxu0 0.0
    %2070 = vmatprep.subr.mxu0 0.0
    %2071 = vmatpush1.msra.mxu0 0.0
    %2072 = vmatprep.subr.mxu0 0.0
    %2073 = vmatpush1.msra.mxu0 0.0
    %2074 = vmatprep.subr.mxu0 0.0
    %2075 = vmatpush1.msra.mxu0 %v1156
    %2076 = vmatprep.subr.mxu0 0.0
    %2077 = vmatpush1.msra.mxu0 %v1155
    %2078 = vmatprep.subr.mxu0 0.0
    %2079 = vmatpush1.msra.mxu0 %v1154
    %2080 = vmatprep.subr.mxu0 0.0
    %2081 = vmatpush1.msra.mxu0 %v1153
    %2082 = vmatprep.subr.mxu0 0.0
    %2083 = vmatpush2.msra.mxu0 0.0
    %2084 = vmatprep.subr.mxu0 0.0
    %2085 = vmatpush2.msra.mxu0 0.0
    %2086 = vmatprep.subr.mxu0 0.0
    %2087 = vmatpush2.msra.mxu0 0.0
    %2088 = vmatprep.subr.mxu0 0.0
    %2089 = vmatpush2.msra.mxu0 0.0
    %2090 = vmatprep.subr.mxu0 0.0
    %2091 = vmatpush2.msra.mxu0 0.0
    %2092 = vmatprep.subr.mxu0 0.0
    %2093 = vmatpush2.msra.mxu0 0.0
    %2094 = vmatprep.subr.mxu0 0.0
    %2095 = vmatpush2.msra.mxu0 0.0
    %2096 = vmatprep.subr.mxu0 0.0
    %2097 = vmatpush2.msra.mxu0 0.0
    %2098 = vmatprep.subr.mxu0 0.0
    %2099 = vmatpush2.msra.mxu0 0.0
    %2100 = vmatprep.subr.mxu0 0.0
    %2101 = vmatpush2.msra.mxu0 0.0
    %2102 = vmatprep.subr.mxu0 0.0
    %2103 = vmatpush2.msra.mxu0 0.0
    %2104 = vmatprep.subr.mxu0 0.0
    %2105 = vmatpush2.msra.mxu0 0.0
    %2106 = vmatprep.subr.mxu0 0.0
    %2107 = vmatpush2.msra.mxu0 0.0
    %2108 = vmatprep.subr.mxu0 0.0
    %2109 = vmatpush2.msra.mxu0 0.0
    %2110 = vmatprep.subr.mxu0 0.0
    %2111 = vmatpush2.msra.mxu0 0.0
    %2112 = vmatprep.subr.mxu0 0.0
    %2113 = vmatpush2.msra.mxu0 0.0
    %2114 = vmatprep.mubr.f32.mxu0 0.0
    %2115 = vmatmul.mubr.f32.gmra.mxu0 %v2048
    %v2116 = vpop.f32.mrf.mxu0
    %v2117 = vadd.f32 %v1306, %v2116
    %v2118 = vpop.f32.mrf.mxu0
    %2119 = vdwg.mxu0
    %v2120 = vld [vmem:[%s1106] sm:$0xff]
    %v2121 = vadd.f32 %v2120, %v2117
    %v2122 = vxor.u32 %v2121, 2147483648
    %v2123 = vmul.f32 %v2122, 1.442695
    %v2124 = vpow.pop %v2123
    %v2125 = vadd.f32 %v2124, 1.0
    %v2126 = vrcp.pop %v2125
    %v2127 = vmul.f32 1.0, %v2126
    %2129 = vrot.lane.b32.xlu0 %v2117, 64
    %v2130 = vpop.permute.xlu0 %2129
    %v2132 = vmul.f32 %v2127, %v2130
    %2134 = vrot.lane.b32.xlu0 %v2132, 64
    %v2135 = vpop.permute.xlu0 %2134
    %v2137 = vadd.f32 %v2120, %v2135
    %v2138 = vtanh.pop %v2137
    %v2139 = vsub.f32 1.0, %v2127
    %2141 = vrot.lane.b32.xlu0 %v2138, 96
    %v2142 = vpop.permute.xlu0 %2141
    %v2144 = vmul.f32 %v2139, %v2142
    %v2145 = vmul.f32 %v2127, %v2041
    %v2146 = vadd.f32 %v2144, %v2145
    %2148 = vrot.lane.b32.xlu0 %v2146, 96
    %v2149 = vpop.permute.xlu0 %2148
    %s2151 = scalar_lea.vmem [#allocation15], 56
    %2152 = vst.msk [vmem:[%s2151] sm:$0xff] %vm289, %v2149
    %s2153 = scalar_lea.vmem [#allocation16], 8
    %2154 = vst.msk [vmem:[%s2153] sm:$0xff] %vm289, %v2149
    // Predicated region
    $region66: #{tpu_custom_call.1} parent=1 // pred_check
      _
    $region67: #{tpu_custom_call.1} parent=1 // pred_check_branch
      %2156 = sbr.rel (0) target = $region69
    $region68: #{tpu_custom_call.1} parent=1 // pred_region
      %s2158 = ssub.s32 1024, 1024
      %2159 = vsyncadd [#allocation6], %s2158
      %s2160 = sshll.u32 [#allocation15], 4
      %s2161 = int_to_ptr.vmem [resolvable:$true] %s2160
      %2166 = dma.vmem_to_hbm [thread:$0]  %s2161, 1024, %s10, [#allocation6], 128, 128, 8
    $region69: #{tpu_custom_call.1} parent=1 // pred_fallthru
      _
    // Predicated region
    $region70: #{tpu_custom_call.1} parent=1 // pred_check
      _
    $region71: #{tpu_custom_call.1} parent=1 // pred_check_branch
      %2168 = sbr.rel (0) target = $region73
    $region72: #{tpu_custom_call.1} parent=1 // pred_region
      %s2170 = ssub.s32 256, 256
      %2171 = vsyncadd [#allocation17], %s2170
      %s2172 = sshll.u32 [#allocation16], 4
      %s2173 = int_to_ptr.vmem [resolvable:$true] %s2172
      %2178 = dma.vmem_to_hbm [thread:$0]  %s2173, 256, %s11, [#allocation17], 128, 128, 8
    $region73: #{tpu_custom_call.1} parent=1 // pred_fallthru
      _
    // Predicated region
    $region74: #{tpu_custom_call.1} parent=1 // pred_check
      _
    $region75: #{tpu_custom_call.1} parent=1 // pred_check_branch
      %2180 = sbr.rel (0) target = $region77
    $region76: #{tpu_custom_call.1} parent=1 // pred_region
      %2181 = dma.done [#allocation6], 1024
    $region77: #{tpu_custom_call.1} parent=1 // pred_fallthru
      _
    // Predicated region
    $region78: #{tpu_custom_call.1} parent=1 // pred_check
      _
    $region79: #{tpu_custom_call.1} parent=1 // pred_check_branch
      %2183 = sbr.rel (0) target = $region81
    $region80: #{tpu_custom_call.1} parent=1 // pred_region
      %2184 = dma.done [#allocation17], 256
    $region81: #{tpu_custom_call.1} parent=1 // pred_fallthru
      _
    %2185 = vsyncpa [#allocation5], 1
    %2186 = vsyncpa [#allocation8], 1
    %2187 = vsyncpa [#allocation11], 1
    %2188 = vsyncpa [#allocation14], 1
    %2189 = vsyncpa [#allocation6], 1
    %2190 = vsyncpa [#allocation17], 1

</llo_original>
